<compile_context>
chip_gen: v7x
topology: tpu7x:2x2x1
jax: 0.10.0
libtpu: 0.0.40
codegen_flags: <defaults>
</compile_context>

<pallas_src>
import functools

import numpy as np

import jax
import jax.numpy as jnp
from jax.experimental import pallas as pl
from jax.experimental.pallas import tpu as pltpu

LEAKY_SLOPE = 0.01   # nn.LeakyReLU() default
BN_EPS = 1e-5        # nn.BatchNorm1d default
LANES = 128


def _round_up(n, m):
    return ((n + m - 1) // m) * m


# ---------------------------------------------------------------------------
# In-kernel helpers
# ---------------------------------------------------------------------------
# TODO(synk): eval-mode BatchNorm (running_mean/var) and running-stat updates
# are not implemented; the kernel matches the module's training-mode forward.
def _bn_lrelu(y, gamma, beta):
    """Training-mode BatchNorm over rows (axis 0) + LeakyReLU.

    Column sums run on the otherwise idle MXU (ones(1,M) @ y) at HIGHEST
    precision (exact f32 stats; the tiny matmuls are free).  Two-pass
    (centered) variance.  The preceding matmul bias is omitted by the caller
    because the per-column mean subtraction cancels it exactly.
    y: (M, 128); gamma/beta: (1, 128).
    """
    m_rows = y.shape[0]
    ones_row = jnp.ones((1, m_rows), jnp.float32)
    inv_m = 1.0 / m_rows
    mean = jnp.dot(ones_row, y, precision=jax.lax.Precision.HIGHEST,
                   preferred_element_type=jnp.float32) * inv_m        # (1,128)
    yc = y - mean
    var = jnp.dot(ones_row, yc * yc, precision=jax.lax.Precision.HIGHEST,
                  preferred_element_type=jnp.float32) * inv_m         # (1,128)
    scale = gamma * jax.lax.rsqrt(var + BN_EPS)      # fold gamma into inv-std
    out = yc * scale + beta
    # LeakyReLU; max(y, a*y) is only valid for slope in (0, 1) — fixed 0.01.
    return jnp.maximum(out, LEAKY_SLOPE * out)


# ---------------------------------------------------------------------------
# Fused kernel
# ---------------------------------------------------------------------------
def _fused_forward_kernel(p1_ref, w_ref, o_ref, a1_ref, a2_ref, *,
                          B, K1P, K2, S2, L2, C1P, C2P,
                          phase_row_off, w2_off, w3_off, gb_off):
    """Whole AdverserailCNN forward in one kernel body.

    p1_ref: (L1*B, K1P) stage-1 im2col patches.  Rows are ordered PHASE-major
            with respect to conv2's stride S2 (all output positions l with
            l % S2 == 0 first, then l % S2 == 1, ...), batch minor.  With this
            ordering every stage-2 per-tap operand is a contiguous row block
            of a1 -> no in-kernel im2col copies.
    w_ref:  packed slab [w1 | conv2 taps | fc positions | BN params], every
            section 8-row aligned, 128 lanes.
    """
    # BN affine parameters (tail block of the weight slab).
    g1 = w_ref[pl.ds(gb_off + 0, 1), :]
    b1 = w_ref[pl.ds(gb_off + 1, 1), :]
    g2 = w_ref[pl.ds(gb_off + 2, 1), :]
    b2 = w_ref[pl.ds(gb_off + 3, 1), :]
    g3 = w_ref[pl.ds(gb_off + 4, 1), :]
    b3 = w_ref[pl.ds(gb_off + 5, 1), :]

    # ---- Stage 1: conv1 (im2col done in the wrapper) + BN + LeakyReLU ------
    y1 = jnp.dot(p1_ref[...], w_ref[pl.ds(0, K1P), :],
                 preferred_element_type=jnp.float32)           # (L1*B, 128)
    a1_ref[...] = _bn_lrelu(y1, g1, b1)

    # ---- Stage 2: conv2 as K2 accumulating matmuls (no patch buffer) --------
    # Output rows ordered (m, b): y2[m*B + b, :].
    lb2 = L2 * B
    y2 = jnp.zeros((lb2, LANES), jnp.float32)
    for k in range(K2):
        start = phase_row_off[k % S2] + (k // S2) * B          # contiguous block
        a_k = a1_ref[pl.ds(start, lb2), pl.ds(0, C1P)]         # (L2*B, C1P)
        w_k = w_ref[pl.ds(w2_off + k * C1P, C1P), :]           # (C1P, 128)
        y2 = y2 + jnp.dot(a_k, w_k, preferred_element_type=jnp.float32)
    a2_ref[...] = _bn_lrelu(y2, g2, b2)

    # ---- Stage 3: flatten + Linear as L2 accumulating matmuls ---------------
    y3 = jnp.zeros((B, LANES), jnp.float32)
    for m in range(L2):
        a_m = a2_ref[pl.ds(m * B, B), pl.ds(0, C2P)]           # (B, C2P)
        w_m = w_ref[pl.ds(w3_off + m * C2P, C2P), :]           # (C2P, 128)
        y3 = y3 + jnp.dot(a_m, w_m, preferred_element_type=jnp.float32)
    o_ref[...] = _bn_lrelu(y3, g3, b3)


# ---------------------------------------------------------------------------
# Wrapper
# ---------------------------------------------------------------------------
def adverserail_cnn_forward(x, params, ker_size=(10, 10), stride=(2, 2)):
    """x: (B, 1, nbeats) float32 -> (B, num_hidden).  Training-mode BN."""
    B, _, nbeats = x.shape
    K1, K2 = ker_size
    S1, S2 = stride
    C1 = params["w1"].shape[0]
    C2 = params["w2"].shape[0]
    H = params["w3"].shape[0]
    L1 = (nbeats - K1) // S1 + 1
    L2 = (L1 - K2) // S2 + 1

    K1P = _round_up(K1, 8)    # conv1 contraction width (zero padded)
    C1P = _round_up(C1, 8)    # per-tap conv2 contraction width
    C2P = _round_up(C2, 8)    # per-position fc contraction width

    # --- Stage-1 im2col in the wrapper (tiny XLA gather), with output
    #     positions ordered PHASE-major w.r.t. conv2's stride S2. ------------
    pos = np.concatenate([np.arange(r, L1, S2) for r in range(S2)])   # (L1,)
    phase_counts = [len(range(r, L1, S2)) for r in range(S2)]
    phase_row_off = tuple(int(B * sum(phase_counts[:r])) for r in range(S2))
    patch_idx = pos[:, None] * S1 + np.arange(K1)[None, :]            # (L1, K1)
    x2d = x.reshape(B, nbeats)
    p1 = jnp.transpose(x2d[:, patch_idx], (1, 0, 2)).reshape(L1 * B, K1)
    p1 = jnp.pad(p1, ((0, 0), (0, K1P - K1)))                         # (L1*B, K1P)

    # --- One packed weight / BN-param slab (single prologue DMA). -----------
    def pad_cols(a):
        return jnp.pad(a, ((0, 0), (0, LANES - a.shape[1])))

    def pad_vec(v):
        return jnp.pad(v, (0, LANES - v.shape[0]))

    # conv1: (C1, 1, K1) -> (K1, C1) -> (K1P, 128)
    w1_sec = jnp.pad(pad_cols(params["w1"].reshape(C1, K1).T),
                     ((0, K1P - K1), (0, 0)))
    # conv2: (C2, C1, K2) -> K2 blocks of (C1P, 128); block k row c = w2[:, c, k]
    w2_sec = pad_cols(
        jnp.pad(jnp.transpose(params["w2"], (2, 1, 0)),
                ((0, 0), (0, C1P - C1), (0, 0))).reshape(K2 * C1P, C2))
    # fc1: (H, C2*L2) with flatten col c*L2 + l -> L2 blocks of (C2P, 128);
    # block m row c = w3[:, c*L2 + m]
    w3_sec = pad_cols(
        jnp.pad(jnp.transpose(params["w3"].reshape(H, C2, L2), (2, 1, 0)),
                ((0, 0), (0, C2P - C2), (0, 0))).reshape(L2 * C2P, H))
    # BN affine params; conv/fc biases intentionally omitted (cancelled
    # exactly by the training-mode BN mean subtraction).
    gb_sec = jnp.stack([pad_vec(params["g1"]), pad_vec(params["be1"]),
                        pad_vec(params["g2"]), pad_vec(params["be2"]),
                        pad_vec(params["g3"]), pad_vec(params["be3"]),
                        jnp.zeros((LANES,), jnp.float32),
                        jnp.zeros((LANES,), jnp.float32)])
    w_slab = jnp.concatenate([w1_sec, w2_sec, w3_sec, gb_sec], axis=0)

    w2_off = K1P
    w3_off = w2_off + K2 * C1P
    gb_off = w3_off + L2 * C2P
    slab_rows = gb_off + 8

    kernel = functools.partial(
        _fused_forward_kernel, B=B, K1P=K1P, K2=K2, S2=S2, L2=L2,
        C1P=C1P, C2P=C2P, phase_row_off=phase_row_off,
        w2_off=w2_off, w3_off=w3_off, gb_off=gb_off)

    out_pad = pl.pallas_call(
        kernel,
        out_shape=jax.ShapeDtypeStruct((B, LANES), jnp.float32),
        in_specs=[
            pl.BlockSpec((L1 * B, K1P), lambda: (0, 0)),
            pl.BlockSpec((slab_rows, LANES), lambda: (0, 0)),
        ],
        out_specs=pl.BlockSpec((B, LANES), lambda: (0, 0)),
        scratch_shapes=[
            pltpu.VMEM((L1 * B, LANES), jnp.float32),    # stage-1 activations
            pltpu.VMEM((L2 * B, LANES), jnp.float32),    # stage-2 activations
        ],
        compiler_params=pltpu.CompilerParams(
            vmem_limit_bytes=8 * 1024 * 1024),           # explicit, v7x-safe
    )(p1, w_slab)

    return out_pad[:, :H]                                # drop lane padding


# ---------------------------------------------------------------------------
# Pure-JAX reference (keeps biases and two-pass variance; original semantics)
# ---------------------------------------------------------------------------
def im2col_1d(x, kernel_size, stride):
    """x: (B, Cin, L) -> patches (B*Lout, Cin*kernel_size), Lout."""
    B, Cin, L = x.shape
    Lout = (L - kernel_size) // stride + 1
    idx = jnp.arange(Lout)[:, None] * stride + jnp.arange(kernel_size)[None, :]
    patches = x[:, :, idx]                               # (B, Cin, Lout, K)
    patches = jnp.transpose(patches, (0, 2, 1, 3))       # (B, Lout, Cin, K)
    return patches.reshape(B * Lout, Cin * kernel_size), Lout


def reference_forward(x, params, ker_size=(10, 10), stride=(2, 2)):
    def stage(x2d, w2d, b, g, be):
        y = x2d @ w2d + b[None, :]
        m = jnp.mean(y, axis=0, keepdims=True)
        v = jnp.mean((y - m) ** 2, axis=0, keepdims=True)
        y = (y - m) / jnp.sqrt(v + BN_EPS) * g[None, :] + be[None, :]
        return jnp.where(y > 0, y, LEAKY_SLOPE * y)

    B = x.shape[0]
    p1, L1 = im2col_1d(x, ker_size[0], stride[0])
    o1 = stage(p1, params["w1"].reshape(params["w1"].shape[0], -1).T,
               params["b1"], params["g1"], params["be1"])
    o1 = jnp.transpose(o1.reshape(B, L1, -1), (0, 2, 1))
    p2, L2 = im2col_1d(o1, ker_size[1], stride[1])
    o2 = stage(p2, params["w2"].reshape(params["w2"].shape[0], -1).T,
               params["b2"], params["g2"], params["be2"])
    o2 = jnp.transpose(o2.reshape(B, L2, -1), (0, 2, 1))
    flat = o2.reshape(B, -1)
    return stage(flat, params["w3"].T, params["b3"], params["g3"], params["be3"])


def init_params(key, nbeats, num_chann=(20, 10), ker_size=(10, 10),
                stride=(2, 2), num_hidden=60):
    L1 = (nbeats - ker_size[0]) // stride[0] + 1
    L2 = (L1 - ker_size[1]) // stride[1] + 1
    ks = jax.random.split(key, 6)
    p = {}
    # conv1: (Cout, Cin, K)
    p["w1"] = 0.1 * jax.random.normal(ks[0], (num_chann[0], 1, ker_size[0]), jnp.float32)
    p["b1"] = 0.1 * jax.random.normal(ks[1], (num_chann[0],), jnp.float32)
    p["g1"] = jnp.ones((num_chann[0],), jnp.float32)
    p["be1"] = jnp.zeros((num_chann[0],), jnp.float32)
    # conv2
    p["w2"] = 0.1 * jax.random.normal(ks[2], (num_chann[1], num_chann[0], ker_size[1]), jnp.float32)
    p["b2"] = 0.1 * jax.random.normal(ks[3], (num_chann[1],), jnp.float32)
    p["g2"] = jnp.ones((num_chann[1],), jnp.float32)
    p["be2"] = jnp.zeros((num_chann[1],), jnp.float32)
    # fc1: (num_hidden, num_chann[1]*L2)
    p["w3"] = 0.1 * jax.random.normal(ks[4], (num_hidden, num_chann[1] * L2), jnp.float32)
    p["b3"] = 0.1 * jax.random.normal(ks[5], (num_hidden,), jnp.float32)
    p["g3"] = jnp.ones((num_hidden,), jnp.float32)
    p["be3"] = jnp.zeros((num_hidden,), jnp.float32)
    return p, L1, L2


if __name__ == "__main__":
    nbeats = 64          # input sequence length (NCW: (B, 1, nbeats))
    batch = 4
    num_hidden = 60

    key = jax.random.PRNGKey(0)
    k_x, k_p = jax.random.split(key)
    x = jax.random.normal(k_x, (batch, 1, nbeats), jnp.float32)
    params, L1, L2 = init_params(k_p, nbeats, num_hidden=num_hidden)

    out = jax.jit(adverserail_cnn_forward)(x, params)
    out = jax.block_until_ready(out)

    ref = reference_forward(x, params)
    assert out.shape == (batch, num_hidden), out.shape
    max_diff = float(jnp.max(jnp.abs(out - ref)))
    # Bias drop under training-mode BN is mathematically exact; two-pass
    # variance matches the reference, so the diff is just matmul rounding.
    assert jnp.allclose(out, ref, atol=1e-3, rtol=1e-3), max_diff

    print("KERNEL_OK")
</pallas_src>

<mosaic_0001>
module attributes {stable_mosaic.version = 11 : i64} {
  func.func @_fused_forward_kernel(%arg0: memref<112x16xf32, #tpu.memory_space<vmem>>, %arg1: memref<424x128xf32, #tpu.memory_space<vmem>>, %arg2: memref<4x128xf32, #tpu.memory_space<vmem>>, %arg3: memref<112x128xf32, #tpu.memory_space<vmem>>, %arg4: memref<40x128xf32, #tpu.memory_space<vmem>>) attributes {dimension_semantics = [], scalar_prefetch = 0 : i64, scratch_operands = 2 : i64, tpu.core_type = #tpu.core_type<tc>} {
    %c416 = arith.constant 416 : index
    %c0 = arith.constant 0 : index
    %0 = vector.load %arg1[%c416, %c0] : memref<424x128xf32, #tpu.memory_space<vmem>>, vector<1x128xf32>
    %c417 = arith.constant 417 : index
    %c0_0 = arith.constant 0 : index
    %1 = vector.load %arg1[%c417, %c0_0] : memref<424x128xf32, #tpu.memory_space<vmem>>, vector<1x128xf32>
    %c418 = arith.constant 418 : index
    %c0_1 = arith.constant 0 : index
    %2 = vector.load %arg1[%c418, %c0_1] : memref<424x128xf32, #tpu.memory_space<vmem>>, vector<1x128xf32>
    %c419 = arith.constant 419 : index
    %c0_2 = arith.constant 0 : index
    %3 = vector.load %arg1[%c419, %c0_2] : memref<424x128xf32, #tpu.memory_space<vmem>>, vector<1x128xf32>
    %c420 = arith.constant 420 : index
    %c0_3 = arith.constant 0 : index
    %4 = vector.load %arg1[%c420, %c0_3] : memref<424x128xf32, #tpu.memory_space<vmem>>, vector<1x128xf32>
    %c421 = arith.constant 421 : index
    %c0_4 = arith.constant 0 : index
    %5 = vector.load %arg1[%c421, %c0_4] : memref<424x128xf32, #tpu.memory_space<vmem>>, vector<1x128xf32>
    %c0_5 = arith.constant 0 : index
    %c0_6 = arith.constant 0 : index
    %6 = vector.load %arg0[%c0_5, %c0_6] : memref<112x16xf32, #tpu.memory_space<vmem>>, vector<112x16xf32>
    %c0_7 = arith.constant 0 : index
    %c0_8 = arith.constant 0 : index
    %7 = vector.load %arg1[%c0_7, %c0_8] : memref<424x128xf32, #tpu.memory_space<vmem>>, vector<16x128xf32>
    %cst = arith.constant dense<0.000000e+00> : vector<112x128xf32>
    %8 = tpu.matmul %6, %7, %cst {dimension_numbers = #tpu.dot_dimension_numbers<[1], [0], [0], [1], [0, 0, 1, 1], [], []>} : vector<112x16xf32>, vector<16x128xf32>, vector<112x128xf32> -> vector<112x128xf32>
    %cst_9 = arith.constant 1.000000e+00 : f32
    %9 = vector.broadcast %cst_9 : f32 to vector<1x112xf32>
    %cst_10 = arith.constant dense<0.000000e+00> : vector<1x128xf32>
    %10 = tpu.matmul %9, %8, %cst_10 {dimension_numbers = #tpu.dot_dimension_numbers<[1], [0], [0], [1], [0, 0, 1, 1], [], []>, precision = #tpu.contract_precision<fp32>} : vector<1x112xf32>, vector<112x128xf32>, vector<1x128xf32> -> vector<1x128xf32>
    %cst_11 = arith.constant 0.00892857183 : f32
    %11 = vector.broadcast %cst_11 : f32 to vector<1x128xf32>
    %12 = arith.mulf %10, %11 : vector<1x128xf32>
    %13 = vector.broadcast %12 : vector<1x128xf32> to vector<112x128xf32>
    %14 = arith.subf %8, %13 : vector<112x128xf32>
    %15 = arith.mulf %14, %14 : vector<112x128xf32>
    %cst_12 = arith.constant dense<0.000000e+00> : vector<1x128xf32>
    %16 = tpu.matmul %9, %15, %cst_12 {dimension_numbers = #tpu.dot_dimension_numbers<[1], [0], [0], [1], [0, 0, 1, 1], [], []>, precision = #tpu.contract_precision<fp32>} : vector<1x112xf32>, vector<112x128xf32>, vector<1x128xf32> -> vector<1x128xf32>
    %cst_13 = arith.constant 0.00892857183 : f32
    %17 = vector.broadcast %cst_13 : f32 to vector<1x128xf32>
    %18 = arith.mulf %16, %17 : vector<1x128xf32>
    %cst_14 = arith.constant 9.99999974E-6 : f32
    %19 = vector.broadcast %cst_14 : f32 to vector<1x128xf32>
    %20 = arith.addf %18, %19 : vector<1x128xf32>
    %21 = math.rsqrt %20 : vector<1x128xf32>
    %22 = arith.mulf %0, %21 : vector<1x128xf32>
    %23 = vector.broadcast %22 : vector<1x128xf32> to vector<112x128xf32>
    %24 = arith.mulf %14, %23 : vector<112x128xf32>
    %25 = vector.broadcast %1 : vector<1x128xf32> to vector<112x128xf32>
    %26 = arith.addf %24, %25 : vector<112x128xf32>
    %cst_15 = arith.constant 0.00999999977 : f32
    %27 = vector.broadcast %cst_15 : f32 to vector<112x128xf32>
    %28 = arith.mulf %27, %26 : vector<112x128xf32>
    %29 = arith.maximumf %26, %28 : vector<112x128xf32>
    %c0_16 = arith.constant 0 : index
    %c0_17 = arith.constant 0 : index
    %30 = vector.load %arg3[%c0_16, %c0_17] : memref<112x128xf32, #tpu.memory_space<vmem>>, vector<112x128xf32>
    tpu.vector_store %arg3[%c0_16, %c0_17], %29 {strides = array<i32>} : memref<112x128xf32, #tpu.memory_space<vmem>>, vector<112x128xf32>,
    %cst_18 = arith.constant 0.000000e+00 : f32
    %31 = vector.broadcast %cst_18 : f32 to vector<40x128xf32>
    %c0_19 = arith.constant 0 : index
    %c0_20 = arith.constant 0 : index
    %32 = vector.load %arg3[%c0_19, %c0_20] : memref<112x128xf32, #tpu.memory_space<vmem>>, vector<40x24xf32>
    %c16 = arith.constant 16 : index
    %c0_21 = arith.constant 0 : index
    %33 = vector.load %arg1[%c16, %c0_21] : memref<424x128xf32, #tpu.memory_space<vmem>>, vector<24x128xf32>
    %cst_22 = arith.constant dense<0.000000e+00> : vector<40x128xf32>
    %34 = tpu.matmul %32, %33, %cst_22 {dimension_numbers = #tpu.dot_dimension_numbers<[1], [0], [0], [1], [0, 0, 1, 1], [], []>} : vector<40x24xf32>, vector<24x128xf32>, vector<40x128xf32> -> vector<40x128xf32>
    %35 = arith.addf %31, %34 : vector<40x128xf32>
    %c56 = arith.constant 56 : index
    %c0_23 = arith.constant 0 : index
    %36 = vector.load %arg3[%c56, %c0_23] : memref<112x128xf32, #tpu.memory_space<vmem>>, vector<40x24xf32>
    %c40 = arith.constant 40 : index
    %c0_24 = arith.constant 0 : index
    %37 = vector.load %arg1[%c40, %c0_24] : memref<424x128xf32, #tpu.memory_space<vmem>>, vector<24x128xf32>
    %cst_25 = arith.constant dense<0.000000e+00> : vector<40x128xf32>
    %38 = tpu.matmul %36, %37, %cst_25 {dimension_numbers = #tpu.dot_dimension_numbers<[1], [0], [0], [1], [0, 0, 1, 1], [], []>} : vector<40x24xf32>, vector<24x128xf32>, vector<40x128xf32> -> vector<40x128xf32>
    %39 = arith.addf %35, %38 : vector<40x128xf32>
    %c4 = arith.constant 4 : index
    %c0_26 = arith.constant 0 : index
    %40 = vector.load %arg3[%c4, %c0_26] : memref<112x128xf32, #tpu.memory_space<vmem>>, vector<40x24xf32>
    %c64 = arith.constant 64 : index
    %c0_27 = arith.constant 0 : index
    %41 = vector.load %arg1[%c64, %c0_27] : memref<424x128xf32, #tpu.memory_space<vmem>>, vector<24x128xf32>
    %cst_28 = arith.constant dense<0.000000e+00> : vector<40x128xf32>
    %42 = tpu.matmul %40, %41, %cst_28 {dimension_numbers = #tpu.dot_dimension_numbers<[1], [0], [0], [1], [0, 0, 1, 1], [], []>} : vector<40x24xf32>, vector<24x128xf32>, vector<40x128xf32> -> vector<40x128xf32>
    %43 = arith.addf %39, %42 : vector<40x128xf32>
    %c60 = arith.constant 60 : index
    %c0_29 = arith.constant 0 : index
    %44 = vector.load %arg3[%c60, %c0_29] : memref<112x128xf32, #tpu.memory_space<vmem>>, vector<40x24xf32>
    %c88 = arith.constant 88 : index
    %c0_30 = arith.constant 0 : index
    %45 = vector.load %arg1[%c88, %c0_30] : memref<424x128xf32, #tpu.memory_space<vmem>>, vector<24x128xf32>
    %cst_31 = arith.constant dense<0.000000e+00> : vector<40x128xf32>
    %46 = tpu.matmul %44, %45, %cst_31 {dimension_numbers = #tpu.dot_dimension_numbers<[1], [0], [0], [1], [0, 0, 1, 1], [], []>} : vector<40x24xf32>, vector<24x128xf32>, vector<40x128xf32> -> vector<40x128xf32>
    %47 = arith.addf %43, %46 : vector<40x128xf32>
    %c8 = arith.constant 8 : index
    %c0_32 = arith.constant 0 : index
    %48 = vector.load %arg3[%c8, %c0_32] : memref<112x128xf32, #tpu.memory_space<vmem>>, vector<40x24xf32>
    %c112 = arith.constant 112 : index
    %c0_33 = arith.constant 0 : index
    %49 = vector.load %arg1[%c112, %c0_33] : memref<424x128xf32, #tpu.memory_space<vmem>>, vector<24x128xf32>
    %cst_34 = arith.constant dense<0.000000e+00> : vector<40x128xf32>
    %50 = tpu.matmul %48, %49, %cst_34 {dimension_numbers = #tpu.dot_dimension_numbers<[1], [0], [0], [1], [0, 0, 1, 1], [], []>} : vector<40x24xf32>, vector<24x128xf32>, vector<40x128xf32> -> vector<40x128xf32>
    %51 = arith.addf %47, %50 : vector<40x128xf32>
    %c64_35 = arith.constant 64 : index
    %c0_36 = arith.constant 0 : index
    %52 = vector.load %arg3[%c64_35, %c0_36] : memref<112x128xf32, #tpu.memory_space<vmem>>, vector<40x24xf32>
    %c136 = arith.constant 136 : index
    %c0_37 = arith.constant 0 : index
    %53 = vector.load %arg1[%c136, %c0_37] : memref<424x128xf32, #tpu.memory_space<vmem>>, vector<24x128xf32>
    %cst_38 = arith.constant dense<0.000000e+00> : vector<40x128xf32>
    %54 = tpu.matmul %52, %53, %cst_38 {dimension_numbers = #tpu.dot_dimension_numbers<[1], [0], [0], [1], [0, 0, 1, 1], [], []>} : vector<40x24xf32>, vector<24x128xf32>, vector<40x128xf32> -> vector<40x128xf32>
    %55 = arith.addf %51, %54 : vector<40x128xf32>
    %c12 = arith.constant 12 : index
    %c0_39 = arith.constant 0 : index
    %56 = vector.load %arg3[%c12, %c0_39] : memref<112x128xf32, #tpu.memory_space<vmem>>, vector<40x24xf32>
    %c160 = arith.constant 160 : index
    %c0_40 = arith.constant 0 : index
    %57 = vector.load %arg1[%c160, %c0_40] : memref<424x128xf32, #tpu.memory_space<vmem>>, vector<24x128xf32>
    %cst_41 = arith.constant dense<0.000000e+00> : vector<40x128xf32>
    %58 = tpu.matmul %56, %57, %cst_41 {dimension_numbers = #tpu.dot_dimension_numbers<[1], [0], [0], [1], [0, 0, 1, 1], [], []>} : vector<40x24xf32>, vector<24x128xf32>, vector<40x128xf32> -> vector<40x128xf32>
    %59 = arith.addf %55, %58 : vector<40x128xf32>
    %c68 = arith.constant 68 : index
    %c0_42 = arith.constant 0 : index
    %60 = vector.load %arg3[%c68, %c0_42] : memref<112x128xf32, #tpu.memory_space<vmem>>, vector<40x24xf32>
    %c184 = arith.constant 184 : index
    %c0_43 = arith.constant 0 : index
    %61 = vector.load %arg1[%c184, %c0_43] : memref<424x128xf32, #tpu.memory_space<vmem>>, vector<24x128xf32>
    %cst_44 = arith.constant dense<0.000000e+00> : vector<40x128xf32>
    %62 = tpu.matmul %60, %61, %cst_44 {dimension_numbers = #tpu.dot_dimension_numbers<[1], [0], [0], [1], [0, 0, 1, 1], [], []>} : vector<40x24xf32>, vector<24x128xf32>, vector<40x128xf32> -> vector<40x128xf32>
    %63 = arith.addf %59, %62 : vector<40x128xf32>
    %c16_45 = arith.constant 16 : index
    %c0_46 = arith.constant 0 : index
    %64 = vector.load %arg3[%c16_45, %c0_46] : memref<112x128xf32, #tpu.memory_space<vmem>>, vector<40x24xf32>
    %c208 = arith.constant 208 : index
    %c0_47 = arith.constant 0 : index
    %65 = vector.load %arg1[%c208, %c0_47] : memref<424x128xf32, #tpu.memory_space<vmem>>, vector<24x128xf32>
    %cst_48 = arith.constant dense<0.000000e+00> : vector<40x128xf32>
    %66 = tpu.matmul %64, %65, %cst_48 {dimension_numbers = #tpu.dot_dimension_numbers<[1], [0], [0], [1], [0, 0, 1, 1], [], []>} : vector<40x24xf32>, vector<24x128xf32>, vector<40x128xf32> -> vector<40x128xf32>
    %67 = arith.addf %63, %66 : vector<40x128xf32>
    %c72 = arith.constant 72 : index
    %c0_49 = arith.constant 0 : index
    %68 = vector.load %arg3[%c72, %c0_49] : memref<112x128xf32, #tpu.memory_space<vmem>>, vector<40x24xf32>
    %c232 = arith.constant 232 : index
    %c0_50 = arith.constant 0 : index
    %69 = vector.load %arg1[%c232, %c0_50] : memref<424x128xf32, #tpu.memory_space<vmem>>, vector<24x128xf32>
    %cst_51 = arith.constant dense<0.000000e+00> : vector<40x128xf32>
    %70 = tpu.matmul %68, %69, %cst_51 {dimension_numbers = #tpu.dot_dimension_numbers<[1], [0], [0], [1], [0, 0, 1, 1], [], []>} : vector<40x24xf32>, vector<24x128xf32>, vector<40x128xf32> -> vector<40x128xf32>
    %71 = arith.addf %67, %70 : vector<40x128xf32>
    %cst_52 = arith.constant 1.000000e+00 : f32
    %72 = vector.broadcast %cst_52 : f32 to vector<1x40xf32>
    %cst_53 = arith.constant dense<0.000000e+00> : vector<1x128xf32>
    %73 = tpu.matmul %72, %71, %cst_53 {dimension_numbers = #tpu.dot_dimension_numbers<[1], [0], [0], [1], [0, 0, 1, 1], [], []>, precision = #tpu.contract_precision<fp32>} : vector<1x40xf32>, vector<40x128xf32>, vector<1x128xf32> -> vector<1x128xf32>
    %cst_54 = arith.constant 2.500000e-02 : f32
    %74 = vector.broadcast %cst_54 : f32 to vector<1x128xf32>
    %75 = arith.mulf %73, %74 : vector<1x128xf32>
    %76 = vector.broadcast %75 : vector<1x128xf32> to vector<40x128xf32>
    %77 = arith.subf %71, %76 : vector<40x128xf32>
    %78 = arith.mulf %77, %77 : vector<40x128xf32>
    %cst_55 = arith.constant dense<0.000000e+00> : vector<1x128xf32>
    %79 = tpu.matmul %72, %78, %cst_55 {dimension_numbers = #tpu.dot_dimension_numbers<[1], [0], [0], [1], [0, 0, 1, 1], [], []>, precision = #tpu.contract_precision<fp32>} : vector<1x40xf32>, vector<40x128xf32>, vector<1x128xf32> -> vector<1x128xf32>
    %cst_56 = arith.constant 2.500000e-02 : f32
    %80 = vector.broadcast %cst_56 : f32 to vector<1x128xf32>
    %81 = arith.mulf %79, %80 : vector<1x128xf32>
    %cst_57 = arith.constant 9.99999974E-6 : f32
    %82 = vector.broadcast %cst_57 : f32 to vector<1x128xf32>
    %83 = arith.addf %81, %82 : vector<1x128xf32>
    %84 = math.rsqrt %83 : vector<1x128xf32>
    %85 = arith.mulf %2, %84 : vector<1x128xf32>
    %86 = vector.broadcast %85 : vector<1x128xf32> to vector<40x128xf32>
    %87 = arith.mulf %77, %86 : vector<40x128xf32>
    %88 = vector.broadcast %3 : vector<1x128xf32> to vector<40x128xf32>
    %89 = arith.addf %87, %88 : vector<40x128xf32>
    %cst_58 = arith.constant 0.00999999977 : f32
    %90 = vector.broadcast %cst_58 : f32 to vector<40x128xf32>
    %91 = arith.mulf %90, %89 : vector<40x128xf32>
    %92 = arith.maximumf %89, %91 : vector<40x128xf32>
    %c0_59 = arith.constant 0 : index
    %c0_60 = arith.constant 0 : index
    %93 = vector.load %arg4[%c0_59, %c0_60] : memref<40x128xf32, #tpu.memory_space<vmem>>, vector<40x128xf32>
    tpu.vector_store %arg4[%c0_59, %c0_60], %92 {strides = array<i32>} : memref<40x128xf32, #tpu.memory_space<vmem>>, vector<40x128xf32>,
    %cst_61 = arith.constant 0.000000e+00 : f32
    %94 = vector.broadcast %cst_61 : f32 to vector<4x128xf32>
    %c0_62 = arith.constant 0 : index
    %c0_63 = arith.constant 0 : index
    %95 = vector.load %arg4[%c0_62, %c0_63] : memref<40x128xf32, #tpu.memory_space<vmem>>, vector<4x16xf32>
    %c256 = arith.constant 256 : index
    %c0_64 = arith.constant 0 : index
    %96 = vector.load %arg1[%c256, %c0_64] : memref<424x128xf32, #tpu.memory_space<vmem>>, vector<16x128xf32>
    %cst_65 = arith.constant dense<0.000000e+00> : vector<4x128xf32>
    %97 = tpu.matmul %95, %96, %cst_65 {dimension_numbers = #tpu.dot_dimension_numbers<[1], [0], [0], [1], [0, 0, 1, 1], [], []>} : vector<4x16xf32>, vector<16x128xf32>, vector<4x128xf32> -> vector<4x128xf32>
    %98 = arith.addf %94, %97 : vector<4x128xf32>
    %c4_66 = arith.constant 4 : index
    %c0_67 = arith.constant 0 : index
    %99 = vector.load %arg4[%c4_66, %c0_67] : memref<40x128xf32, #tpu.memory_space<vmem>>, vector<4x16xf32>
    %c272 = arith.constant 272 : index
    %c0_68 = arith.constant 0 : index
    %100 = vector.load %arg1[%c272, %c0_68] : memref<424x128xf32, #tpu.memory_space<vmem>>, vector<16x128xf32>
    %cst_69 = arith.constant dense<0.000000e+00> : vector<4x128xf32>
    %101 = tpu.matmul %99, %100, %cst_69 {dimension_numbers = #tpu.dot_dimension_numbers<[1], [0], [0], [1], [0, 0, 1, 1], [], []>} : vector<4x16xf32>, vector<16x128xf32>, vector<4x128xf32> -> vector<4x128xf32>
    %102 = arith.addf %98, %101 : vector<4x128xf32>
    %c8_70 = arith.constant 8 : index
    %c0_71 = arith.constant 0 : index
    %103 = vector.load %arg4[%c8_70, %c0_71] : memref<40x128xf32, #tpu.memory_space<vmem>>, vector<4x16xf32>
    %c288 = arith.constant 288 : index
    %c0_72 = arith.constant 0 : index
    %104 = vector.load %arg1[%c288, %c0_72] : memref<424x128xf32, #tpu.memory_space<vmem>>, vector<16x128xf32>
    %cst_73 = arith.constant dense<0.000000e+00> : vector<4x128xf32>
    %105 = tpu.matmul %103, %104, %cst_73 {dimension_numbers = #tpu.dot_dimension_numbers<[1], [0], [0], [1], [0, 0, 1, 1], [], []>} : vector<4x16xf32>, vector<16x128xf32>, vector<4x128xf32> -> vector<4x128xf32>
    %106 = arith.addf %102, %105 : vector<4x128xf32>
    %c12_74 = arith.constant 12 : index
    %c0_75 = arith.constant 0 : index
    %107 = vector.load %arg4[%c12_74, %c0_75] : memref<40x128xf32, #tpu.memory_space<vmem>>, vector<4x16xf32>
    %c304 = arith.constant 304 : index
    %c0_76 = arith.constant 0 : index
    %108 = vector.load %arg1[%c304, %c0_76] : memref<424x128xf32, #tpu.memory_space<vmem>>, vector<16x128xf32>
    %cst_77 = arith.constant dense<0.000000e+00> : vector<4x128xf32>
    %109 = tpu.matmul %107, %108, %cst_77 {dimension_numbers = #tpu.dot_dimension_numbers<[1], [0], [0], [1], [0, 0, 1, 1], [], []>} : vector<4x16xf32>, vector<16x128xf32>, vector<4x128xf32> -> vector<4x128xf32>
    %110 = arith.addf %106, %109 : vector<4x128xf32>
    %c16_78 = arith.constant 16 : index
    %c0_79 = arith.constant 0 : index
    %111 = vector.load %arg4[%c16_78, %c0_79] : memref<40x128xf32, #tpu.memory_space<vmem>>, vector<4x16xf32>
    %c320 = arith.constant 320 : index
    %c0_80 = arith.constant 0 : index
    %112 = vector.load %arg1[%c320, %c0_80] : memref<424x128xf32, #tpu.memory_space<vmem>>, vector<16x128xf32>
    %cst_81 = arith.constant dense<0.000000e+00> : vector<4x128xf32>
    %113 = tpu.matmul %111, %112, %cst_81 {dimension_numbers = #tpu.dot_dimension_numbers<[1], [0], [0], [1], [0, 0, 1, 1], [], []>} : vector<4x16xf32>, vector<16x128xf32>, vector<4x128xf32> -> vector<4x128xf32>
    %114 = arith.addf %110, %113 : vector<4x128xf32>
    %c20 = arith.constant 20 : index
    %c0_82 = arith.constant 0 : index
    %115 = vector.load %arg4[%c20, %c0_82] : memref<40x128xf32, #tpu.memory_space<vmem>>, vector<4x16xf32>
    %c336 = arith.constant 336 : index
    %c0_83 = arith.constant 0 : index
    %116 = vector.load %arg1[%c336, %c0_83] : memref<424x128xf32, #tpu.memory_space<vmem>>, vector<16x128xf32>
    %cst_84 = arith.constant dense<0.000000e+00> : vector<4x128xf32>
    %117 = tpu.matmul %115, %116, %cst_84 {dimension_numbers = #tpu.dot_dimension_numbers<[1], [0], [0], [1], [0, 0, 1, 1], [], []>} : vector<4x16xf32>, vector<16x128xf32>, vector<4x128xf32> -> vector<4x128xf32>
    %118 = arith.addf %114, %117 : vector<4x128xf32>
    %c24 = arith.constant 24 : index
    %c0_85 = arith.constant 0 : index
    %119 = vector.load %arg4[%c24, %c0_85] : memref<40x128xf32, #tpu.memory_space<vmem>>, vector<4x16xf32>
    %c352 = arith.constant 352 : index
    %c0_86 = arith.constant 0 : index
    %120 = vector.load %arg1[%c352, %c0_86] : memref<424x128xf32, #tpu.memory_space<vmem>>, vector<16x128xf32>
    %cst_87 = arith.constant dense<0.000000e+00> : vector<4x128xf32>
    %121 = tpu.matmul %119, %120, %cst_87 {dimension_numbers = #tpu.dot_dimension_numbers<[1], [0], [0], [1], [0, 0, 1, 1], [], []>} : vector<4x16xf32>, vector<16x128xf32>, vector<4x128xf32> -> vector<4x128xf32>
    %122 = arith.addf %118, %121 : vector<4x128xf32>
    %c28 = arith.constant 28 : index
    %c0_88 = arith.constant 0 : index
    %123 = vector.load %arg4[%c28, %c0_88] : memref<40x128xf32, #tpu.memory_space<vmem>>, vector<4x16xf32>
    %c368 = arith.constant 368 : index
    %c0_89 = arith.constant 0 : index
    %124 = vector.load %arg1[%c368, %c0_89] : memref<424x128xf32, #tpu.memory_space<vmem>>, vector<16x128xf32>
    %cst_90 = arith.constant dense<0.000000e+00> : vector<4x128xf32>
    %125 = tpu.matmul %123, %124, %cst_90 {dimension_numbers = #tpu.dot_dimension_numbers<[1], [0], [0], [1], [0, 0, 1, 1], [], []>} : vector<4x16xf32>, vector<16x128xf32>, vector<4x128xf32> -> vector<4x128xf32>
    %126 = arith.addf %122, %125 : vector<4x128xf32>
    %c32 = arith.constant 32 : index
    %c0_91 = arith.constant 0 : index
    %127 = vector.load %arg4[%c32, %c0_91] : memref<40x128xf32, #tpu.memory_space<vmem>>, vector<4x16xf32>
    %c384 = arith.constant 384 : index
    %c0_92 = arith.constant 0 : index
    %128 = vector.load %arg1[%c384, %c0_92] : memref<424x128xf32, #tpu.memory_space<vmem>>, vector<16x128xf32>
    %cst_93 = arith.constant dense<0.000000e+00> : vector<4x128xf32>
    %129 = tpu.matmul %127, %128, %cst_93 {dimension_numbers = #tpu.dot_dimension_numbers<[1], [0], [0], [1], [0, 0, 1, 1], [], []>} : vector<4x16xf32>, vector<16x128xf32>, vector<4x128xf32> -> vector<4x128xf32>
    %130 = arith.addf %126, %129 : vector<4x128xf32>
    %c36 = arith.constant 36 : index
    %c0_94 = arith.constant 0 : index
    %131 = vector.load %arg4[%c36, %c0_94] : memref<40x128xf32, #tpu.memory_space<vmem>>, vector<4x16xf32>
    %c400 = arith.constant 400 : index
    %c0_95 = arith.constant 0 : index
    %132 = vector.load %arg1[%c400, %c0_95] : memref<424x128xf32, #tpu.memory_space<vmem>>, vector<16x128xf32>
    %cst_96 = arith.constant dense<0.000000e+00> : vector<4x128xf32>
    %133 = tpu.matmul %131, %132, %cst_96 {dimension_numbers = #tpu.dot_dimension_numbers<[1], [0], [0], [1], [0, 0, 1, 1], [], []>} : vector<4x16xf32>, vector<16x128xf32>, vector<4x128xf32> -> vector<4x128xf32>
    %134 = arith.addf %130, %133 : vector<4x128xf32>
    %cst_97 = arith.constant 1.000000e+00 : f32
    %135 = vector.broadcast %cst_97 : f32 to vector<1x4xf32>
    %cst_98 = arith.constant dense<0.000000e+00> : vector<1x128xf32>
    %136 = tpu.matmul %135, %134, %cst_98 {dimension_numbers = #tpu.dot_dimension_numbers<[1], [0], [0], [1], [0, 0, 1, 1], [], []>, precision = #tpu.contract_precision<fp32>} : vector<1x4xf32>, vector<4x128xf32>, vector<1x128xf32> -> vector<1x128xf32>
    %cst_99 = arith.constant 2.500000e-01 : f32
    %137 = vector.broadcast %cst_99 : f32 to vector<1x128xf32>
    %138 = arith.mulf %136, %137 : vector<1x128xf32>
    %139 = vector.broadcast %138 : vector<1x128xf32> to vector<4x128xf32>
    %140 = arith.subf %134, %139 : vector<4x128xf32>
    %141 = arith.mulf %140, %140 : vector<4x128xf32>
    %cst_100 = arith.constant dense<0.000000e+00> : vector<1x128xf32>
    %142 = tpu.matmul %135, %141, %cst_100 {dimension_numbers = #tpu.dot_dimension_numbers<[1], [0], [0], [1], [0, 0, 1, 1], [], []>, precision = #tpu.contract_precision<fp32>} : vector<1x4xf32>, vector<4x128xf32>, vector<1x128xf32> -> vector<1x128xf32>
    %cst_101 = arith.constant 2.500000e-01 : f32
    %143 = vector.broadcast %cst_101 : f32 to vector<1x128xf32>
    %144 = arith.mulf %142, %143 : vector<1x128xf32>
    %cst_102 = arith.constant 9.99999974E-6 : f32
    %145 = vector.broadcast %cst_102 : f32 to vector<1x128xf32>
    %146 = arith.addf %144, %145 : vector<1x128xf32>
    %147 = math.rsqrt %146 : vector<1x128xf32>
    %148 = arith.mulf %4, %147 : vector<1x128xf32>
    %149 = vector.broadcast %148 : vector<1x128xf32> to vector<4x128xf32>
    %150 = arith.mulf %140, %149 : vector<4x128xf32>
    %151 = vector.broadcast %5 : vector<1x128xf32> to vector<4x128xf32>
    %152 = arith.addf %150, %151 : vector<4x128xf32>
    %cst_103 = arith.constant 0.00999999977 : f32
    %153 = vector.broadcast %cst_103 : f32 to vector<4x128xf32>
    %154 = arith.mulf %153, %152 : vector<4x128xf32>
    %155 = arith.maximumf %152, %154 : vector<4x128xf32>
    %c0_104 = arith.constant 0 : index
    %c0_105 = arith.constant 0 : index
    %156 = vector.load %arg2[%c0_104, %c0_105] : memref<4x128xf32, #tpu.memory_space<vmem>>, vector<4x128xf32>
    tpu.vector_store %arg2[%c0_104, %c0_105], %155 {strides = array<i32>} : memref<4x128xf32, #tpu.memory_space<vmem>>, vector<4x128xf32>,
    return
  }
}

</mosaic_0001>

<llo_original>
// kernel: adverserail_cnn_forward.1
$region0: #{adverserail_cnn_forward.1}
  #allocation0 [shape = 'u32[]', space=smem, size = 0x4, offset = 0x4, fixed_abs, tag = 'smem constant byte address 0x4 - core index']
  #allocation1 [shape = 'u32[144,128]{1,0:T(1,128)}', space=vmem, size = 0x12000, scoped, tag = 'internal scratch']
  #allocation2 [shape = 'f32[112,128]{1,0:T(8,128)}', space=vmem, size = 0xe000, scoped, tag = 'scratch operand']
  #allocation3 [shape = 'f32[40,128]{1,0:T(8,128)}', space=vmem, size = 0x5000, scoped, tag = 'scratch operand']
  %s0 = inlined_call_operand.vmem [shape: f32[112,16], index: 0, kind: input, shape index: {}]
  %s1 = inlined_call_operand.vmem [shape: f32[424,128], index: 1, kind: input, shape index: {}]
  %s2 = inlined_call_operand.hbm [shape: f32[4,128], index: 2, kind: output, shape index: {}]
  %s3 = sld [smem:[#allocation0]]
  $region18: #{adverserail_cnn_forward.1} parent=0
    _
  %s5 = ssub.s32 1, %s3
  %s6 = scalar_select 0, %s5, %s3
  $region1: #{adverserail_cnn_forward.1} parent=0
    #allocation4 [shape = 'u8[2048]{0}', space=vmem, size = 0x800, scoped, tag = 'output window, operand 0, single buffered']
    #allocation5 [shape = 's32[1]{0}', space=sflag, size = 0x4, scoped, tag = 'scoped memory for adverserail_cnn_forward.1']
    %7 = vsyncpa [#allocation5], 0
    // Predicated region
    $region2: #{adverserail_cnn_forward.1} parent=1 // pred_check
      _
    $region3: #{adverserail_cnn_forward.1} parent=1 // pred_check_branch
      %9 = sbr.rel (0) target = $region5
    $region4: #{adverserail_cnn_forward.1} parent=1 // pred_region
      _
    $region5: #{adverserail_cnn_forward.1} parent=1 // pred_fallthru
      _
    // Predicated region
    $region6: #{adverserail_cnn_forward.1} parent=1 // pred_check
      _
    $region7: #{adverserail_cnn_forward.1} parent=1 // pred_check_branch
      %11 = sbr.rel (0) target = $region9
    $region8: #{adverserail_cnn_forward.1} parent=1 // pred_region
      _
    $region9: #{adverserail_cnn_forward.1} parent=1 // pred_fallthru
      _
    %v12 = vld [vmem:[%s1 + $0x1a0] sm:$0x1]
    %v13 = vld [vmem:[%s1 + $0x1a1] sm:$0x1]
    %v14 = vld [vmem:[%s1 + $0x1a2] sm:$0x1]
    %v15 = vld [vmem:[%s1 + $0x1a3] sm:$0x1]
    %v16 = vld [vmem:[%s1 + $0x1a4] sm:$0x1]
    %v17 = vld [vmem:[%s1 + $0x1a5] sm:$0x1]
    %v18 = vld [vmem:[%s0] sm:$0xff]
    %v19 = vld [vmem:[%s0 + $0x8] sm:$0xff]
    %v20 = vld [vmem:[%s0 + $0x10] sm:$0xff]
    %v21 = vld [vmem:[%s0 + $0x18] sm:$0xff]
    %v22 = vld [vmem:[%s0 + $0x20] sm:$0xff]
    %v23 = vld [vmem:[%s0 + $0x28] sm:$0xff]
    %v24 = vld [vmem:[%s0 + $0x30] sm:$0xff]
    %v25 = vld [vmem:[%s0 + $0x38] sm:$0xff]
    %v26 = vld [vmem:[%s0 + $0x40] sm:$0xff]
    %v27 = vld [vmem:[%s0 + $0x48] sm:$0xff]
    %v28 = vld [vmem:[%s0 + $0x50] sm:$0xff]
    %v29 = vld [vmem:[%s0 + $0x58] sm:$0xff]
    %v30 = vld [vmem:[%s0 + $0x60] sm:$0xff]
    %v31 = vld [vmem:[%s0 + $0x68] sm:$0xff]
    %v32 = vld [vmem:[%s1] sm:$0xff]
    %v33 = vld [vmem:[%s1 + $0x8] sm:$0xff]
    %vm34 = vcmask 130048
    %v36 = vsel %vm34, %v18, 0
    %v39 = vsel %vm34, %v19, 0
    %v42 = vsel %vm34, %v20, 0
    %v45 = vsel %vm34, %v21, 0
    %v48 = vsel %vm34, %v22, 0
    %v51 = vsel %vm34, %v23, 0
    %v54 = vsel %vm34, %v24, 0
    %v57 = vsel %vm34, %v25, 0
    %v60 = vsel %vm34, %v26, 0
    %v63 = vsel %vm34, %v27, 0
    %v66 = vsel %vm34, %v28, 0
    %v69 = vsel %vm34, %v29, 0
    %v72 = vsel %vm34, %v30, 0
    %v75 = vsel %vm34, %v31, 0
    %77 = vmatprep.subr.mxu0 0.0
    %78 = vmatpush1.msra.mxu0 %v32
    %79 = vmatprep.subr.mxu0 0.0
    %80 = vmatpush1.msra.mxu0 %v33
    %81 = vmatprep.subr.mxu0 0.0
    %82 = vmatpush1.msra.mxu0 0.0
    %83 = vmatprep.subr.mxu0 0.0
    %84 = vmatpush1.msra.mxu0 0.0
    %85 = vmatprep.subr.mxu0 0.0
    %86 = vmatpush1.msra.mxu0 0.0
    %87 = vmatprep.subr.mxu0 0.0
    %88 = vmatpush1.msra.mxu0 0.0
    %89 = vmatprep.subr.mxu0 0.0
    %90 = vmatpush1.msra.mxu0 0.0
    %91 = vmatprep.subr.mxu0 0.0
    %92 = vmatpush1.msra.mxu0 0.0
    %93 = vmatprep.subr.mxu0 0.0
    %94 = vmatpush1.msra.mxu0 0.0
    %95 = vmatprep.subr.mxu0 0.0
    %96 = vmatpush1.msra.mxu0 0.0
    %97 = vmatprep.subr.mxu0 0.0
    %98 = vmatpush1.msra.mxu0 0.0
    %99 = vmatprep.subr.mxu0 0.0
    %100 = vmatpush1.msra.mxu0 0.0
    %101 = vmatprep.subr.mxu0 0.0
    %102 = vmatpush1.msra.mxu0 0.0
    %103 = vmatprep.subr.mxu0 0.0
    %104 = vmatpush1.msra.mxu0 0.0
    %105 = vmatprep.subr.mxu0 0.0
    %106 = vmatpush1.msra.mxu0 0.0
    %107 = vmatprep.subr.mxu0 0.0
    %108 = vmatpush1.msra.mxu0 0.0
    %109 = vmatprep.subr.mxu0 0.0
    %110 = vmatpush1.msra.mxu0 0.0
    %111 = vmatprep.subr.mxu0 0.0
    %112 = vmatpush1.msra.mxu0 0.0
    %113 = vmatprep.subr.mxu0 0.0
    %114 = vmatpush1.msra.mxu0 0.0
    %115 = vmatprep.subr.mxu0 0.0
    %116 = vmatpush1.msra.mxu0 0.0
    %117 = vmatprep.subr.mxu0 0.0
    %118 = vmatpush1.msra.mxu0 0.0
    %119 = vmatprep.subr.mxu0 0.0
    %120 = vmatpush1.msra.mxu0 0.0
    %121 = vmatprep.subr.mxu0 0.0
    %122 = vmatpush1.msra.mxu0 0.0
    %123 = vmatprep.subr.mxu0 0.0
    %124 = vmatpush1.msra.mxu0 0.0
    %125 = vmatprep.subr.mxu0 0.0
    %126 = vmatpush1.msra.mxu0 0.0
    %127 = vmatprep.subr.mxu0 0.0
    %128 = vmatpush1.msra.mxu0 0.0
    %129 = vmatprep.subr.mxu0 0.0
    %130 = vmatpush1.msra.mxu0 0.0
    %131 = vmatprep.subr.mxu0 0.0
    %132 = vmatpush1.msra.mxu0 0.0
    %133 = vmatprep.subr.mxu0 0.0
    %134 = vmatpush1.msra.mxu0 0.0
    %135 = vmatprep.subr.mxu0 0.0
    %136 = vmatpush1.msra.mxu0 0.0
    %137 = vmatprep.subr.mxu0 0.0
    %138 = vmatpush1.msra.mxu0 0.0
    %139 = vmatprep.subr.mxu0 0.0
    %140 = vmatpush1.msra.mxu0 0.0
    %141 = vmatprep.mubr.f32.mxu0 0.0
    %142 = vmatmul.mubr.f32.gmra.mrb[0].mxu0 %v36
    %v143 = vpop.f32.mrb[0].mxu0
    %v144 = vadd.f32 0.0, %v143
    %v145 = vpop.f32.mrb[0].mxu0
    %146 = vmatprep.mubr.f32.mxu0 0.0
    %147 = vmatmul.mubr.f32.gmra.mrb[0].mxu0 %v39
    %v148 = vpop.f32.mrb[0].mxu0
    %v149 = vadd.f32 0.0, %v148
    %v150 = vpop.f32.mrb[0].mxu0
    %151 = vmatprep.mubr.f32.mxu0 0.0
    %152 = vmatmul.mubr.f32.gmra.mrb[0].mxu0 %v42
    %v153 = vpop.f32.mrb[0].mxu0
    %v154 = vadd.f32 0.0, %v153
    %v155 = vpop.f32.mrb[0].mxu0
    %156 = vmatprep.mubr.f32.mxu0 0.0
    %157 = vmatmul.mubr.f32.gmra.mrb[0].mxu0 %v45
    %v158 = vpop.f32.mrb[0].mxu0
    %v159 = vadd.f32 0.0, %v158
    %v160 = vpop.f32.mrb[0].mxu0
    %161 = vmatprep.mubr.f32.mxu0 0.0
    %162 = vmatmul.mubr.f32.gmra.mrb[0].mxu0 %v48
    %v163 = vpop.f32.mrb[0].mxu0
    %v164 = vadd.f32 0.0, %v163
    %v165 = vpop.f32.mrb[0].mxu0
    %166 = vmatprep.mubr.f32.mxu0 0.0
    %167 = vmatmul.mubr.f32.gmra.mrb[0].mxu0 %v51
    %v168 = vpop.f32.mrb[0].mxu0
    %v169 = vadd.f32 0.0, %v168
    %v170 = vpop.f32.mrb[0].mxu0
    %171 = vmatprep.mubr.f32.mxu0 0.0
    %172 = vmatmul.mubr.f32.gmra.mrb[0].mxu0 %v54
    %v173 = vpop.f32.mrb[0].mxu0
    %v174 = vadd.f32 0.0, %v173
    %v175 = vpop.f32.mrb[0].mxu0
    %176 = vmatprep.mubr.f32.mxu0 0.0
    %177 = vmatmul.mubr.f32.gmra.mrb[0].mxu0 %v57
    %v178 = vpop.f32.mrb[0].mxu0
    %v179 = vadd.f32 0.0, %v178
    %v180 = vpop.f32.mrb[0].mxu0
    %181 = vmatprep.mubr.f32.mxu0 0.0
    %182 = vmatmul.mubr.f32.gmra.mrb[0].mxu0 %v60
    %v183 = vpop.f32.mrb[0].mxu0
    %v184 = vadd.f32 0.0, %v183
    %v185 = vpop.f32.mrb[0].mxu0
    %186 = vmatprep.mubr.f32.mxu0 0.0
    %187 = vmatmul.mubr.f32.gmra.mrb[0].mxu0 %v63
    %v188 = vpop.f32.mrb[0].mxu0
    %v189 = vadd.f32 0.0, %v188
    %v190 = vpop.f32.mrb[0].mxu0
    %191 = vmatprep.mubr.f32.mxu0 0.0
    %192 = vmatmul.mubr.f32.gmra.mrb[0].mxu0 %v66
    %v193 = vpop.f32.mrb[0].mxu0
    %v194 = vadd.f32 0.0, %v193
    %v195 = vpop.f32.mrb[0].mxu0
    %196 = vmatprep.mubr.f32.mxu0 0.0
    %197 = vmatmul.mubr.f32.gmra.mrb[0].mxu0 %v69
    %v198 = vpop.f32.mrb[0].mxu0
    %v199 = vadd.f32 0.0, %v198
    %v200 = vpop.f32.mrb[0].mxu0
    %201 = vmatprep.mubr.f32.mxu0 0.0
    %202 = vmatmul.mubr.f32.gmra.mrb[0].mxu0 %v72
    %v203 = vpop.f32.mrb[0].mxu0
    %v204 = vadd.f32 0.0, %v203
    %v205 = vpop.f32.mrb[0].mxu0
    %206 = vmatprep.mubr.f32.mxu0 0.0
    %207 = vmatmul.mubr.f32.gmra.mrb[0].mxu0 %v75
    %v208 = vpop.f32.mrb[0].mxu0
    %v209 = vadd.f32 0.0, %v208
    %v210 = vpop.f32.mrb[0].mxu0
    %211 = vdwg.mxu0
    %vm212 = vcmask 916480
    %v214 = vsel %vm212, 1.0, 0
    %216 = vmatprep.subr.mxu0 0.0
    %v217 = vand.u32 %v144, 4294901760
    %218 = vmatpush1.msra.mxu0 %v217
    %219 = vmatprep.subr.mxu0 0.0
    %v220 = vand.u32 %v149, 4294901760
    %221 = vmatpush1.msra.mxu0 %v220
    %222 = vmatprep.subr.mxu0 0.0
    %v223 = vand.u32 %v154, 4294901760
    %224 = vmatpush1.msra.mxu0 %v223
    %225 = vmatprep.subr.mxu0 0.0
    %v226 = vand.u32 %v159, 4294901760
    %227 = vmatpush1.msra.mxu0 %v226
    %228 = vmatprep.subr.mxu0 0.0
    %v229 = vand.u32 %v164, 4294901760
    %230 = vmatpush1.msra.mxu0 %v229
    %231 = vmatprep.subr.mxu0 0.0
    %v232 = vand.u32 %v169, 4294901760
    %233 = vmatpush1.msra.mxu0 %v232
    %234 = vmatprep.subr.mxu0 0.0
    %v235 = vand.u32 %v174, 4294901760
    %236 = vmatpush1.msra.mxu0 %v235
    %237 = vmatprep.subr.mxu0 0.0
    %v238 = vand.u32 %v179, 4294901760
    %239 = vmatpush1.msra.mxu0 %v238
    %240 = vmatprep.subr.mxu0 0.0
    %v241 = vand.u32 %v184, 4294901760
    %242 = vmatpush1.msra.mxu0 %v241
    %243 = vmatprep.subr.mxu0 0.0
    %v244 = vand.u32 %v189, 4294901760
    %245 = vmatpush1.msra.mxu0 %v244
    %246 = vmatprep.subr.mxu0 0.0
    %v247 = vand.u32 %v194, 4294901760
    %248 = vmatpush1.msra.mxu0 %v247
    %249 = vmatprep.subr.mxu0 0.0
    %v250 = vand.u32 %v199, 4294901760
    %251 = vmatpush1.msra.mxu0 %v250
    %252 = vmatprep.subr.mxu0 0.0
    %v253 = vand.u32 %v204, 4294901760
    %254 = vmatpush1.msra.mxu0 %v253
    %255 = vmatprep.subr.mxu0 0.0
    %v256 = vand.u32 %v209, 4294901760
    %257 = vmatpush1.msra.mxu0 %v256
    %258 = vmatprep.subr.mxu0 0.0
    %259 = vmatpush1.msra.mxu0 0.0
    %260 = vmatprep.subr.mxu0 0.0
    %261 = vmatpush1.msra.mxu0 0.0
    %262 = vmatprep.subr.mxu0 0.0
    %263 = vmatpush1.msra.mxu0 0.0
    %264 = vmatprep.subr.mxu0 0.0
    %265 = vmatpush1.msra.mxu0 0.0
    %266 = vmatprep.subr.mxu0 0.0
    %267 = vmatpush1.msra.mxu0 0.0
    %268 = vmatprep.subr.mxu0 0.0
    %269 = vmatpush1.msra.mxu0 0.0
    %270 = vmatprep.subr.mxu0 0.0
    %271 = vmatpush1.msra.mxu0 0.0
    %272 = vmatprep.subr.mxu0 0.0
    %273 = vmatpush1.msra.mxu0 0.0
    %274 = vmatprep.subr.mxu0 0.0
    %275 = vmatpush1.msra.mxu0 0.0
    %276 = vmatprep.subr.mxu0 0.0
    %277 = vmatpush1.msra.mxu0 0.0
    %278 = vmatprep.subr.mxu0 0.0
    %279 = vmatpush1.msra.mxu0 0.0
    %280 = vmatprep.subr.mxu0 0.0
    %281 = vmatpush1.msra.mxu0 0.0
    %282 = vmatprep.subr.mxu0 0.0
    %283 = vmatpush1.msra.mxu0 0.0
    %284 = vmatprep.subr.mxu0 0.0
    %285 = vmatpush1.msra.mxu0 0.0
    %286 = vmatprep.subr.mxu0 0.0
    %287 = vmatpush1.msra.mxu0 0.0
    %288 = vmatprep.subr.mxu0 0.0
    %289 = vmatpush1.msra.mxu0 0.0
    %290 = vmatprep.subr.mxu0 0.0
    %291 = vmatpush1.msra.mxu0 0.0
    %292 = vmatprep.subr.mxu0 0.0
    %293 = vmatpush1.msra.mxu0 0.0
    %294 = vmatprep.mubr.f32.mxu0 0.0
    %v295 = vand.u32 %v214, 4294901760
    %v296 = vsub.f32 %v214, %v295
    %v297 = vand.u32 %v296, 4294901760
    %v298 = vsub.f32 %v296, %v297
    %v299 = vand.u32 %v298, 4294901760
    %300 = vmatmul.mubr.f32.gmra.mrb[0].mxu0 %v299
    %v301 = vpop.f32.mrb[0].mxu0
    %v302 = vadd.f32 0.0, %v301
    %v303 = vpop.f32.mrb[0].mxu0
    %304 = vdwg.mxu0
    %305 = vmatprep.subr.mxu0 0.0
    %v306 = vand.u32 %v144, 4294901760
    %v307 = vsub.f32 %v144, %v306
    %v308 = vand.u32 %v307, 4294901760
    %v309 = vsub.f32 %v307, %v308
    %v310 = vand.u32 %v309, 4294901760
    %311 = vmatpush1.msra.mxu0 %v310
    %312 = vmatprep.subr.mxu0 0.0
    %v313 = vand.u32 %v149, 4294901760
    %v314 = vsub.f32 %v149, %v313
    %v315 = vand.u32 %v314, 4294901760
    %v316 = vsub.f32 %v314, %v315
    %v317 = vand.u32 %v316, 4294901760
    %318 = vmatpush1.msra.mxu0 %v317
    %319 = vmatprep.subr.mxu0 0.0
    %v320 = vand.u32 %v154, 4294901760
    %v321 = vsub.f32 %v154, %v320
    %v322 = vand.u32 %v321, 4294901760
    %v323 = vsub.f32 %v321, %v322
    %v324 = vand.u32 %v323, 4294901760
    %325 = vmatpush1.msra.mxu0 %v324
    %326 = vmatprep.subr.mxu0 0.0
    %v327 = vand.u32 %v159, 4294901760
    %v328 = vsub.f32 %v159, %v327
    %v329 = vand.u32 %v328, 4294901760
    %v330 = vsub.f32 %v328, %v329
    %v331 = vand.u32 %v330, 4294901760
    %332 = vmatpush1.msra.mxu0 %v331
    %333 = vmatprep.subr.mxu0 0.0
    %v334 = vand.u32 %v164, 4294901760
    %v335 = vsub.f32 %v164, %v334
    %v336 = vand.u32 %v335, 4294901760
    %v337 = vsub.f32 %v335, %v336
    %v338 = vand.u32 %v337, 4294901760
    %339 = vmatpush1.msra.mxu0 %v338
    %340 = vmatprep.subr.mxu0 0.0
    %v341 = vand.u32 %v169, 4294901760
    %v342 = vsub.f32 %v169, %v341
    %v343 = vand.u32 %v342, 4294901760
    %v344 = vsub.f32 %v342, %v343
    %v345 = vand.u32 %v344, 4294901760
    %346 = vmatpush1.msra.mxu0 %v345
    %347 = vmatprep.subr.mxu0 0.0
    %v348 = vand.u32 %v174, 4294901760
    %v349 = vsub.f32 %v174, %v348
    %v350 = vand.u32 %v349, 4294901760
    %v351 = vsub.f32 %v349, %v350
    %v352 = vand.u32 %v351, 4294901760
    %353 = vmatpush1.msra.mxu0 %v352
    %354 = vmatprep.subr.mxu0 0.0
    %v355 = vand.u32 %v179, 4294901760
    %v356 = vsub.f32 %v179, %v355
    %v357 = vand.u32 %v356, 4294901760
    %v358 = vsub.f32 %v356, %v357
    %v359 = vand.u32 %v358, 4294901760
    %360 = vmatpush1.msra.mxu0 %v359
    %361 = vmatprep.subr.mxu0 0.0
    %v362 = vand.u32 %v184, 4294901760
    %v363 = vsub.f32 %v184, %v362
    %v364 = vand.u32 %v363, 4294901760
    %v365 = vsub.f32 %v363, %v364
    %v366 = vand.u32 %v365, 4294901760
    %367 = vmatpush1.msra.mxu0 %v366
    %368 = vmatprep.subr.mxu0 0.0
    %v369 = vand.u32 %v189, 4294901760
    %v370 = vsub.f32 %v189, %v369
    %v371 = vand.u32 %v370, 4294901760
    %v372 = vsub.f32 %v370, %v371
    %v373 = vand.u32 %v372, 4294901760
    %374 = vmatpush1.msra.mxu0 %v373
    %375 = vmatprep.subr.mxu0 0.0
    %v376 = vand.u32 %v194, 4294901760
    %v377 = vsub.f32 %v194, %v376
    %v378 = vand.u32 %v377, 4294901760
    %v379 = vsub.f32 %v377, %v378
    %v380 = vand.u32 %v379, 4294901760
    %381 = vmatpush1.msra.mxu0 %v380
    %382 = vmatprep.subr.mxu0 0.0
    %v383 = vand.u32 %v199, 4294901760
    %v384 = vsub.f32 %v199, %v383
    %v385 = vand.u32 %v384, 4294901760
    %v386 = vsub.f32 %v384, %v385
    %v387 = vand.u32 %v386, 4294901760
    %388 = vmatpush1.msra.mxu0 %v387
    %389 = vmatprep.subr.mxu0 0.0
    %v390 = vand.u32 %v204, 4294901760
    %v391 = vsub.f32 %v204, %v390
    %v392 = vand.u32 %v391, 4294901760
    %v393 = vsub.f32 %v391, %v392
    %v394 = vand.u32 %v393, 4294901760
    %395 = vmatpush1.msra.mxu0 %v394
    %396 = vmatprep.subr.mxu0 0.0
    %v397 = vand.u32 %v209, 4294901760
    %v398 = vsub.f32 %v209, %v397
    %v399 = vand.u32 %v398, 4294901760
    %v400 = vsub.f32 %v398, %v399
    %v401 = vand.u32 %v400, 4294901760
    %402 = vmatpush1.msra.mxu0 %v401
    %403 = vmatprep.subr.mxu0 0.0
    %404 = vmatpush1.msra.mxu0 0.0
    %405 = vmatprep.subr.mxu0 0.0
    %406 = vmatpush1.msra.mxu0 0.0
    %407 = vmatprep.subr.mxu0 0.0
    %408 = vmatpush1.msra.mxu0 0.0
    %409 = vmatprep.subr.mxu0 0.0
    %410 = vmatpush1.msra.mxu0 0.0
    %411 = vmatprep.subr.mxu0 0.0
    %412 = vmatpush1.msra.mxu0 0.0
    %413 = vmatprep.subr.mxu0 0.0
    %414 = vmatpush1.msra.mxu0 0.0
    %415 = vmatprep.subr.mxu0 0.0
    %416 = vmatpush1.msra.mxu0 0.0
    %417 = vmatprep.subr.mxu0 0.0
    %418 = vmatpush1.msra.mxu0 0.0
    %419 = vmatprep.subr.mxu0 0.0
    %420 = vmatpush1.msra.mxu0 0.0
    %421 = vmatprep.subr.mxu0 0.0
    %422 = vmatpush1.msra.mxu0 0.0
    %423 = vmatprep.subr.mxu0 0.0
    %424 = vmatpush1.msra.mxu0 0.0
    %425 = vmatprep.subr.mxu0 0.0
    %426 = vmatpush1.msra.mxu0 0.0
    %427 = vmatprep.subr.mxu0 0.0
    %428 = vmatpush1.msra.mxu0 0.0
    %429 = vmatprep.subr.mxu0 0.0
    %430 = vmatpush1.msra.mxu0 0.0
    %431 = vmatprep.subr.mxu0 0.0
    %432 = vmatpush1.msra.mxu0 0.0
    %433 = vmatprep.subr.mxu0 0.0
    %434 = vmatpush1.msra.mxu0 0.0
    %435 = vmatprep.subr.mxu0 0.0
    %436 = vmatpush1.msra.mxu0 0.0
    %437 = vmatprep.subr.mxu0 0.0
    %438 = vmatpush1.msra.mxu0 0.0
    %439 = vmatprep.mubr.f32.mxu0 0.0
    %v440 = vand.u32 %v214, 4294901760
    %441 = vmatmul.mubr.f32.gmra.mrb[0].mxu0 %v440
    %v442 = vpop.f32.mrb[0].mxu0
    %v443 = vadd.f32 %v302, %v442
    %v444 = vpop.f32.mrb[0].mxu0
    %445 = vdwg.mxu0
    %446 = vmatprep.subr.mxu0 0.0
    %v447 = vand.u32 %v144, 4294901760
    %v448 = vsub.f32 %v144, %v447
    %449 = vmatpush1.msra.mxu0 %v448
    %450 = vmatprep.subr.mxu0 0.0
    %v451 = vand.u32 %v149, 4294901760
    %v452 = vsub.f32 %v149, %v451
    %453 = vmatpush1.msra.mxu0 %v452
    %454 = vmatprep.subr.mxu0 0.0
    %v455 = vand.u32 %v154, 4294901760
    %v456 = vsub.f32 %v154, %v455
    %457 = vmatpush1.msra.mxu0 %v456
    %458 = vmatprep.subr.mxu0 0.0
    %v459 = vand.u32 %v159, 4294901760
    %v460 = vsub.f32 %v159, %v459
    %461 = vmatpush1.msra.mxu0 %v460
    %462 = vmatprep.subr.mxu0 0.0
    %v463 = vand.u32 %v164, 4294901760
    %v464 = vsub.f32 %v164, %v463
    %465 = vmatpush1.msra.mxu0 %v464
    %466 = vmatprep.subr.mxu0 0.0
    %v467 = vand.u32 %v169, 4294901760
    %v468 = vsub.f32 %v169, %v467
    %469 = vmatpush1.msra.mxu0 %v468
    %470 = vmatprep.subr.mxu0 0.0
    %v471 = vand.u32 %v174, 4294901760
    %v472 = vsub.f32 %v174, %v471
    %473 = vmatpush1.msra.mxu0 %v472
    %474 = vmatprep.subr.mxu0 0.0
    %v475 = vand.u32 %v179, 4294901760
    %v476 = vsub.f32 %v179, %v475
    %477 = vmatpush1.msra.mxu0 %v476
    %478 = vmatprep.subr.mxu0 0.0
    %v479 = vand.u32 %v184, 4294901760
    %v480 = vsub.f32 %v184, %v479
    %481 = vmatpush1.msra.mxu0 %v480
    %482 = vmatprep.subr.mxu0 0.0
    %v483 = vand.u32 %v189, 4294901760
    %v484 = vsub.f32 %v189, %v483
    %485 = vmatpush1.msra.mxu0 %v484
    %486 = vmatprep.subr.mxu0 0.0
    %v487 = vand.u32 %v194, 4294901760
    %v488 = vsub.f32 %v194, %v487
    %489 = vmatpush1.msra.mxu0 %v488
    %490 = vmatprep.subr.mxu0 0.0
    %v491 = vand.u32 %v199, 4294901760
    %v492 = vsub.f32 %v199, %v491
    %493 = vmatpush1.msra.mxu0 %v492
    %494 = vmatprep.subr.mxu0 0.0
    %v495 = vand.u32 %v204, 4294901760
    %v496 = vsub.f32 %v204, %v495
    %497 = vmatpush1.msra.mxu0 %v496
    %498 = vmatprep.subr.mxu0 0.0
    %v499 = vand.u32 %v209, 4294901760
    %v500 = vsub.f32 %v209, %v499
    %501 = vmatpush1.msra.mxu0 %v500
    %502 = vmatprep.subr.mxu0 0.0
    %503 = vmatpush1.msra.mxu0 0.0
    %504 = vmatprep.subr.mxu0 0.0
    %505 = vmatpush1.msra.mxu0 0.0
    %506 = vmatprep.subr.mxu0 0.0
    %507 = vmatpush1.msra.mxu0 0.0
    %508 = vmatprep.subr.mxu0 0.0
    %509 = vmatpush1.msra.mxu0 0.0
    %510 = vmatprep.subr.mxu0 0.0
    %511 = vmatpush1.msra.mxu0 0.0
    %512 = vmatprep.subr.mxu0 0.0
    %513 = vmatpush1.msra.mxu0 0.0
    %514 = vmatprep.subr.mxu0 0.0
    %515 = vmatpush1.msra.mxu0 0.0
    %516 = vmatprep.subr.mxu0 0.0
    %517 = vmatpush1.msra.mxu0 0.0
    %518 = vmatprep.subr.mxu0 0.0
    %519 = vmatpush1.msra.mxu0 0.0
    %520 = vmatprep.subr.mxu0 0.0
    %521 = vmatpush1.msra.mxu0 0.0
    %522 = vmatprep.subr.mxu0 0.0
    %523 = vmatpush1.msra.mxu0 0.0
    %524 = vmatprep.subr.mxu0 0.0
    %525 = vmatpush1.msra.mxu0 0.0
    %526 = vmatprep.subr.mxu0 0.0
    %527 = vmatpush1.msra.mxu0 0.0
    %528 = vmatprep.subr.mxu0 0.0
    %529 = vmatpush1.msra.mxu0 0.0
    %530 = vmatprep.subr.mxu0 0.0
    %531 = vmatpush1.msra.mxu0 0.0
    %532 = vmatprep.subr.mxu0 0.0
    %533 = vmatpush1.msra.mxu0 0.0
    %534 = vmatprep.subr.mxu0 0.0
    %535 = vmatpush1.msra.mxu0 0.0
    %536 = vmatprep.subr.mxu0 0.0
    %537 = vmatpush1.msra.mxu0 0.0
    %538 = vmatprep.mubr.f32.mxu0 0.0
    %v539 = vand.u32 %v214, 4294901760
    %v540 = vsub.f32 %v214, %v539
    %541 = vmatmul.mubr.f32.gmra.mrb[0].mxu0 %v540
    %v542 = vpop.f32.mrb[0].mxu0
    %v543 = vadd.f32 %v443, %v542
    %v544 = vpop.f32.mrb[0].mxu0
    %545 = vdwg.mxu0
    %546 = vmatprep.subr.mxu0 0.0
    %v547 = vand.u32 %v144, 4294901760
    %548 = vmatpush1.msra.mxu0 %v547
    %549 = vmatprep.subr.mxu0 0.0
    %v550 = vand.u32 %v149, 4294901760
    %551 = vmatpush1.msra.mxu0 %v550
    %552 = vmatprep.subr.mxu0 0.0
    %v553 = vand.u32 %v154, 4294901760
    %554 = vmatpush1.msra.mxu0 %v553
    %555 = vmatprep.subr.mxu0 0.0
    %v556 = vand.u32 %v159, 4294901760
    %557 = vmatpush1.msra.mxu0 %v556
    %558 = vmatprep.subr.mxu0 0.0
    %v559 = vand.u32 %v164, 4294901760
    %560 = vmatpush1.msra.mxu0 %v559
    %561 = vmatprep.subr.mxu0 0.0
    %v562 = vand.u32 %v169, 4294901760
    %563 = vmatpush1.msra.mxu0 %v562
    %564 = vmatprep.subr.mxu0 0.0
    %v565 = vand.u32 %v174, 4294901760
    %566 = vmatpush1.msra.mxu0 %v565
    %567 = vmatprep.subr.mxu0 0.0
    %v568 = vand.u32 %v179, 4294901760
    %569 = vmatpush1.msra.mxu0 %v568
    %570 = vmatprep.subr.mxu0 0.0
    %v571 = vand.u32 %v184, 4294901760
    %572 = vmatpush1.msra.mxu0 %v571
    %573 = vmatprep.subr.mxu0 0.0
    %v574 = vand.u32 %v189, 4294901760
    %575 = vmatpush1.msra.mxu0 %v574
    %576 = vmatprep.subr.mxu0 0.0
    %v577 = vand.u32 %v194, 4294901760
    %578 = vmatpush1.msra.mxu0 %v577
    %579 = vmatprep.subr.mxu0 0.0
    %v580 = vand.u32 %v199, 4294901760
    %581 = vmatpush1.msra.mxu0 %v580
    %582 = vmatprep.subr.mxu0 0.0
    %v583 = vand.u32 %v204, 4294901760
    %584 = vmatpush1.msra.mxu0 %v583
    %585 = vmatprep.subr.mxu0 0.0
    %v586 = vand.u32 %v209, 4294901760
    %587 = vmatpush1.msra.mxu0 %v586
    %588 = vmatprep.subr.mxu0 0.0
    %589 = vmatpush1.msra.mxu0 0.0
    %590 = vmatprep.subr.mxu0 0.0
    %591 = vmatpush1.msra.mxu0 0.0
    %592 = vmatprep.subr.mxu0 0.0
    %593 = vmatpush1.msra.mxu0 0.0
    %594 = vmatprep.subr.mxu0 0.0
    %595 = vmatpush1.msra.mxu0 0.0
    %596 = vmatprep.subr.mxu0 0.0
    %597 = vmatpush1.msra.mxu0 0.0
    %598 = vmatprep.subr.mxu0 0.0
    %599 = vmatpush1.msra.mxu0 0.0
    %600 = vmatprep.subr.mxu0 0.0
    %601 = vmatpush1.msra.mxu0 0.0
    %602 = vmatprep.subr.mxu0 0.0
    %603 = vmatpush1.msra.mxu0 0.0
    %604 = vmatprep.subr.mxu0 0.0
    %605 = vmatpush1.msra.mxu0 0.0
    %606 = vmatprep.subr.mxu0 0.0
    %607 = vmatpush1.msra.mxu0 0.0
    %608 = vmatprep.subr.mxu0 0.0
    %609 = vmatpush1.msra.mxu0 0.0
    %610 = vmatprep.subr.mxu0 0.0
    %611 = vmatpush1.msra.mxu0 0.0
    %612 = vmatprep.subr.mxu0 0.0
    %613 = vmatpush1.msra.mxu0 0.0
    %614 = vmatprep.subr.mxu0 0.0
    %615 = vmatpush1.msra.mxu0 0.0
    %616 = vmatprep.subr.mxu0 0.0
    %617 = vmatpush1.msra.mxu0 0.0
    %618 = vmatprep.subr.mxu0 0.0
    %619 = vmatpush1.msra.mxu0 0.0
    %620 = vmatprep.subr.mxu0 0.0
    %621 = vmatpush1.msra.mxu0 0.0
    %622 = vmatprep.subr.mxu0 0.0
    %623 = vmatpush1.msra.mxu0 0.0
    %624 = vmatprep.mubr.f32.mxu0 0.0
    %v625 = vand.u32 %v214, 4294901760
    %v626 = vsub.f32 %v214, %v625
    %v627 = vand.u32 %v626, 4294901760
    %628 = vmatmul.mubr.f32.gmra.mrb[0].mxu0 %v627
    %v629 = vpop.f32.mrb[0].mxu0
    %v630 = vadd.f32 %v543, %v629
    %v631 = vpop.f32.mrb[0].mxu0
    %632 = vdwg.mxu0
    %633 = vmatprep.subr.mxu0 0.0
    %v634 = vand.u32 %v144, 4294901760
    %v635 = vsub.f32 %v144, %v634
    %v636 = vand.u32 %v635, 4294901760
    %637 = vmatpush1.msra.mxu0 %v636
    %638 = vmatprep.subr.mxu0 0.0
    %v639 = vand.u32 %v149, 4294901760
    %v640 = vsub.f32 %v149, %v639
    %v641 = vand.u32 %v640, 4294901760
    %642 = vmatpush1.msra.mxu0 %v641
    %643 = vmatprep.subr.mxu0 0.0
    %v644 = vand.u32 %v154, 4294901760
    %v645 = vsub.f32 %v154, %v644
    %v646 = vand.u32 %v645, 4294901760
    %647 = vmatpush1.msra.mxu0 %v646
    %648 = vmatprep.subr.mxu0 0.0
    %v649 = vand.u32 %v159, 4294901760
    %v650 = vsub.f32 %v159, %v649
    %v651 = vand.u32 %v650, 4294901760
    %652 = vmatpush1.msra.mxu0 %v651
    %653 = vmatprep.subr.mxu0 0.0
    %v654 = vand.u32 %v164, 4294901760
    %v655 = vsub.f32 %v164, %v654
    %v656 = vand.u32 %v655, 4294901760
    %657 = vmatpush1.msra.mxu0 %v656
    %658 = vmatprep.subr.mxu0 0.0
    %v659 = vand.u32 %v169, 4294901760
    %v660 = vsub.f32 %v169, %v659
    %v661 = vand.u32 %v660, 4294901760
    %662 = vmatpush1.msra.mxu0 %v661
    %663 = vmatprep.subr.mxu0 0.0
    %v664 = vand.u32 %v174, 4294901760
    %v665 = vsub.f32 %v174, %v664
    %v666 = vand.u32 %v665, 4294901760
    %667 = vmatpush1.msra.mxu0 %v666
    %668 = vmatprep.subr.mxu0 0.0
    %v669 = vand.u32 %v179, 4294901760
    %v670 = vsub.f32 %v179, %v669
    %v671 = vand.u32 %v670, 4294901760
    %672 = vmatpush1.msra.mxu0 %v671
    %673 = vmatprep.subr.mxu0 0.0
    %v674 = vand.u32 %v184, 4294901760
    %v675 = vsub.f32 %v184, %v674
    %v676 = vand.u32 %v675, 4294901760
    %677 = vmatpush1.msra.mxu0 %v676
    %678 = vmatprep.subr.mxu0 0.0
    %v679 = vand.u32 %v189, 4294901760
    %v680 = vsub.f32 %v189, %v679
    %v681 = vand.u32 %v680, 4294901760
    %682 = vmatpush1.msra.mxu0 %v681
    %683 = vmatprep.subr.mxu0 0.0
    %v684 = vand.u32 %v194, 4294901760
    %v685 = vsub.f32 %v194, %v684
    %v686 = vand.u32 %v685, 4294901760
    %687 = vmatpush1.msra.mxu0 %v686
    %688 = vmatprep.subr.mxu0 0.0
    %v689 = vand.u32 %v199, 4294901760
    %v690 = vsub.f32 %v199, %v689
    %v691 = vand.u32 %v690, 4294901760
    %692 = vmatpush1.msra.mxu0 %v691
    %693 = vmatprep.subr.mxu0 0.0
    %v694 = vand.u32 %v204, 4294901760
    %v695 = vsub.f32 %v204, %v694
    %v696 = vand.u32 %v695, 4294901760
    %697 = vmatpush1.msra.mxu0 %v696
    %698 = vmatprep.subr.mxu0 0.0
    %v699 = vand.u32 %v209, 4294901760
    %v700 = vsub.f32 %v209, %v699
    %v701 = vand.u32 %v700, 4294901760
    %702 = vmatpush1.msra.mxu0 %v701
    %703 = vmatprep.subr.mxu0 0.0
    %704 = vmatpush1.msra.mxu0 0.0
    %705 = vmatprep.subr.mxu0 0.0
    %706 = vmatpush1.msra.mxu0 0.0
    %707 = vmatprep.subr.mxu0 0.0
    %708 = vmatpush1.msra.mxu0 0.0
    %709 = vmatprep.subr.mxu0 0.0
    %710 = vmatpush1.msra.mxu0 0.0
    %711 = vmatprep.subr.mxu0 0.0
    %712 = vmatpush1.msra.mxu0 0.0
    %713 = vmatprep.subr.mxu0 0.0
    %714 = vmatpush1.msra.mxu0 0.0
    %715 = vmatprep.subr.mxu0 0.0
    %716 = vmatpush1.msra.mxu0 0.0
    %717 = vmatprep.subr.mxu0 0.0
    %718 = vmatpush1.msra.mxu0 0.0
    %719 = vmatprep.subr.mxu0 0.0
    %720 = vmatpush1.msra.mxu0 0.0
    %721 = vmatprep.subr.mxu0 0.0
    %722 = vmatpush1.msra.mxu0 0.0
    %723 = vmatprep.subr.mxu0 0.0
    %724 = vmatpush1.msra.mxu0 0.0
    %725 = vmatprep.subr.mxu0 0.0
    %726 = vmatpush1.msra.mxu0 0.0
    %727 = vmatprep.subr.mxu0 0.0
    %728 = vmatpush1.msra.mxu0 0.0
    %729 = vmatprep.subr.mxu0 0.0
    %730 = vmatpush1.msra.mxu0 0.0
    %731 = vmatprep.subr.mxu0 0.0
    %732 = vmatpush1.msra.mxu0 0.0
    %733 = vmatprep.subr.mxu0 0.0
    %734 = vmatpush1.msra.mxu0 0.0
    %735 = vmatprep.subr.mxu0 0.0
    %736 = vmatpush1.msra.mxu0 0.0
    %737 = vmatprep.subr.mxu0 0.0
    %738 = vmatpush1.msra.mxu0 0.0
    %739 = vmatprep.mubr.f32.mxu0 0.0
    %v740 = vand.u32 %v214, 4294901760
    %741 = vmatmul.mubr.f32.gmra.mrb[0].mxu0 %v740
    %v742 = vpop.f32.mrb[0].mxu0
    %v743 = vadd.f32 %v630, %v742
    %v744 = vpop.f32.mrb[0].mxu0
    %745 = vdwg.mxu0
    %746 = vmatprep.subr.mxu0 0.0
    %v747 = vand.u32 %v144, 4294901760
    %748 = vmatpush1.msra.mxu0 %v747
    %749 = vmatprep.subr.mxu0 0.0
    %v750 = vand.u32 %v149, 4294901760
    %751 = vmatpush1.msra.mxu0 %v750
    %752 = vmatprep.subr.mxu0 0.0
    %v753 = vand.u32 %v154, 4294901760
    %754 = vmatpush1.msra.mxu0 %v753
    %755 = vmatprep.subr.mxu0 0.0
    %v756 = vand.u32 %v159, 4294901760
    %757 = vmatpush1.msra.mxu0 %v756
    %758 = vmatprep.subr.mxu0 0.0
    %v759 = vand.u32 %v164, 4294901760
    %760 = vmatpush1.msra.mxu0 %v759
    %761 = vmatprep.subr.mxu0 0.0
    %v762 = vand.u32 %v169, 4294901760
    %763 = vmatpush1.msra.mxu0 %v762
    %764 = vmatprep.subr.mxu0 0.0
    %v765 = vand.u32 %v174, 4294901760
    %766 = vmatpush1.msra.mxu0 %v765
    %767 = vmatprep.subr.mxu0 0.0
    %v768 = vand.u32 %v179, 4294901760
    %769 = vmatpush1.msra.mxu0 %v768
    %770 = vmatprep.subr.mxu0 0.0
    %v771 = vand.u32 %v184, 4294901760
    %772 = vmatpush1.msra.mxu0 %v771
    %773 = vmatprep.subr.mxu0 0.0
    %v774 = vand.u32 %v189, 4294901760
    %775 = vmatpush1.msra.mxu0 %v774
    %776 = vmatprep.subr.mxu0 0.0
    %v777 = vand.u32 %v194, 4294901760
    %778 = vmatpush1.msra.mxu0 %v777
    %779 = vmatprep.subr.mxu0 0.0
    %v780 = vand.u32 %v199, 4294901760
    %781 = vmatpush1.msra.mxu0 %v780
    %782 = vmatprep.subr.mxu0 0.0
    %v783 = vand.u32 %v204, 4294901760
    %784 = vmatpush1.msra.mxu0 %v783
    %785 = vmatprep.subr.mxu0 0.0
    %v786 = vand.u32 %v209, 4294901760
    %787 = vmatpush1.msra.mxu0 %v786
    %788 = vmatprep.subr.mxu0 0.0
    %789 = vmatpush1.msra.mxu0 0.0
    %790 = vmatprep.subr.mxu0 0.0
    %791 = vmatpush1.msra.mxu0 0.0
    %792 = vmatprep.subr.mxu0 0.0
    %793 = vmatpush1.msra.mxu0 0.0
    %794 = vmatprep.subr.mxu0 0.0
    %795 = vmatpush1.msra.mxu0 0.0
    %796 = vmatprep.subr.mxu0 0.0
    %797 = vmatpush1.msra.mxu0 0.0
    %798 = vmatprep.subr.mxu0 0.0
    %799 = vmatpush1.msra.mxu0 0.0
    %800 = vmatprep.subr.mxu0 0.0
    %801 = vmatpush1.msra.mxu0 0.0
    %802 = vmatprep.subr.mxu0 0.0
    %803 = vmatpush1.msra.mxu0 0.0
    %804 = vmatprep.subr.mxu0 0.0
    %805 = vmatpush1.msra.mxu0 0.0
    %806 = vmatprep.subr.mxu0 0.0
    %807 = vmatpush1.msra.mxu0 0.0
    %808 = vmatprep.subr.mxu0 0.0
    %809 = vmatpush1.msra.mxu0 0.0
    %810 = vmatprep.subr.mxu0 0.0
    %811 = vmatpush1.msra.mxu0 0.0
    %812 = vmatprep.subr.mxu0 0.0
    %813 = vmatpush1.msra.mxu0 0.0
    %814 = vmatprep.subr.mxu0 0.0
    %815 = vmatpush1.msra.mxu0 0.0
    %816 = vmatprep.subr.mxu0 0.0
    %817 = vmatpush1.msra.mxu0 0.0
    %818 = vmatprep.subr.mxu0 0.0
    %819 = vmatpush1.msra.mxu0 0.0
    %820 = vmatprep.subr.mxu0 0.0
    %821 = vmatpush1.msra.mxu0 0.0
    %822 = vmatprep.subr.mxu0 0.0
    %823 = vmatpush1.msra.mxu0 0.0
    %824 = vmatprep.mubr.f32.mxu0 0.0
    %v825 = vand.u32 %v214, 4294901760
    %826 = vmatmul.mubr.f32.gmra.mrb[0].mxu0 %v825
    %v827 = vpop.f32.mrb[0].mxu0
    %v828 = vadd.f32 %v743, %v827
    %v829 = vpop.f32.mrb[0].mxu0
    %830 = vdwg.mxu0
    %v831 = vmul.f32 %v828, 0.008928572
    %v832 = vlaneseq
    %v833 = vshrl.u32 %v832, 7
    %v834 = vsub.s32 0, %v833
    %v835 = vrot.slane %v831, %v834
    %v836 = vsub.f32 %v144, %v835
    %v837 = vsub.f32 %v149, %v835
    %v838 = vsub.f32 %v154, %v835
    %v839 = vsub.f32 %v159, %v835
    %v840 = vsub.f32 %v164, %v835
    %v841 = vsub.f32 %v169, %v835
    %v842 = vsub.f32 %v174, %v835
    %v843 = vsub.f32 %v179, %v835
    %v844 = vsub.f32 %v184, %v835
    %v845 = vsub.f32 %v189, %v835
    %v846 = vsub.f32 %v194, %v835
    %v847 = vsub.f32 %v199, %v835
    %v848 = vsub.f32 %v204, %v835
    %v849 = vsub.f32 %v209, %v835
    %v850 = vmul.f32 %v836, %v836
    %v851 = vmul.f32 %v837, %v837
    %v852 = vmul.f32 %v838, %v838
    %v853 = vmul.f32 %v839, %v839
    %v854 = vmul.f32 %v840, %v840
    %v855 = vmul.f32 %v841, %v841
    %v856 = vmul.f32 %v842, %v842
    %v857 = vmul.f32 %v843, %v843
    %v858 = vmul.f32 %v844, %v844
    %v859 = vmul.f32 %v845, %v845
    %v860 = vmul.f32 %v846, %v846
    %v861 = vmul.f32 %v847, %v847
    %v862 = vmul.f32 %v848, %v848
    %v863 = vmul.f32 %v849, %v849
    %864 = vmatprep.subr.mxu0 0.0
    %v865 = vand.u32 %v850, 4294901760
    %866 = vmatpush1.msra.mxu0 %v865
    %867 = vmatprep.subr.mxu0 0.0
    %v868 = vand.u32 %v851, 4294901760
    %869 = vmatpush1.msra.mxu0 %v868
    %870 = vmatprep.subr.mxu0 0.0
    %v871 = vand.u32 %v852, 4294901760
    %872 = vmatpush1.msra.mxu0 %v871
    %873 = vmatprep.subr.mxu0 0.0
    %v874 = vand.u32 %v853, 4294901760
    %875 = vmatpush1.msra.mxu0 %v874
    %876 = vmatprep.subr.mxu0 0.0
    %v877 = vand.u32 %v854, 4294901760
    %878 = vmatpush1.msra.mxu0 %v877
    %879 = vmatprep.subr.mxu0 0.0
    %v880 = vand.u32 %v855, 4294901760
    %881 = vmatpush1.msra.mxu0 %v880
    %882 = vmatprep.subr.mxu0 0.0
    %v883 = vand.u32 %v856, 4294901760
    %884 = vmatpush1.msra.mxu0 %v883
    %885 = vmatprep.subr.mxu0 0.0
    %v886 = vand.u32 %v857, 4294901760
    %887 = vmatpush1.msra.mxu0 %v886
    %888 = vmatprep.subr.mxu0 0.0
    %v889 = vand.u32 %v858, 4294901760
    %890 = vmatpush1.msra.mxu0 %v889
    %891 = vmatprep.subr.mxu0 0.0
    %v892 = vand.u32 %v859, 4294901760
    %893 = vmatpush1.msra.mxu0 %v892
    %894 = vmatprep.subr.mxu0 0.0
    %v895 = vand.u32 %v860, 4294901760
    %896 = vmatpush1.msra.mxu0 %v895
    %897 = vmatprep.subr.mxu0 0.0
    %v898 = vand.u32 %v861, 4294901760
    %899 = vmatpush1.msra.mxu0 %v898
    %900 = vmatprep.subr.mxu0 0.0
    %v901 = vand.u32 %v862, 4294901760
    %902 = vmatpush1.msra.mxu0 %v901
    %903 = vmatprep.subr.mxu0 0.0
    %v904 = vand.u32 %v863, 4294901760
    %905 = vmatpush1.msra.mxu0 %v904
    %906 = vmatprep.subr.mxu0 0.0
    %907 = vmatpush1.msra.mxu0 0.0
    %908 = vmatprep.subr.mxu0 0.0
    %909 = vmatpush1.msra.mxu0 0.0
    %910 = vmatprep.subr.mxu0 0.0
    %911 = vmatpush1.msra.mxu0 0.0
    %912 = vmatprep.subr.mxu0 0.0
    %913 = vmatpush1.msra.mxu0 0.0
    %914 = vmatprep.subr.mxu0 0.0
    %915 = vmatpush1.msra.mxu0 0.0
    %916 = vmatprep.subr.mxu0 0.0
    %917 = vmatpush1.msra.mxu0 0.0
    %918 = vmatprep.subr.mxu0 0.0
    %919 = vmatpush1.msra.mxu0 0.0
    %920 = vmatprep.subr.mxu0 0.0
    %921 = vmatpush1.msra.mxu0 0.0
    %922 = vmatprep.subr.mxu0 0.0
    %923 = vmatpush1.msra.mxu0 0.0
    %924 = vmatprep.subr.mxu0 0.0
    %925 = vmatpush1.msra.mxu0 0.0
    %926 = vmatprep.subr.mxu0 0.0
    %927 = vmatpush1.msra.mxu0 0.0
    %928 = vmatprep.subr.mxu0 0.0
    %929 = vmatpush1.msra.mxu0 0.0
    %930 = vmatprep.subr.mxu0 0.0
    %931 = vmatpush1.msra.mxu0 0.0
    %932 = vmatprep.subr.mxu0 0.0
    %933 = vmatpush1.msra.mxu0 0.0
    %934 = vmatprep.subr.mxu0 0.0
    %935 = vmatpush1.msra.mxu0 0.0
    %936 = vmatprep.subr.mxu0 0.0
    %937 = vmatpush1.msra.mxu0 0.0
    %938 = vmatprep.subr.mxu0 0.0
    %939 = vmatpush1.msra.mxu0 0.0
    %940 = vmatprep.subr.mxu0 0.0
    %941 = vmatpush1.msra.mxu0 0.0
    %942 = vmatprep.mubr.f32.mxu0 0.0
    %v943 = vand.u32 %v214, 4294901760
    %v944 = vsub.f32 %v214, %v943
    %v945 = vand.u32 %v944, 4294901760
    %v946 = vsub.f32 %v944, %v945
    %v947 = vand.u32 %v946, 4294901760
    %948 = vmatmul.mubr.f32.gmra.mrb[0].mxu0 %v947
    %v949 = vpop.f32.mrb[0].mxu0
    %v950 = vadd.f32 0.0, %v949
    %v951 = vpop.f32.mrb[0].mxu0
    %952 = vdwg.mxu0
    %953 = vmatprep.subr.mxu0 0.0
    %v954 = vand.u32 %v850, 4294901760
    %v955 = vsub.f32 %v850, %v954
    %v956 = vand.u32 %v955, 4294901760
    %v957 = vsub.f32 %v955, %v956
    %v958 = vand.u32 %v957, 4294901760
    %959 = vmatpush1.msra.mxu0 %v958
    %960 = vmatprep.subr.mxu0 0.0
    %v961 = vand.u32 %v851, 4294901760
    %v962 = vsub.f32 %v851, %v961
    %v963 = vand.u32 %v962, 4294901760
    %v964 = vsub.f32 %v962, %v963
    %v965 = vand.u32 %v964, 4294901760
    %966 = vmatpush1.msra.mxu0 %v965
    %967 = vmatprep.subr.mxu0 0.0
    %v968 = vand.u32 %v852, 4294901760
    %v969 = vsub.f32 %v852, %v968
    %v970 = vand.u32 %v969, 4294901760
    %v971 = vsub.f32 %v969, %v970
    %v972 = vand.u32 %v971, 4294901760
    %973 = vmatpush1.msra.mxu0 %v972
    %974 = vmatprep.subr.mxu0 0.0
    %v975 = vand.u32 %v853, 4294901760
    %v976 = vsub.f32 %v853, %v975
    %v977 = vand.u32 %v976, 4294901760
    %v978 = vsub.f32 %v976, %v977
    %v979 = vand.u32 %v978, 4294901760
    %980 = vmatpush1.msra.mxu0 %v979
    %981 = vmatprep.subr.mxu0 0.0
    %v982 = vand.u32 %v854, 4294901760
    %v983 = vsub.f32 %v854, %v982
    %v984 = vand.u32 %v983, 4294901760
    %v985 = vsub.f32 %v983, %v984
    %v986 = vand.u32 %v985, 4294901760
    %987 = vmatpush1.msra.mxu0 %v986
    %988 = vmatprep.subr.mxu0 0.0
    %v989 = vand.u32 %v855, 4294901760
    %v990 = vsub.f32 %v855, %v989
    %v991 = vand.u32 %v990, 4294901760
    %v992 = vsub.f32 %v990, %v991
    %v993 = vand.u32 %v992, 4294901760
    %994 = vmatpush1.msra.mxu0 %v993
    %995 = vmatprep.subr.mxu0 0.0
    %v996 = vand.u32 %v856, 4294901760
    %v997 = vsub.f32 %v856, %v996
    %v998 = vand.u32 %v997, 4294901760
    %v999 = vsub.f32 %v997, %v998
    %v1000 = vand.u32 %v999, 4294901760
    %1001 = vmatpush1.msra.mxu0 %v1000
    %1002 = vmatprep.subr.mxu0 0.0
    %v1003 = vand.u32 %v857, 4294901760
    %v1004 = vsub.f32 %v857, %v1003
    %v1005 = vand.u32 %v1004, 4294901760
    %v1006 = vsub.f32 %v1004, %v1005
    %v1007 = vand.u32 %v1006, 4294901760
    %1008 = vmatpush1.msra.mxu0 %v1007
    %1009 = vmatprep.subr.mxu0 0.0
    %v1010 = vand.u32 %v858, 4294901760
    %v1011 = vsub.f32 %v858, %v1010
    %v1012 = vand.u32 %v1011, 4294901760
    %v1013 = vsub.f32 %v1011, %v1012
    %v1014 = vand.u32 %v1013, 4294901760
    %1015 = vmatpush1.msra.mxu0 %v1014
    %1016 = vmatprep.subr.mxu0 0.0
    %v1017 = vand.u32 %v859, 4294901760
    %v1018 = vsub.f32 %v859, %v1017
    %v1019 = vand.u32 %v1018, 4294901760
    %v1020 = vsub.f32 %v1018, %v1019
    %v1021 = vand.u32 %v1020, 4294901760
    %1022 = vmatpush1.msra.mxu0 %v1021
    %1023 = vmatprep.subr.mxu0 0.0
    %v1024 = vand.u32 %v860, 4294901760
    %v1025 = vsub.f32 %v860, %v1024
    %v1026 = vand.u32 %v1025, 4294901760
    %v1027 = vsub.f32 %v1025, %v1026
    %v1028 = vand.u32 %v1027, 4294901760
    %1029 = vmatpush1.msra.mxu0 %v1028
    %1030 = vmatprep.subr.mxu0 0.0
    %v1031 = vand.u32 %v861, 4294901760
    %v1032 = vsub.f32 %v861, %v1031
    %v1033 = vand.u32 %v1032, 4294901760
    %v1034 = vsub.f32 %v1032, %v1033
    %v1035 = vand.u32 %v1034, 4294901760
    %1036 = vmatpush1.msra.mxu0 %v1035
    %1037 = vmatprep.subr.mxu0 0.0
    %v1038 = vand.u32 %v862, 4294901760
    %v1039 = vsub.f32 %v862, %v1038
    %v1040 = vand.u32 %v1039, 4294901760
    %v1041 = vsub.f32 %v1039, %v1040
    %v1042 = vand.u32 %v1041, 4294901760
    %1043 = vmatpush1.msra.mxu0 %v1042
    %1044 = vmatprep.subr.mxu0 0.0
    %v1045 = vand.u32 %v863, 4294901760
    %v1046 = vsub.f32 %v863, %v1045
    %v1047 = vand.u32 %v1046, 4294901760
    %v1048 = vsub.f32 %v1046, %v1047
    %v1049 = vand.u32 %v1048, 4294901760
    %1050 = vmatpush1.msra.mxu0 %v1049
    %1051 = vmatprep.subr.mxu0 0.0
    %1052 = vmatpush1.msra.mxu0 0.0
    %1053 = vmatprep.subr.mxu0 0.0
    %1054 = vmatpush1.msra.mxu0 0.0
    %1055 = vmatprep.subr.mxu0 0.0
    %1056 = vmatpush1.msra.mxu0 0.0
    %1057 = vmatprep.subr.mxu0 0.0
    %1058 = vmatpush1.msra.mxu0 0.0
    %1059 = vmatprep.subr.mxu0 0.0
    %1060 = vmatpush1.msra.mxu0 0.0
    %1061 = vmatprep.subr.mxu0 0.0
    %1062 = vmatpush1.msra.mxu0 0.0
    %1063 = vmatprep.subr.mxu0 0.0
    %1064 = vmatpush1.msra.mxu0 0.0
    %1065 = vmatprep.subr.mxu0 0.0
    %1066 = vmatpush1.msra.mxu0 0.0
    %1067 = vmatprep.subr.mxu0 0.0
    %1068 = vmatpush1.msra.mxu0 0.0
    %1069 = vmatprep.subr.mxu0 0.0
    %1070 = vmatpush1.msra.mxu0 0.0
    %1071 = vmatprep.subr.mxu0 0.0
    %1072 = vmatpush1.msra.mxu0 0.0
    %1073 = vmatprep.subr.mxu0 0.0
    %1074 = vmatpush1.msra.mxu0 0.0
    %1075 = vmatprep.subr.mxu0 0.0
    %1076 = vmatpush1.msra.mxu0 0.0
    %1077 = vmatprep.subr.mxu0 0.0
    %1078 = vmatpush1.msra.mxu0 0.0
    %1079 = vmatprep.subr.mxu0 0.0
    %1080 = vmatpush1.msra.mxu0 0.0
    %1081 = vmatprep.subr.mxu0 0.0
    %1082 = vmatpush1.msra.mxu0 0.0
    %1083 = vmatprep.subr.mxu0 0.0
    %1084 = vmatpush1.msra.mxu0 0.0
    %1085 = vmatprep.subr.mxu0 0.0
    %1086 = vmatpush1.msra.mxu0 0.0
    %1087 = vmatprep.mubr.f32.mxu0 0.0
    %v1088 = vand.u32 %v214, 4294901760
    %1089 = vmatmul.mubr.f32.gmra.mrb[0].mxu0 %v1088
    %v1090 = vpop.f32.mrb[0].mxu0
    %v1091 = vadd.f32 %v950, %v1090
    %v1092 = vpop.f32.mrb[0].mxu0
    %1093 = vdwg.mxu0
    %1094 = vmatprep.subr.mxu0 0.0
    %v1095 = vand.u32 %v850, 4294901760
    %v1096 = vsub.f32 %v850, %v1095
    %1097 = vmatpush1.msra.mxu0 %v1096
    %1098 = vmatprep.subr.mxu0 0.0
    %v1099 = vand.u32 %v851, 4294901760
    %v1100 = vsub.f32 %v851, %v1099
    %1101 = vmatpush1.msra.mxu0 %v1100
    %1102 = vmatprep.subr.mxu0 0.0
    %v1103 = vand.u32 %v852, 4294901760
    %v1104 = vsub.f32 %v852, %v1103
    %1105 = vmatpush1.msra.mxu0 %v1104
    %1106 = vmatprep.subr.mxu0 0.0
    %v1107 = vand.u32 %v853, 4294901760
    %v1108 = vsub.f32 %v853, %v1107
    %1109 = vmatpush1.msra.mxu0 %v1108
    %1110 = vmatprep.subr.mxu0 0.0
    %v1111 = vand.u32 %v854, 4294901760
    %v1112 = vsub.f32 %v854, %v1111
    %1113 = vmatpush1.msra.mxu0 %v1112
    %1114 = vmatprep.subr.mxu0 0.0
    %v1115 = vand.u32 %v855, 4294901760
    %v1116 = vsub.f32 %v855, %v1115
    %1117 = vmatpush1.msra.mxu0 %v1116
    %1118 = vmatprep.subr.mxu0 0.0
    %v1119 = vand.u32 %v856, 4294901760
    %v1120 = vsub.f32 %v856, %v1119
    %1121 = vmatpush1.msra.mxu0 %v1120
    %1122 = vmatprep.subr.mxu0 0.0
    %v1123 = vand.u32 %v857, 4294901760
    %v1124 = vsub.f32 %v857, %v1123
    %1125 = vmatpush1.msra.mxu0 %v1124
    %1126 = vmatprep.subr.mxu0 0.0
    %v1127 = vand.u32 %v858, 4294901760
    %v1128 = vsub.f32 %v858, %v1127
    %1129 = vmatpush1.msra.mxu0 %v1128
    %1130 = vmatprep.subr.mxu0 0.0
    %v1131 = vand.u32 %v859, 4294901760
    %v1132 = vsub.f32 %v859, %v1131
    %1133 = vmatpush1.msra.mxu0 %v1132
    %1134 = vmatprep.subr.mxu0 0.0
    %v1135 = vand.u32 %v860, 4294901760
    %v1136 = vsub.f32 %v860, %v1135
    %1137 = vmatpush1.msra.mxu0 %v1136
    %1138 = vmatprep.subr.mxu0 0.0
    %v1139 = vand.u32 %v861, 4294901760
    %v1140 = vsub.f32 %v861, %v1139
    %1141 = vmatpush1.msra.mxu0 %v1140
    %1142 = vmatprep.subr.mxu0 0.0
    %v1143 = vand.u32 %v862, 4294901760
    %v1144 = vsub.f32 %v862, %v1143
    %1145 = vmatpush1.msra.mxu0 %v1144
    %1146 = vmatprep.subr.mxu0 0.0
    %v1147 = vand.u32 %v863, 4294901760
    %v1148 = vsub.f32 %v863, %v1147
    %1149 = vmatpush1.msra.mxu0 %v1148
    %1150 = vmatprep.subr.mxu0 0.0
    %1151 = vmatpush1.msra.mxu0 0.0
    %1152 = vmatprep.subr.mxu0 0.0
    %1153 = vmatpush1.msra.mxu0 0.0
    %1154 = vmatprep.subr.mxu0 0.0
    %1155 = vmatpush1.msra.mxu0 0.0
    %1156 = vmatprep.subr.mxu0 0.0
    %1157 = vmatpush1.msra.mxu0 0.0
    %1158 = vmatprep.subr.mxu0 0.0
    %1159 = vmatpush1.msra.mxu0 0.0
    %1160 = vmatprep.subr.mxu0 0.0
    %1161 = vmatpush1.msra.mxu0 0.0
    %1162 = vmatprep.subr.mxu0 0.0
    %1163 = vmatpush1.msra.mxu0 0.0
    %1164 = vmatprep.subr.mxu0 0.0
    %1165 = vmatpush1.msra.mxu0 0.0
    %1166 = vmatprep.subr.mxu0 0.0
    %1167 = vmatpush1.msra.mxu0 0.0
    %1168 = vmatprep.subr.mxu0 0.0
    %1169 = vmatpush1.msra.mxu0 0.0
    %1170 = vmatprep.subr.mxu0 0.0
    %1171 = vmatpush1.msra.mxu0 0.0
    %1172 = vmatprep.subr.mxu0 0.0
    %1173 = vmatpush1.msra.mxu0 0.0
    %1174 = vmatprep.subr.mxu0 0.0
    %1175 = vmatpush1.msra.mxu0 0.0
    %1176 = vmatprep.subr.mxu0 0.0
    %1177 = vmatpush1.msra.mxu0 0.0
    %1178 = vmatprep.subr.mxu0 0.0
    %1179 = vmatpush1.msra.mxu0 0.0
    %1180 = vmatprep.subr.mxu0 0.0
    %1181 = vmatpush1.msra.mxu0 0.0
    %1182 = vmatprep.subr.mxu0 0.0
    %1183 = vmatpush1.msra.mxu0 0.0
    %1184 = vmatprep.subr.mxu0 0.0
    %1185 = vmatpush1.msra.mxu0 0.0
    %1186 = vmatprep.mubr.f32.mxu0 0.0
    %v1187 = vand.u32 %v214, 4294901760
    %v1188 = vsub.f32 %v214, %v1187
    %1189 = vmatmul.mubr.f32.gmra.mrb[0].mxu0 %v1188
    %v1190 = vpop.f32.mrb[0].mxu0
    %v1191 = vadd.f32 %v1091, %v1190
    %v1192 = vpop.f32.mrb[0].mxu0
    %1193 = vdwg.mxu0
    %1194 = vmatprep.subr.mxu0 0.0
    %v1195 = vand.u32 %v850, 4294901760
    %1196 = vmatpush1.msra.mxu0 %v1195
    %1197 = vmatprep.subr.mxu0 0.0
    %v1198 = vand.u32 %v851, 4294901760
    %1199 = vmatpush1.msra.mxu0 %v1198
    %1200 = vmatprep.subr.mxu0 0.0
    %v1201 = vand.u32 %v852, 4294901760
    %1202 = vmatpush1.msra.mxu0 %v1201
    %1203 = vmatprep.subr.mxu0 0.0
    %v1204 = vand.u32 %v853, 4294901760
    %1205 = vmatpush1.msra.mxu0 %v1204
    %1206 = vmatprep.subr.mxu0 0.0
    %v1207 = vand.u32 %v854, 4294901760
    %1208 = vmatpush1.msra.mxu0 %v1207
    %1209 = vmatprep.subr.mxu0 0.0
    %v1210 = vand.u32 %v855, 4294901760
    %1211 = vmatpush1.msra.mxu0 %v1210
    %1212 = vmatprep.subr.mxu0 0.0
    %v1213 = vand.u32 %v856, 4294901760
    %1214 = vmatpush1.msra.mxu0 %v1213
    %1215 = vmatprep.subr.mxu0 0.0
    %v1216 = vand.u32 %v857, 4294901760
    %1217 = vmatpush1.msra.mxu0 %v1216
    %1218 = vmatprep.subr.mxu0 0.0
    %v1219 = vand.u32 %v858, 4294901760
    %1220 = vmatpush1.msra.mxu0 %v1219
    %1221 = vmatprep.subr.mxu0 0.0
    %v1222 = vand.u32 %v859, 4294901760
    %1223 = vmatpush1.msra.mxu0 %v1222
    %1224 = vmatprep.subr.mxu0 0.0
    %v1225 = vand.u32 %v860, 4294901760
    %1226 = vmatpush1.msra.mxu0 %v1225
    %1227 = vmatprep.subr.mxu0 0.0
    %v1228 = vand.u32 %v861, 4294901760
    %1229 = vmatpush1.msra.mxu0 %v1228
    %1230 = vmatprep.subr.mxu0 0.0
    %v1231 = vand.u32 %v862, 4294901760
    %1232 = vmatpush1.msra.mxu0 %v1231
    %1233 = vmatprep.subr.mxu0 0.0
    %v1234 = vand.u32 %v863, 4294901760
    %1235 = vmatpush1.msra.mxu0 %v1234
    %1236 = vmatprep.subr.mxu0 0.0
    %1237 = vmatpush1.msra.mxu0 0.0
    %1238 = vmatprep.subr.mxu0 0.0
    %1239 = vmatpush1.msra.mxu0 0.0
    %1240 = vmatprep.subr.mxu0 0.0
    %1241 = vmatpush1.msra.mxu0 0.0
    %1242 = vmatprep.subr.mxu0 0.0
    %1243 = vmatpush1.msra.mxu0 0.0
    %1244 = vmatprep.subr.mxu0 0.0
    %1245 = vmatpush1.msra.mxu0 0.0
    %1246 = vmatprep.subr.mxu0 0.0
    %1247 = vmatpush1.msra.mxu0 0.0
    %1248 = vmatprep.subr.mxu0 0.0
    %1249 = vmatpush1.msra.mxu0 0.0
    %1250 = vmatprep.subr.mxu0 0.0
    %1251 = vmatpush1.msra.mxu0 0.0
    %1252 = vmatprep.subr.mxu0 0.0
    %1253 = vmatpush1.msra.mxu0 0.0
    %1254 = vmatprep.subr.mxu0 0.0
    %1255 = vmatpush1.msra.mxu0 0.0
    %1256 = vmatprep.subr.mxu0 0.0
    %1257 = vmatpush1.msra.mxu0 0.0
    %1258 = vmatprep.subr.mxu0 0.0
    %1259 = vmatpush1.msra.mxu0 0.0
    %1260 = vmatprep.subr.mxu0 0.0
    %1261 = vmatpush1.msra.mxu0 0.0
    %1262 = vmatprep.subr.mxu0 0.0
    %1263 = vmatpush1.msra.mxu0 0.0
    %1264 = vmatprep.subr.mxu0 0.0
    %1265 = vmatpush1.msra.mxu0 0.0
    %1266 = vmatprep.subr.mxu0 0.0
    %1267 = vmatpush1.msra.mxu0 0.0
    %1268 = vmatprep.subr.mxu0 0.0
    %1269 = vmatpush1.msra.mxu0 0.0
    %1270 = vmatprep.subr.mxu0 0.0
    %1271 = vmatpush1.msra.mxu0 0.0
    %1272 = vmatprep.mubr.f32.mxu0 0.0
    %v1273 = vand.u32 %v214, 4294901760
    %v1274 = vsub.f32 %v214, %v1273
    %v1275 = vand.u32 %v1274, 4294901760
    %1276 = vmatmul.mubr.f32.gmra.mrb[0].mxu0 %v1275
    %v1277 = vpop.f32.mrb[0].mxu0
    %v1278 = vadd.f32 %v1191, %v1277
    %v1279 = vpop.f32.mrb[0].mxu0
    %1280 = vdwg.mxu0
    %1281 = vmatprep.subr.mxu0 0.0
    %v1282 = vand.u32 %v850, 4294901760
    %v1283 = vsub.f32 %v850, %v1282
    %v1284 = vand.u32 %v1283, 4294901760
    %1285 = vmatpush1.msra.mxu0 %v1284
    %1286 = vmatprep.subr.mxu0 0.0
    %v1287 = vand.u32 %v851, 4294901760
    %v1288 = vsub.f32 %v851, %v1287
    %v1289 = vand.u32 %v1288, 4294901760
    %1290 = vmatpush1.msra.mxu0 %v1289
    %1291 = vmatprep.subr.mxu0 0.0
    %v1292 = vand.u32 %v852, 4294901760
    %v1293 = vsub.f32 %v852, %v1292
    %v1294 = vand.u32 %v1293, 4294901760
    %1295 = vmatpush1.msra.mxu0 %v1294
    %1296 = vmatprep.subr.mxu0 0.0
    %v1297 = vand.u32 %v853, 4294901760
    %v1298 = vsub.f32 %v853, %v1297
    %v1299 = vand.u32 %v1298, 4294901760
    %1300 = vmatpush1.msra.mxu0 %v1299
    %1301 = vmatprep.subr.mxu0 0.0
    %v1302 = vand.u32 %v854, 4294901760
    %v1303 = vsub.f32 %v854, %v1302
    %v1304 = vand.u32 %v1303, 4294901760
    %1305 = vmatpush1.msra.mxu0 %v1304
    %1306 = vmatprep.subr.mxu0 0.0
    %v1307 = vand.u32 %v855, 4294901760
    %v1308 = vsub.f32 %v855, %v1307
    %v1309 = vand.u32 %v1308, 4294901760
    %1310 = vmatpush1.msra.mxu0 %v1309
    %1311 = vmatprep.subr.mxu0 0.0
    %v1312 = vand.u32 %v856, 4294901760
    %v1313 = vsub.f32 %v856, %v1312
    %v1314 = vand.u32 %v1313, 4294901760
    %1315 = vmatpush1.msra.mxu0 %v1314
    %1316 = vmatprep.subr.mxu0 0.0
    %v1317 = vand.u32 %v857, 4294901760
    %v1318 = vsub.f32 %v857, %v1317
    %v1319 = vand.u32 %v1318, 4294901760
    %1320 = vmatpush1.msra.mxu0 %v1319
    %1321 = vmatprep.subr.mxu0 0.0
    %v1322 = vand.u32 %v858, 4294901760
    %v1323 = vsub.f32 %v858, %v1322
    %v1324 = vand.u32 %v1323, 4294901760
    %1325 = vmatpush1.msra.mxu0 %v1324
    %1326 = vmatprep.subr.mxu0 0.0
    %v1327 = vand.u32 %v859, 4294901760
    %v1328 = vsub.f32 %v859, %v1327
    %v1329 = vand.u32 %v1328, 4294901760
    %1330 = vmatpush1.msra.mxu0 %v1329
    %1331 = vmatprep.subr.mxu0 0.0
    %v1332 = vand.u32 %v860, 4294901760
    %v1333 = vsub.f32 %v860, %v1332
    %v1334 = vand.u32 %v1333, 4294901760
    %1335 = vmatpush1.msra.mxu0 %v1334
    %1336 = vmatprep.subr.mxu0 0.0
    %v1337 = vand.u32 %v861, 4294901760
    %v1338 = vsub.f32 %v861, %v1337
    %v1339 = vand.u32 %v1338, 4294901760
    %1340 = vmatpush1.msra.mxu0 %v1339
    %1341 = vmatprep.subr.mxu0 0.0
    %v1342 = vand.u32 %v862, 4294901760
    %v1343 = vsub.f32 %v862, %v1342
    %v1344 = vand.u32 %v1343, 4294901760
    %1345 = vmatpush1.msra.mxu0 %v1344
    %1346 = vmatprep.subr.mxu0 0.0
    %v1347 = vand.u32 %v863, 4294901760
    %v1348 = vsub.f32 %v863, %v1347
    %v1349 = vand.u32 %v1348, 4294901760
    %1350 = vmatpush1.msra.mxu0 %v1349
    %1351 = vmatprep.subr.mxu0 0.0
    %1352 = vmatpush1.msra.mxu0 0.0
    %1353 = vmatprep.subr.mxu0 0.0
    %1354 = vmatpush1.msra.mxu0 0.0
    %1355 = vmatprep.subr.mxu0 0.0
    %1356 = vmatpush1.msra.mxu0 0.0
    %1357 = vmatprep.subr.mxu0 0.0
    %1358 = vmatpush1.msra.mxu0 0.0
    %1359 = vmatprep.subr.mxu0 0.0
    %1360 = vmatpush1.msra.mxu0 0.0
    %1361 = vmatprep.subr.mxu0 0.0
    %1362 = vmatpush1.msra.mxu0 0.0
    %1363 = vmatprep.subr.mxu0 0.0
    %1364 = vmatpush1.msra.mxu0 0.0
    %1365 = vmatprep.subr.mxu0 0.0
    %1366 = vmatpush1.msra.mxu0 0.0
    %1367 = vmatprep.subr.mxu0 0.0
    %1368 = vmatpush1.msra.mxu0 0.0
    %1369 = vmatprep.subr.mxu0 0.0
    %1370 = vmatpush1.msra.mxu0 0.0
    %1371 = vmatprep.subr.mxu0 0.0
    %1372 = vmatpush1.msra.mxu0 0.0
    %1373 = vmatprep.subr.mxu0 0.0
    %1374 = vmatpush1.msra.mxu0 0.0
    %1375 = vmatprep.subr.mxu0 0.0
    %1376 = vmatpush1.msra.mxu0 0.0
    %1377 = vmatprep.subr.mxu0 0.0
    %1378 = vmatpush1.msra.mxu0 0.0
    %1379 = vmatprep.subr.mxu0 0.0
    %1380 = vmatpush1.msra.mxu0 0.0
    %1381 = vmatprep.subr.mxu0 0.0
    %1382 = vmatpush1.msra.mxu0 0.0
    %1383 = vmatprep.subr.mxu0 0.0
    %1384 = vmatpush1.msra.mxu0 0.0
    %1385 = vmatprep.subr.mxu0 0.0
    %1386 = vmatpush1.msra.mxu0 0.0
    %1387 = vmatprep.mubr.f32.mxu0 0.0
    %v1388 = vand.u32 %v214, 4294901760
    %1389 = vmatmul.mubr.f32.gmra.mrb[0].mxu0 %v1388
    %v1390 = vpop.f32.mrb[0].mxu0
    %v1391 = vadd.f32 %v1278, %v1390
    %v1392 = vpop.f32.mrb[0].mxu0
    %1393 = vdwg.mxu0
    %1394 = vmatprep.subr.mxu0 0.0
    %v1395 = vand.u32 %v850, 4294901760
    %1396 = vmatpush1.msra.mxu0 %v1395
    %1397 = vmatprep.subr.mxu0 0.0
    %v1398 = vand.u32 %v851, 4294901760
    %1399 = vmatpush1.msra.mxu0 %v1398
    %1400 = vmatprep.subr.mxu0 0.0
    %v1401 = vand.u32 %v852, 4294901760
    %1402 = vmatpush1.msra.mxu0 %v1401
    %1403 = vmatprep.subr.mxu0 0.0
    %v1404 = vand.u32 %v853, 4294901760
    %1405 = vmatpush1.msra.mxu0 %v1404
    %1406 = vmatprep.subr.mxu0 0.0
    %v1407 = vand.u32 %v854, 4294901760
    %1408 = vmatpush1.msra.mxu0 %v1407
    %1409 = vmatprep.subr.mxu0 0.0
    %v1410 = vand.u32 %v855, 4294901760
    %1411 = vmatpush1.msra.mxu0 %v1410
    %1412 = vmatprep.subr.mxu0 0.0
    %v1413 = vand.u32 %v856, 4294901760
    %1414 = vmatpush1.msra.mxu0 %v1413
    %1415 = vmatprep.subr.mxu0 0.0
    %v1416 = vand.u32 %v857, 4294901760
    %1417 = vmatpush1.msra.mxu0 %v1416
    %1418 = vmatprep.subr.mxu0 0.0
    %v1419 = vand.u32 %v858, 4294901760
    %1420 = vmatpush1.msra.mxu0 %v1419
    %1421 = vmatprep.subr.mxu0 0.0
    %v1422 = vand.u32 %v859, 4294901760
    %1423 = vmatpush1.msra.mxu0 %v1422
    %1424 = vmatprep.subr.mxu0 0.0
    %v1425 = vand.u32 %v860, 4294901760
    %1426 = vmatpush1.msra.mxu0 %v1425
    %1427 = vmatprep.subr.mxu0 0.0
    %v1428 = vand.u32 %v861, 4294901760
    %1429 = vmatpush1.msra.mxu0 %v1428
    %1430 = vmatprep.subr.mxu0 0.0
    %v1431 = vand.u32 %v862, 4294901760
    %1432 = vmatpush1.msra.mxu0 %v1431
    %1433 = vmatprep.subr.mxu0 0.0
    %v1434 = vand.u32 %v863, 4294901760
    %1435 = vmatpush1.msra.mxu0 %v1434
    %1436 = vmatprep.subr.mxu0 0.0
    %1437 = vmatpush1.msra.mxu0 0.0
    %1438 = vmatprep.subr.mxu0 0.0
    %1439 = vmatpush1.msra.mxu0 0.0
    %1440 = vmatprep.subr.mxu0 0.0
    %1441 = vmatpush1.msra.mxu0 0.0
    %1442 = vmatprep.subr.mxu0 0.0
    %1443 = vmatpush1.msra.mxu0 0.0
    %1444 = vmatprep.subr.mxu0 0.0
    %1445 = vmatpush1.msra.mxu0 0.0
    %1446 = vmatprep.subr.mxu0 0.0
    %1447 = vmatpush1.msra.mxu0 0.0
    %1448 = vmatprep.subr.mxu0 0.0
    %1449 = vmatpush1.msra.mxu0 0.0
    %1450 = vmatprep.subr.mxu0 0.0
    %1451 = vmatpush1.msra.mxu0 0.0
    %1452 = vmatprep.subr.mxu0 0.0
    %1453 = vmatpush1.msra.mxu0 0.0
    %1454 = vmatprep.subr.mxu0 0.0
    %1455 = vmatpush1.msra.mxu0 0.0
    %1456 = vmatprep.subr.mxu0 0.0
    %1457 = vmatpush1.msra.mxu0 0.0
    %1458 = vmatprep.subr.mxu0 0.0
    %1459 = vmatpush1.msra.mxu0 0.0
    %1460 = vmatprep.subr.mxu0 0.0
    %1461 = vmatpush1.msra.mxu0 0.0
    %1462 = vmatprep.subr.mxu0 0.0
    %1463 = vmatpush1.msra.mxu0 0.0
    %1464 = vmatprep.subr.mxu0 0.0
    %1465 = vmatpush1.msra.mxu0 0.0
    %1466 = vmatprep.subr.mxu0 0.0
    %1467 = vmatpush1.msra.mxu0 0.0
    %1468 = vmatprep.subr.mxu0 0.0
    %1469 = vmatpush1.msra.mxu0 0.0
    %1470 = vmatprep.subr.mxu0 0.0
    %1471 = vmatpush1.msra.mxu0 0.0
    %1472 = vmatprep.mubr.f32.mxu0 0.0
    %v1473 = vand.u32 %v214, 4294901760
    %1474 = vmatmul.mubr.f32.gmra.mrb[0].mxu0 %v1473
    %v1475 = vpop.f32.mrb[0].mxu0
    %v1476 = vadd.f32 %v1391, %v1475
    %v1477 = vpop.f32.mrb[0].mxu0
    %1478 = vdwg.mxu0
    %v1479 = vmul.f32 %v1476, 0.008928572
    %v1480 = vadd.f32 %v1479, 1e-05
    %v1481 = vrsqrt.pop %v1480
    %v1482 = vmul.f32 %v12, %v1481
    %v1483 = vlaneseq
    %v1484 = vshrl.u32 %v1483, 7
    %v1485 = vsub.s32 0, %v1484
    %v1486 = vrot.slane %v1482, %v1485
    %v1487 = vmul.f32 %v836, %v1486
    %v1488 = vmul.f32 %v837, %v1486
    %v1489 = vmul.f32 %v838, %v1486
    %v1490 = vmul.f32 %v839, %v1486
    %v1491 = vmul.f32 %v840, %v1486
    %v1492 = vmul.f32 %v841, %v1486
    %v1493 = vmul.f32 %v842, %v1486
    %v1494 = vmul.f32 %v843, %v1486
    %v1495 = vmul.f32 %v844, %v1486
    %v1496 = vmul.f32 %v845, %v1486
    %v1497 = vmul.f32 %v846, %v1486
    %v1498 = vmul.f32 %v847, %v1486
    %v1499 = vmul.f32 %v848, %v1486
    %v1500 = vmul.f32 %v849, %v1486
    %v1501 = vlaneseq
    %v1502 = vshrl.u32 %v1501, 7
    %v1503 = vsub.s32 0, %v1502
    %v1504 = vrot.slane %v13, %v1503
    %v1505 = vadd.f32 %v1487, %v1504
    %v1506 = vadd.f32 %v1488, %v1504
    %v1507 = vadd.f32 %v1489, %v1504
    %v1508 = vadd.f32 %v1490, %v1504
    %v1509 = vadd.f32 %v1491, %v1504
    %v1510 = vadd.f32 %v1492, %v1504
    %v1511 = vadd.f32 %v1493, %v1504
    %v1512 = vadd.f32 %v1494, %v1504
    %v1513 = vadd.f32 %v1495, %v1504
    %v1514 = vadd.f32 %v1496, %v1504
    %v1515 = vadd.f32 %v1497, %v1504
    %v1516 = vadd.f32 %v1498, %v1504
    %v1517 = vadd.f32 %v1499, %v1504
    %v1518 = vadd.f32 %v1500, %v1504
    %v1519 = vmul.f32 %v1505, 0.01
    %v1520 = vmul.f32 %v1506, 0.01
    %v1521 = vmul.f32 %v1507, 0.01
    %v1522 = vmul.f32 %v1508, 0.01
    %v1523 = vmul.f32 %v1509, 0.01
    %v1524 = vmul.f32 %v1510, 0.01
    %v1525 = vmul.f32 %v1511, 0.01
    %v1526 = vmul.f32 %v1512, 0.01
    %v1527 = vmul.f32 %v1513, 0.01
    %v1528 = vmul.f32 %v1514, 0.01
    %v1529 = vmul.f32 %v1515, 0.01
    %v1530 = vmul.f32 %v1516, 0.01
    %v1531 = vmul.f32 %v1517, 0.01
    %v1532 = vmul.f32 %v1518, 0.01
    %v1533 = vmax.f32 %v1505, %v1519
    %v1534 = vmax.f32 %v1506, %v1520
    %v1535 = vmax.f32 %v1507, %v1521
    %v1536 = vmax.f32 %v1508, %v1522
    %v1537 = vmax.f32 %v1509, %v1523
    %v1538 = vmax.f32 %v1510, %v1524
    %v1539 = vmax.f32 %v1511, %v1525
    %v1540 = vmax.f32 %v1512, %v1526
    %v1541 = vmax.f32 %v1513, %v1527
    %v1542 = vmax.f32 %v1514, %v1528
    %v1543 = vmax.f32 %v1515, %v1529
    %v1544 = vmax.f32 %v1516, %v1530
    %v1545 = vmax.f32 %v1517, %v1531
    %v1546 = vmax.f32 %v1518, %v1532
    %1547 = vst [vmem:[#allocation2] sm:$0xff] %v1533
    %1548 = vst [vmem:[#allocation2 + $0x8] sm:$0xff] %v1534
    %1549 = vst [vmem:[#allocation2 + $0x10] sm:$0xff] %v1535
    %1550 = vst [vmem:[#allocation2 + $0x18] sm:$0xff] %v1536
    %1551 = vst [vmem:[#allocation2 + $0x20] sm:$0xff] %v1537
    %1552 = vst [vmem:[#allocation2 + $0x28] sm:$0xff] %v1538
    %1553 = vst [vmem:[#allocation2 + $0x30] sm:$0xff] %v1539
    %1554 = vst [vmem:[#allocation2 + $0x38] sm:$0xff] %v1540
    %1555 = vst [vmem:[#allocation2 + $0x40] sm:$0xff] %v1541
    %1556 = vst [vmem:[#allocation2 + $0x48] sm:$0xff] %v1542
    %1557 = vst [vmem:[#allocation2 + $0x50] sm:$0xff] %v1543
    %1558 = vst [vmem:[#allocation2 + $0x58] sm:$0xff] %v1544
    %1559 = vst [vmem:[#allocation2 + $0x60] sm:$0xff] %v1545
    %1560 = vst [vmem:[#allocation2 + $0x68] sm:$0xff] %v1546
    %v1561 = vld [vmem:[#allocation2] sm:$0xff]
    %v1562 = vld [vmem:[#allocation2 + $0x8] sm:$0xff]
    %v1563 = vld [vmem:[#allocation2 + $0x10] sm:$0xff]
    %v1564 = vld [vmem:[#allocation2 + $0x18] sm:$0xff]
    %v1565 = vld [vmem:[#allocation2 + $0x20] sm:$0xff]
    %v1566 = vld [vmem:[%s1 + $0x10] sm:$0xff]
    %v1567 = vld [vmem:[%s1 + $0x18] sm:$0xff]
    %v1568 = vld [vmem:[%s1 + $0x20] sm:$0xff]
    %v1569 = vld [vmem:[#allocation2 + $0x38] sm:$0xff]
    %v1570 = vld [vmem:[#allocation2 + $0x40] sm:$0xff]
    %v1571 = vld [vmem:[#allocation2 + $0x48] sm:$0xff]
    %v1572 = vld [vmem:[#allocation2 + $0x50] sm:$0xff]
    %v1573 = vld [vmem:[#allocation2 + $0x58] sm:$0xff]
    %v1574 = vld [vmem:[%s1 + $0x28] sm:$0xff]
    %v1575 = vld [vmem:[%s1 + $0x30] sm:$0xff]
    %v1576 = vld [vmem:[%s1 + $0x38] sm:$0xff]
    %vm1577 = vcmask 195584
    %v1579 = vsel %vm1577, %v1569, 0
    %v1582 = vsel %vm1577, %v1570, 0
    %v1585 = vsel %vm1577, %v1571, 0
    %v1588 = vsel %vm1577, %v1572, 0
    %v1591 = vsel %vm1577, %v1573, 0
    %1593 = vmatprep.subr.mxu0 0.0
    %1594 = vmatpush1.msra.mxu0 %v1574
    %1595 = vmatprep.subr.mxu0 0.0
    %1596 = vmatpush1.msra.mxu0 %v1575
    %1597 = vmatprep.subr.mxu0 0.0
    %1598 = vmatpush1.msra.mxu0 %v1576
    %1599 = vmatprep.subr.mxu0 0.0
    %1600 = vmatpush1.msra.mxu0 0.0
    %1601 = vmatprep.subr.mxu0 0.0
    %1602 = vmatpush1.msra.mxu0 0.0
    %1603 = vmatprep.subr.mxu0 0.0
    %1604 = vmatpush1.msra.mxu0 0.0
    %1605 = vmatprep.subr.mxu0 0.0
    %1606 = vmatpush1.msra.mxu0 0.0
    %1607 = vmatprep.subr.mxu0 0.0
    %1608 = vmatpush1.msra.mxu0 0.0
    %1609 = vmatprep.subr.mxu0 0.0
    %1610 = vmatpush1.msra.mxu0 0.0
    %1611 = vmatprep.subr.mxu0 0.0
    %1612 = vmatpush1.msra.mxu0 0.0
    %1613 = vmatprep.subr.mxu0 0.0
    %1614 = vmatpush1.msra.mxu0 0.0
    %1615 = vmatprep.subr.mxu0 0.0
    %1616 = vmatpush1.msra.mxu0 0.0
    %1617 = vmatprep.subr.mxu0 0.0
    %1618 = vmatpush1.msra.mxu0 0.0
    %1619 = vmatprep.subr.mxu0 0.0
    %1620 = vmatpush1.msra.mxu0 0.0
    %1621 = vmatprep.subr.mxu0 0.0
    %1622 = vmatpush1.msra.mxu0 0.0
    %1623 = vmatprep.subr.mxu0 0.0
    %1624 = vmatpush1.msra.mxu0 0.0
    %1625 = vmatprep.subr.mxu0 0.0
    %1626 = vmatpush1.msra.mxu0 0.0
    %1627 = vmatprep.subr.mxu0 0.0
    %1628 = vmatpush1.msra.mxu0 0.0
    %1629 = vmatprep.subr.mxu0 0.0
    %1630 = vmatpush1.msra.mxu0 0.0
    %1631 = vmatprep.subr.mxu0 0.0
    %1632 = vmatpush1.msra.mxu0 0.0
    %1633 = vmatprep.subr.mxu0 0.0
    %1634 = vmatpush1.msra.mxu0 0.0
    %1635 = vmatprep.subr.mxu0 0.0
    %1636 = vmatpush1.msra.mxu0 0.0
    %1637 = vmatprep.subr.mxu0 0.0
    %1638 = vmatpush1.msra.mxu0 0.0
    %1639 = vmatprep.subr.mxu0 0.0
    %1640 = vmatpush1.msra.mxu0 0.0
    %1641 = vmatprep.subr.mxu0 0.0
    %1642 = vmatpush1.msra.mxu0 0.0
    %1643 = vmatprep.subr.mxu0 0.0
    %1644 = vmatpush1.msra.mxu0 0.0
    %1645 = vmatprep.subr.mxu0 0.0
    %1646 = vmatpush1.msra.mxu0 0.0
    %1647 = vmatprep.subr.mxu0 0.0
    %1648 = vmatpush1.msra.mxu0 0.0
    %1649 = vmatprep.subr.mxu0 0.0
    %1650 = vmatpush1.msra.mxu0 0.0
    %1651 = vmatprep.subr.mxu0 0.0
    %1652 = vmatpush1.msra.mxu0 0.0
    %1653 = vmatprep.subr.mxu0 0.0
    %1654 = vmatpush1.msra.mxu0 0.0
    %1655 = vmatprep.subr.mxu0 0.0
    %1656 = vmatpush1.msra.mxu0 0.0
    %1657 = vmatprep.mubr.f32.mxu0 0.0
    %1658 = vmatmul.mubr.f32.gmra.mrb[0].mxu0 %v1579
    %v1659 = vpop.f32.mrb[0].mxu0
    %v1660 = vadd.f32 0.0, %v1659
    %v1661 = vpop.f32.mrb[0].mxu0
    %1662 = vmatprep.mubr.f32.mxu0 0.0
    %1663 = vmatmul.mubr.f32.gmra.mrb[0].mxu0 %v1582
    %v1664 = vpop.f32.mrb[0].mxu0
    %v1665 = vadd.f32 0.0, %v1664
    %v1666 = vpop.f32.mrb[0].mxu0
    %1667 = vmatprep.mubr.f32.mxu0 0.0
    %1668 = vmatmul.mubr.f32.gmra.mrb[0].mxu0 %v1585
    %v1669 = vpop.f32.mrb[0].mxu0
    %v1670 = vadd.f32 0.0, %v1669
    %v1671 = vpop.f32.mrb[0].mxu0
    %1672 = vmatprep.mubr.f32.mxu0 0.0
    %1673 = vmatmul.mubr.f32.gmra.mrb[0].mxu0 %v1588
    %v1674 = vpop.f32.mrb[0].mxu0
    %v1675 = vadd.f32 0.0, %v1674
    %v1676 = vpop.f32.mrb[0].mxu0
    %1677 = vmatprep.mubr.f32.mxu0 0.0
    %1678 = vmatmul.mubr.f32.gmra.mrb[0].mxu0 %v1591
    %v1679 = vpop.f32.mrb[0].mxu0
    %v1680 = vadd.f32 0.0, %v1679
    %v1681 = vpop.f32.mrb[0].mxu0
    %1682 = vdwg.mxu0
    %v1684 = vsel %vm1577, %v1561, 0
    %v1687 = vsel %vm1577, %v1562, 0
    %v1690 = vsel %vm1577, %v1563, 0
    %v1693 = vsel %vm1577, %v1564, 0
    %v1696 = vsel %vm1577, %v1565, 0
    %1698 = vmatprep.subr.mxu0 0.0
    %1699 = vmatpush1.msra.mxu0 %v1566
    %1700 = vmatprep.subr.mxu0 0.0
    %1701 = vmatpush1.msra.mxu0 %v1567
    %1702 = vmatprep.subr.mxu0 0.0
    %1703 = vmatpush1.msra.mxu0 %v1568
    %1704 = vmatprep.subr.mxu0 0.0
    %1705 = vmatpush1.msra.mxu0 0.0
    %1706 = vmatprep.subr.mxu0 0.0
    %1707 = vmatpush1.msra.mxu0 0.0
    %1708 = vmatprep.subr.mxu0 0.0
    %1709 = vmatpush1.msra.mxu0 0.0
    %1710 = vmatprep.subr.mxu0 0.0
    %1711 = vmatpush1.msra.mxu0 0.0
    %1712 = vmatprep.subr.mxu0 0.0
    %1713 = vmatpush1.msra.mxu0 0.0
    %1714 = vmatprep.subr.mxu0 0.0
    %1715 = vmatpush1.msra.mxu0 0.0
    %1716 = vmatprep.subr.mxu0 0.0
    %1717 = vmatpush1.msra.mxu0 0.0
    %1718 = vmatprep.subr.mxu0 0.0
    %1719 = vmatpush1.msra.mxu0 0.0
    %1720 = vmatprep.subr.mxu0 0.0
    %1721 = vmatpush1.msra.mxu0 0.0
    %1722 = vmatprep.subr.mxu0 0.0
    %1723 = vmatpush1.msra.mxu0 0.0
    %1724 = vmatprep.subr.mxu0 0.0
    %1725 = vmatpush1.msra.mxu0 0.0
    %1726 = vmatprep.subr.mxu0 0.0
    %1727 = vmatpush1.msra.mxu0 0.0
    %1728 = vmatprep.subr.mxu0 0.0
    %1729 = vmatpush1.msra.mxu0 0.0
    %1730 = vmatprep.subr.mxu0 0.0
    %1731 = vmatpush1.msra.mxu0 0.0
    %1732 = vmatprep.subr.mxu0 0.0
    %1733 = vmatpush1.msra.mxu0 0.0
    %1734 = vmatprep.subr.mxu0 0.0
    %1735 = vmatpush1.msra.mxu0 0.0
    %1736 = vmatprep.subr.mxu0 0.0
    %1737 = vmatpush1.msra.mxu0 0.0
    %1738 = vmatprep.subr.mxu0 0.0
    %1739 = vmatpush1.msra.mxu0 0.0
    %1740 = vmatprep.subr.mxu0 0.0
    %1741 = vmatpush1.msra.mxu0 0.0
    %1742 = vmatprep.subr.mxu0 0.0
    %1743 = vmatpush1.msra.mxu0 0.0
    %1744 = vmatprep.subr.mxu0 0.0
    %1745 = vmatpush1.msra.mxu0 0.0
    %1746 = vmatprep.subr.mxu0 0.0
    %1747 = vmatpush1.msra.mxu0 0.0
    %1748 = vmatprep.subr.mxu0 0.0
    %1749 = vmatpush1.msra.mxu0 0.0
    %1750 = vmatprep.subr.mxu0 0.0
    %1751 = vmatpush1.msra.mxu0 0.0
    %1752 = vmatprep.subr.mxu0 0.0
    %1753 = vmatpush1.msra.mxu0 0.0
    %1754 = vmatprep.subr.mxu0 0.0
    %1755 = vmatpush1.msra.mxu0 0.0
    %1756 = vmatprep.subr.mxu0 0.0
    %1757 = vmatpush1.msra.mxu0 0.0
    %1758 = vmatprep.subr.mxu0 0.0
    %1759 = vmatpush1.msra.mxu0 0.0
    %1760 = vmatprep.subr.mxu0 0.0
    %1761 = vmatpush1.msra.mxu0 0.0
    %1762 = vmatprep.mubr.f32.mxu0 0.0
    %1763 = vmatmul.mubr.f32.gmra.mrb[0].mxu0 %v1684
    %v1764 = vpop.f32.mrb[0].mxu0
    %v1765 = vadd.f32 %v1660, %v1764
    %v1766 = vpop.f32.mrb[0].mxu0
    %1767 = vmatprep.mubr.f32.mxu0 0.0
    %1768 = vmatmul.mubr.f32.gmra.mrb[0].mxu0 %v1687
    %v1769 = vpop.f32.mrb[0].mxu0
    %v1770 = vadd.f32 %v1665, %v1769
    %v1771 = vpop.f32.mrb[0].mxu0
    %1772 = vmatprep.mubr.f32.mxu0 0.0
    %1773 = vmatmul.mubr.f32.gmra.mrb[0].mxu0 %v1690
    %v1774 = vpop.f32.mrb[0].mxu0
    %v1775 = vadd.f32 %v1670, %v1774
    %v1776 = vpop.f32.mrb[0].mxu0
    %1777 = vmatprep.mubr.f32.mxu0 0.0
    %1778 = vmatmul.mubr.f32.gmra.mrb[0].mxu0 %v1693
    %v1779 = vpop.f32.mrb[0].mxu0
    %v1780 = vadd.f32 %v1675, %v1779
    %v1781 = vpop.f32.mrb[0].mxu0
    %1782 = vmatprep.mubr.f32.mxu0 0.0
    %1783 = vmatmul.mubr.f32.gmra.mrb[0].mxu0 %v1696
    %v1784 = vpop.f32.mrb[0].mxu0
    %v1785 = vadd.f32 %v1680, %v1784
    %v1786 = vpop.f32.mrb[0].mxu0
    %1787 = vdwg.mxu0
    %v1788 = vld [vmem:[#allocation2 + $0x4] sm:$0xff]
    %v1789 = vld [vmem:[#allocation2 + $0xc] sm:$0xff]
    %v1790 = vld [vmem:[#allocation2 + $0x14] sm:$0xff]
    %v1791 = vld [vmem:[#allocation2 + $0x1c] sm:$0xff]
    %v1792 = vld [vmem:[#allocation2 + $0x24] sm:$0xff]
    %v1793 = vld [vmem:[%s1 + $0x40] sm:$0xff]
    %v1794 = vld [vmem:[%s1 + $0x48] sm:$0xff]
    %v1795 = vld [vmem:[%s1 + $0x50] sm:$0xff]
    %v1797 = vsel %vm1577, %v1788, 0
    %v1800 = vsel %vm1577, %v1789, 0
    %v1803 = vsel %vm1577, %v1790, 0
    %v1806 = vsel %vm1577, %v1791, 0
    %v1809 = vsel %vm1577, %v1792, 0
    %1811 = vmatprep.subr.mxu0 0.0
    %1812 = vmatpush1.msra.mxu0 %v1793
    %1813 = vmatprep.subr.mxu0 0.0
    %1814 = vmatpush1.msra.mxu0 %v1794
    %1815 = vmatprep.subr.mxu0 0.0
    %1816 = vmatpush1.msra.mxu0 %v1795
    %1817 = vmatprep.subr.mxu0 0.0
    %1818 = vmatpush1.msra.mxu0 0.0
    %1819 = vmatprep.subr.mxu0 0.0
    %1820 = vmatpush1.msra.mxu0 0.0
    %1821 = vmatprep.subr.mxu0 0.0
    %1822 = vmatpush1.msra.mxu0 0.0
    %1823 = vmatprep.subr.mxu0 0.0
    %1824 = vmatpush1.msra.mxu0 0.0
    %1825 = vmatprep.subr.mxu0 0.0
    %1826 = vmatpush1.msra.mxu0 0.0
    %1827 = vmatprep.subr.mxu0 0.0
    %1828 = vmatpush1.msra.mxu0 0.0
    %1829 = vmatprep.subr.mxu0 0.0
    %1830 = vmatpush1.msra.mxu0 0.0
    %1831 = vmatprep.subr.mxu0 0.0
    %1832 = vmatpush1.msra.mxu0 0.0
    %1833 = vmatprep.subr.mxu0 0.0
    %1834 = vmatpush1.msra.mxu0 0.0
    %1835 = vmatprep.subr.mxu0 0.0
    %1836 = vmatpush1.msra.mxu0 0.0
    %1837 = vmatprep.subr.mxu0 0.0
    %1838 = vmatpush1.msra.mxu0 0.0
    %1839 = vmatprep.subr.mxu0 0.0
    %1840 = vmatpush1.msra.mxu0 0.0
    %1841 = vmatprep.subr.mxu0 0.0
    %1842 = vmatpush1.msra.mxu0 0.0
    %1843 = vmatprep.subr.mxu0 0.0
    %1844 = vmatpush1.msra.mxu0 0.0
    %1845 = vmatprep.subr.mxu0 0.0
    %1846 = vmatpush1.msra.mxu0 0.0
    %1847 = vmatprep.subr.mxu0 0.0
    %1848 = vmatpush1.msra.mxu0 0.0
    %1849 = vmatprep.subr.mxu0 0.0
    %1850 = vmatpush1.msra.mxu0 0.0
    %1851 = vmatprep.subr.mxu0 0.0
    %1852 = vmatpush1.msra.mxu0 0.0
    %1853 = vmatprep.subr.mxu0 0.0
    %1854 = vmatpush1.msra.mxu0 0.0
    %1855 = vmatprep.subr.mxu0 0.0
    %1856 = vmatpush1.msra.mxu0 0.0
    %1857 = vmatprep.subr.mxu0 0.0
    %1858 = vmatpush1.msra.mxu0 0.0
    %1859 = vmatprep.subr.mxu0 0.0
    %1860 = vmatpush1.msra.mxu0 0.0
    %1861 = vmatprep.subr.mxu0 0.0
    %1862 = vmatpush1.msra.mxu0 0.0
    %1863 = vmatprep.subr.mxu0 0.0
    %1864 = vmatpush1.msra.mxu0 0.0
    %1865 = vmatprep.subr.mxu0 0.0
    %1866 = vmatpush1.msra.mxu0 0.0
    %1867 = vmatprep.subr.mxu0 0.0
    %1868 = vmatpush1.msra.mxu0 0.0
    %1869 = vmatprep.subr.mxu0 0.0
    %1870 = vmatpush1.msra.mxu0 0.0
    %1871 = vmatprep.subr.mxu0 0.0
    %1872 = vmatpush1.msra.mxu0 0.0
    %1873 = vmatprep.subr.mxu0 0.0
    %1874 = vmatpush1.msra.mxu0 0.0
    %1875 = vmatprep.mubr.f32.mxu0 0.0
    %1876 = vmatmul.mubr.f32.gmra.mrb[0].mxu0 %v1797
    %v1877 = vpop.f32.mrb[0].mxu0
    %v1878 = vadd.f32 0.0, %v1877
    %v1879 = vpop.f32.mrb[0].mxu0
    %1880 = vmatprep.mubr.f32.mxu0 0.0
    %1881 = vmatmul.mubr.f32.gmra.mrb[0].mxu0 %v1800
    %v1882 = vpop.f32.mrb[0].mxu0
    %v1883 = vadd.f32 0.0, %v1882
    %v1884 = vpop.f32.mrb[0].mxu0
    %1885 = vmatprep.mubr.f32.mxu0 0.0
    %1886 = vmatmul.mubr.f32.gmra.mrb[0].mxu0 %v1803
    %v1887 = vpop.f32.mrb[0].mxu0
    %v1888 = vadd.f32 0.0, %v1887
    %v1889 = vpop.f32.mrb[0].mxu0
    %1890 = vmatprep.mubr.f32.mxu0 0.0
    %1891 = vmatmul.mubr.f32.gmra.mrb[0].mxu0 %v1806
    %v1892 = vpop.f32.mrb[0].mxu0
    %v1893 = vadd.f32 0.0, %v1892
    %v1894 = vpop.f32.mrb[0].mxu0
    %1895 = vmatprep.mubr.f32.mxu0 0.0
    %1896 = vmatmul.mubr.f32.gmra.mrb[0].mxu0 %v1809
    %v1897 = vpop.f32.mrb[0].mxu0
    %v1898 = vadd.f32 0.0, %v1897
    %v1899 = vpop.f32.mrb[0].mxu0
    %1900 = vdwg.mxu0
    %v1901 = vadd.f32 %v1765, %v1878
    %v1902 = vadd.f32 %v1770, %v1883
    %v1903 = vadd.f32 %v1775, %v1888
    %v1904 = vadd.f32 %v1780, %v1893
    %v1905 = vadd.f32 %v1785, %v1898
    %v1906 = vld [vmem:[#allocation2 + $0x3c] sm:$0xff]
    %v1907 = vld [vmem:[#allocation2 + $0x44] sm:$0xff]
    %v1908 = vld [vmem:[#allocation2 + $0x4c] sm:$0xff]
    %v1909 = vld [vmem:[#allocation2 + $0x54] sm:$0xff]
    %v1910 = vld [vmem:[#allocation2 + $0x5c] sm:$0xff]
    %v1911 = vld [vmem:[%s1 + $0x58] sm:$0xff]
    %v1912 = vld [vmem:[%s1 + $0x60] sm:$0xff]
    %v1913 = vld [vmem:[%s1 + $0x68] sm:$0xff]
    %v1915 = vsel %vm1577, %v1906, 0
    %v1918 = vsel %vm1577, %v1907, 0
    %v1921 = vsel %vm1577, %v1908, 0
    %v1924 = vsel %vm1577, %v1909, 0
    %v1927 = vsel %vm1577, %v1910, 0
    %1929 = vmatprep.subr.mxu0 0.0
    %1930 = vmatpush1.msra.mxu0 %v1911
    %1931 = vmatprep.subr.mxu0 0.0
    %1932 = vmatpush1.msra.mxu0 %v1912
    %1933 = vmatprep.subr.mxu0 0.0
    %1934 = vmatpush1.msra.mxu0 %v1913
    %1935 = vmatprep.subr.mxu0 0.0
    %1936 = vmatpush1.msra.mxu0 0.0
    %1937 = vmatprep.subr.mxu0 0.0
    %1938 = vmatpush1.msra.mxu0 0.0
    %1939 = vmatprep.subr.mxu0 0.0
    %1940 = vmatpush1.msra.mxu0 0.0
    %1941 = vmatprep.subr.mxu0 0.0
    %1942 = vmatpush1.msra.mxu0 0.0
    %1943 = vmatprep.subr.mxu0 0.0
    %1944 = vmatpush1.msra.mxu0 0.0
    %1945 = vmatprep.subr.mxu0 0.0
    %1946 = vmatpush1.msra.mxu0 0.0
    %1947 = vmatprep.subr.mxu0 0.0
    %1948 = vmatpush1.msra.mxu0 0.0
    %1949 = vmatprep.subr.mxu0 0.0
    %1950 = vmatpush1.msra.mxu0 0.0
    %1951 = vmatprep.subr.mxu0 0.0
    %1952 = vmatpush1.msra.mxu0 0.0
    %1953 = vmatprep.subr.mxu0 0.0
    %1954 = vmatpush1.msra.mxu0 0.0
    %1955 = vmatprep.subr.mxu0 0.0
    %1956 = vmatpush1.msra.mxu0 0.0
    %1957 = vmatprep.subr.mxu0 0.0
    %1958 = vmatpush1.msra.mxu0 0.0
    %1959 = vmatprep.subr.mxu0 0.0
    %1960 = vmatpush1.msra.mxu0 0.0
    %1961 = vmatprep.subr.mxu0 0.0
    %1962 = vmatpush1.msra.mxu0 0.0
    %1963 = vmatprep.subr.mxu0 0.0
    %1964 = vmatpush1.msra.mxu0 0.0
    %1965 = vmatprep.subr.mxu0 0.0
    %1966 = vmatpush1.msra.mxu0 0.0
    %1967 = vmatprep.subr.mxu0 0.0
    %1968 = vmatpush1.msra.mxu0 0.0
    %1969 = vmatprep.subr.mxu0 0.0
    %1970 = vmatpush1.msra.mxu0 0.0
    %1971 = vmatprep.subr.mxu0 0.0
    %1972 = vmatpush1.msra.mxu0 0.0
    %1973 = vmatprep.subr.mxu0 0.0
    %1974 = vmatpush1.msra.mxu0 0.0
    %1975 = vmatprep.subr.mxu0 0.0
    %1976 = vmatpush1.msra.mxu0 0.0
    %1977 = vmatprep.subr.mxu0 0.0
    %1978 = vmatpush1.msra.mxu0 0.0
    %1979 = vmatprep.subr.mxu0 0.0
    %1980 = vmatpush1.msra.mxu0 0.0
    %1981 = vmatprep.subr.mxu0 0.0
    %1982 = vmatpush1.msra.mxu0 0.0
    %1983 = vmatprep.subr.mxu0 0.0
    %1984 = vmatpush1.msra.mxu0 0.0
    %1985 = vmatprep.subr.mxu0 0.0
    %1986 = vmatpush1.msra.mxu0 0.0
    %1987 = vmatprep.subr.mxu0 0.0
    %1988 = vmatpush1.msra.mxu0 0.0
    %1989 = vmatprep.subr.mxu0 0.0
    %1990 = vmatpush1.msra.mxu0 0.0
    %1991 = vmatprep.subr.mxu0 0.0
    %1992 = vmatpush1.msra.mxu0 0.0
    %1993 = vmatprep.mubr.f32.mxu0 0.0
    %1994 = vmatmul.mubr.f32.gmra.mrb[0].mxu0 %v1915
    %v1995 = vpop.f32.mrb[0].mxu0
    %v1996 = vadd.f32 0.0, %v1995
    %v1997 = vpop.f32.mrb[0].mxu0
    %1998 = vmatprep.mubr.f32.mxu0 0.0
    %1999 = vmatmul.mubr.f32.gmra.mrb[0].mxu0 %v1918
    %v2000 = vpop.f32.mrb[0].mxu0
    %v2001 = vadd.f32 0.0, %v2000
    %v2002 = vpop.f32.mrb[0].mxu0
    %2003 = vmatprep.mubr.f32.mxu0 0.0
    %2004 = vmatmul.mubr.f32.gmra.mrb[0].mxu0 %v1921
    %v2005 = vpop.f32.mrb[0].mxu0
    %v2006 = vadd.f32 0.0, %v2005
    %v2007 = vpop.f32.mrb[0].mxu0
    %2008 = vmatprep.mubr.f32.mxu0 0.0
    %2009 = vmatmul.mubr.f32.gmra.mrb[0].mxu0 %v1924
    %v2010 = vpop.f32.mrb[0].mxu0
    %v2011 = vadd.f32 0.0, %v2010
    %v2012 = vpop.f32.mrb[0].mxu0
    %2013 = vmatprep.mubr.f32.mxu0 0.0
    %2014 = vmatmul.mubr.f32.gmra.mrb[0].mxu0 %v1927
    %v2015 = vpop.f32.mrb[0].mxu0
    %v2016 = vadd.f32 0.0, %v2015
    %v2017 = vpop.f32.mrb[0].mxu0
    %2018 = vdwg.mxu0
    %v2019 = vadd.f32 %v1901, %v1996
    %v2020 = vadd.f32 %v1902, %v2001
    %v2021 = vadd.f32 %v1903, %v2006
    %v2022 = vadd.f32 %v1904, %v2011
    %v2023 = vadd.f32 %v1905, %v2016
    %v2024 = vld [vmem:[#allocation2 + $0x8] sm:$0xff]
    %v2025 = vld [vmem:[#allocation2 + $0x10] sm:$0xff]
    %v2026 = vld [vmem:[#allocation2 + $0x18] sm:$0xff]
    %v2027 = vld [vmem:[#allocation2 + $0x20] sm:$0xff]
    %v2028 = vld [vmem:[#allocation2 + $0x28] sm:$0xff]
    %v2029 = vld [vmem:[%s1 + $0x70] sm:$0xff]
    %v2030 = vld [vmem:[%s1 + $0x78] sm:$0xff]
    %v2031 = vld [vmem:[%s1 + $0x80] sm:$0xff]
    %v2033 = vsel %vm1577, %v2024, 0
    %v2036 = vsel %vm1577, %v2025, 0
    %v2039 = vsel %vm1577, %v2026, 0
    %v2042 = vsel %vm1577, %v2027, 0
    %v2045 = vsel %vm1577, %v2028, 0
    %2047 = vmatprep.subr.mxu0 0.0
    %2048 = vmatpush1.msra.mxu0 %v2029
    %2049 = vmatprep.subr.mxu0 0.0
    %2050 = vmatpush1.msra.mxu0 %v2030
    %2051 = vmatprep.subr.mxu0 0.0
    %2052 = vmatpush1.msra.mxu0 %v2031
    %2053 = vmatprep.subr.mxu0 0.0
    %2054 = vmatpush1.msra.mxu0 0.0
    %2055 = vmatprep.subr.mxu0 0.0
    %2056 = vmatpush1.msra.mxu0 0.0
    %2057 = vmatprep.subr.mxu0 0.0
    %2058 = vmatpush1.msra.mxu0 0.0
    %2059 = vmatprep.subr.mxu0 0.0
    %2060 = vmatpush1.msra.mxu0 0.0
    %2061 = vmatprep.subr.mxu0 0.0
    %2062 = vmatpush1.msra.mxu0 0.0
    %2063 = vmatprep.subr.mxu0 0.0
    %2064 = vmatpush1.msra.mxu0 0.0
    %2065 = vmatprep.subr.mxu0 0.0
    %2066 = vmatpush1.msra.mxu0 0.0
    %2067 = vmatprep.subr.mxu0 0.0
    %2068 = vmatpush1.msra.mxu0 0.0
    %2069 = vmatprep.subr.mxu0 0.0
    %2070 = vmatpush1.msra.mxu0 0.0
    %2071 = vmatprep.subr.mxu0 0.0
    %2072 = vmatpush1.msra.mxu0 0.0
    %2073 = vmatprep.subr.mxu0 0.0
    %2074 = vmatpush1.msra.mxu0 0.0
    %2075 = vmatprep.subr.mxu0 0.0
    %2076 = vmatpush1.msra.mxu0 0.0
    %2077 = vmatprep.subr.mxu0 0.0
    %2078 = vmatpush1.msra.mxu0 0.0
    %2079 = vmatprep.subr.mxu0 0.0
    %2080 = vmatpush1.msra.mxu0 0.0
    %2081 = vmatprep.subr.mxu0 0.0
    %2082 = vmatpush1.msra.mxu0 0.0
    %2083 = vmatprep.subr.mxu0 0.0
    %2084 = vmatpush1.msra.mxu0 0.0
    %2085 = vmatprep.subr.mxu0 0.0
    %2086 = vmatpush1.msra.mxu0 0.0
    %2087 = vmatprep.subr.mxu0 0.0
    %2088 = vmatpush1.msra.mxu0 0.0
    %2089 = vmatprep.subr.mxu0 0.0
    %2090 = vmatpush1.msra.mxu0 0.0
    %2091 = vmatprep.subr.mxu0 0.0
    %2092 = vmatpush1.msra.mxu0 0.0
    %2093 = vmatprep.subr.mxu0 0.0
    %2094 = vmatpush1.msra.mxu0 0.0
    %2095 = vmatprep.subr.mxu0 0.0
    %2096 = vmatpush1.msra.mxu0 0.0
    %2097 = vmatprep.subr.mxu0 0.0
    %2098 = vmatpush1.msra.mxu0 0.0
    %2099 = vmatprep.subr.mxu0 0.0
    %2100 = vmatpush1.msra.mxu0 0.0
    %2101 = vmatprep.subr.mxu0 0.0
    %2102 = vmatpush1.msra.mxu0 0.0
    %2103 = vmatprep.subr.mxu0 0.0
    %2104 = vmatpush1.msra.mxu0 0.0
    %2105 = vmatprep.subr.mxu0 0.0
    %2106 = vmatpush1.msra.mxu0 0.0
    %2107 = vmatprep.subr.mxu0 0.0
    %2108 = vmatpush1.msra.mxu0 0.0
    %2109 = vmatprep.subr.mxu0 0.0
    %2110 = vmatpush1.msra.mxu0 0.0
    %2111 = vmatprep.mubr.f32.mxu0 0.0
    %2112 = vmatmul.mubr.f32.gmra.mrb[0].mxu0 %v2033
    %v2113 = vpop.f32.mrb[0].mxu0
    %v2114 = vadd.f32 0.0, %v2113
    %v2115 = vpop.f32.mrb[0].mxu0
    %2116 = vmatprep.mubr.f32.mxu0 0.0
    %2117 = vmatmul.mubr.f32.gmra.mrb[0].mxu0 %v2036
    %v2118 = vpop.f32.mrb[0].mxu0
    %v2119 = vadd.f32 0.0, %v2118
    %v2120 = vpop.f32.mrb[0].mxu0
    %2121 = vmatprep.mubr.f32.mxu0 0.0
    %2122 = vmatmul.mubr.f32.gmra.mrb[0].mxu0 %v2039
    %v2123 = vpop.f32.mrb[0].mxu0
    %v2124 = vadd.f32 0.0, %v2123
    %v2125 = vpop.f32.mrb[0].mxu0
    %2126 = vmatprep.mubr.f32.mxu0 0.0
    %2127 = vmatmul.mubr.f32.gmra.mrb[0].mxu0 %v2042
    %v2128 = vpop.f32.mrb[0].mxu0
    %v2129 = vadd.f32 0.0, %v2128
    %v2130 = vpop.f32.mrb[0].mxu0
    %2131 = vmatprep.mubr.f32.mxu0 0.0
    %2132 = vmatmul.mubr.f32.gmra.mrb[0].mxu0 %v2045
    %v2133 = vpop.f32.mrb[0].mxu0
    %v2134 = vadd.f32 0.0, %v2133
    %v2135 = vpop.f32.mrb[0].mxu0
    %2136 = vdwg.mxu0
    %v2137 = vadd.f32 %v2019, %v2114
    %v2138 = vadd.f32 %v2020, %v2119
    %v2139 = vadd.f32 %v2021, %v2124
    %v2140 = vadd.f32 %v2022, %v2129
    %v2141 = vadd.f32 %v2023, %v2134
    %v2142 = vld [vmem:[#allocation2 + $0x40] sm:$0xff]
    %v2143 = vld [vmem:[#allocation2 + $0x48] sm:$0xff]
    %v2144 = vld [vmem:[#allocation2 + $0x50] sm:$0xff]
    %v2145 = vld [vmem:[#allocation2 + $0x58] sm:$0xff]
    %v2146 = vld [vmem:[#allocation2 + $0x60] sm:$0xff]
    %v2147 = vld [vmem:[%s1 + $0x88] sm:$0xff]
    %v2148 = vld [vmem:[%s1 + $0x90] sm:$0xff]
    %v2149 = vld [vmem:[%s1 + $0x98] sm:$0xff]
    %v2151 = vsel %vm1577, %v2142, 0
    %v2154 = vsel %vm1577, %v2143, 0
    %v2157 = vsel %vm1577, %v2144, 0
    %v2160 = vsel %vm1577, %v2145, 0
    %v2163 = vsel %vm1577, %v2146, 0
    %2165 = vmatprep.subr.mxu0 0.0
    %2166 = vmatpush1.msra.mxu0 %v2147
    %2167 = vmatprep.subr.mxu0 0.0
    %2168 = vmatpush1.msra.mxu0 %v2148
    %2169 = vmatprep.subr.mxu0 0.0
    %2170 = vmatpush1.msra.mxu0 %v2149
    %2171 = vmatprep.subr.mxu0 0.0
    %2172 = vmatpush1.msra.mxu0 0.0
    %2173 = vmatprep.subr.mxu0 0.0
    %2174 = vmatpush1.msra.mxu0 0.0
    %2175 = vmatprep.subr.mxu0 0.0
    %2176 = vmatpush1.msra.mxu0 0.0
    %2177 = vmatprep.subr.mxu0 0.0
    %2178 = vmatpush1.msra.mxu0 0.0
    %2179 = vmatprep.subr.mxu0 0.0
    %2180 = vmatpush1.msra.mxu0 0.0
    %2181 = vmatprep.subr.mxu0 0.0
    %2182 = vmatpush1.msra.mxu0 0.0
    %2183 = vmatprep.subr.mxu0 0.0
    %2184 = vmatpush1.msra.mxu0 0.0
    %2185 = vmatprep.subr.mxu0 0.0
    %2186 = vmatpush1.msra.mxu0 0.0
    %2187 = vmatprep.subr.mxu0 0.0
    %2188 = vmatpush1.msra.mxu0 0.0
    %2189 = vmatprep.subr.mxu0 0.0
    %2190 = vmatpush1.msra.mxu0 0.0
    %2191 = vmatprep.subr.mxu0 0.0
    %2192 = vmatpush1.msra.mxu0 0.0
    %2193 = vmatprep.subr.mxu0 0.0
    %2194 = vmatpush1.msra.mxu0 0.0
    %2195 = vmatprep.subr.mxu0 0.0
    %2196 = vmatpush1.msra.mxu0 0.0
    %2197 = vmatprep.subr.mxu0 0.0
    %2198 = vmatpush1.msra.mxu0 0.0
    %2199 = vmatprep.subr.mxu0 0.0
    %2200 = vmatpush1.msra.mxu0 0.0
    %2201 = vmatprep.subr.mxu0 0.0
    %2202 = vmatpush1.msra.mxu0 0.0
    %2203 = vmatprep.subr.mxu0 0.0
    %2204 = vmatpush1.msra.mxu0 0.0
    %2205 = vmatprep.subr.mxu0 0.0
    %2206 = vmatpush1.msra.mxu0 0.0
    %2207 = vmatprep.subr.mxu0 0.0
    %2208 = vmatpush1.msra.mxu0 0.0
    %2209 = vmatprep.subr.mxu0 0.0
    %2210 = vmatpush1.msra.mxu0 0.0
    %2211 = vmatprep.subr.mxu0 0.0
    %2212 = vmatpush1.msra.mxu0 0.0
    %2213 = vmatprep.subr.mxu0 0.0
    %2214 = vmatpush1.msra.mxu0 0.0
    %2215 = vmatprep.subr.mxu0 0.0
    %2216 = vmatpush1.msra.mxu0 0.0
    %2217 = vmatprep.subr.mxu0 0.0
    %2218 = vmatpush1.msra.mxu0 0.0
    %2219 = vmatprep.subr.mxu0 0.0
    %2220 = vmatpush1.msra.mxu0 0.0
    %2221 = vmatprep.subr.mxu0 0.0
    %2222 = vmatpush1.msra.mxu0 0.0
    %2223 = vmatprep.subr.mxu0 0.0
    %2224 = vmatpush1.msra.mxu0 0.0
    %2225 = vmatprep.subr.mxu0 0.0
    %2226 = vmatpush1.msra.mxu0 0.0
    %2227 = vmatprep.subr.mxu0 0.0
    %2228 = vmatpush1.msra.mxu0 0.0
    %2229 = vmatprep.mubr.f32.mxu0 0.0
    %2230 = vmatmul.mubr.f32.gmra.mrb[0].mxu0 %v2151
    %v2231 = vpop.f32.mrb[0].mxu0
    %v2232 = vadd.f32 0.0, %v2231
    %v2233 = vpop.f32.mrb[0].mxu0
    %2234 = vmatprep.mubr.f32.mxu0 0.0
    %2235 = vmatmul.mubr.f32.gmra.mrb[0].mxu0 %v2154
    %v2236 = vpop.f32.mrb[0].mxu0
    %v2237 = vadd.f32 0.0, %v2236
    %v2238 = vpop.f32.mrb[0].mxu0
    %2239 = vmatprep.mubr.f32.mxu0 0.0
    %2240 = vmatmul.mubr.f32.gmra.mrb[0].mxu0 %v2157
    %v2241 = vpop.f32.mrb[0].mxu0
    %v2242 = vadd.f32 0.0, %v2241
    %v2243 = vpop.f32.mrb[0].mxu0
    %2244 = vmatprep.mubr.f32.mxu0 0.0
    %2245 = vmatmul.mubr.f32.gmra.mrb[0].mxu0 %v2160
    %v2246 = vpop.f32.mrb[0].mxu0
    %v2247 = vadd.f32 0.0, %v2246
    %v2248 = vpop.f32.mrb[0].mxu0
    %2249 = vmatprep.mubr.f32.mxu0 0.0
    %2250 = vmatmul.mubr.f32.gmra.mrb[0].mxu0 %v2163
    %v2251 = vpop.f32.mrb[0].mxu0
    %v2252 = vadd.f32 0.0, %v2251
    %v2253 = vpop.f32.mrb[0].mxu0
    %2254 = vdwg.mxu0
    %v2255 = vadd.f32 %v2137, %v2232
    %v2256 = vadd.f32 %v2138, %v2237
    %v2257 = vadd.f32 %v2139, %v2242
    %v2258 = vadd.f32 %v2140, %v2247
    %v2259 = vadd.f32 %v2141, %v2252
    %v2260 = vld [vmem:[#allocation2 + $0xc] sm:$0xff]
    %v2261 = vld [vmem:[#allocation2 + $0x14] sm:$0xff]
    %v2262 = vld [vmem:[#allocation2 + $0x1c] sm:$0xff]
    %v2263 = vld [vmem:[#allocation2 + $0x24] sm:$0xff]
    %v2264 = vld [vmem:[#allocation2 + $0x2c] sm:$0xff]
    %v2265 = vld [vmem:[%s1 + $0xa0] sm:$0xff]
    %v2266 = vld [vmem:[%s1 + $0xa8] sm:$0xff]
    %v2267 = vld [vmem:[%s1 + $0xb0] sm:$0xff]
    %v2269 = vsel %vm1577, %v2260, 0
    %v2272 = vsel %vm1577, %v2261, 0
    %v2275 = vsel %vm1577, %v2262, 0
    %v2278 = vsel %vm1577, %v2263, 0
    %v2281 = vsel %vm1577, %v2264, 0
    %2283 = vmatprep.subr.mxu0 0.0
    %2284 = vmatpush1.msra.mxu0 %v2265
    %2285 = vmatprep.subr.mxu0 0.0
    %2286 = vmatpush1.msra.mxu0 %v2266
    %2287 = vmatprep.subr.mxu0 0.0
    %2288 = vmatpush1.msra.mxu0 %v2267
    %2289 = vmatprep.subr.mxu0 0.0
    %2290 = vmatpush1.msra.mxu0 0.0
    %2291 = vmatprep.subr.mxu0 0.0
    %2292 = vmatpush1.msra.mxu0 0.0
    %2293 = vmatprep.subr.mxu0 0.0
    %2294 = vmatpush1.msra.mxu0 0.0
    %2295 = vmatprep.subr.mxu0 0.0
    %2296 = vmatpush1.msra.mxu0 0.0
    %2297 = vmatprep.subr.mxu0 0.0
    %2298 = vmatpush1.msra.mxu0 0.0
    %2299 = vmatprep.subr.mxu0 0.0
    %2300 = vmatpush1.msra.mxu0 0.0
    %2301 = vmatprep.subr.mxu0 0.0
    %2302 = vmatpush1.msra.mxu0 0.0
    %2303 = vmatprep.subr.mxu0 0.0
    %2304 = vmatpush1.msra.mxu0 0.0
    %2305 = vmatprep.subr.mxu0 0.0
    %2306 = vmatpush1.msra.mxu0 0.0
    %2307 = vmatprep.subr.mxu0 0.0
    %2308 = vmatpush1.msra.mxu0 0.0
    %2309 = vmatprep.subr.mxu0 0.0
    %2310 = vmatpush1.msra.mxu0 0.0
    %2311 = vmatprep.subr.mxu0 0.0
    %2312 = vmatpush1.msra.mxu0 0.0
    %2313 = vmatprep.subr.mxu0 0.0
    %2314 = vmatpush1.msra.mxu0 0.0
    %2315 = vmatprep.subr.mxu0 0.0
    %2316 = vmatpush1.msra.mxu0 0.0
    %2317 = vmatprep.subr.mxu0 0.0
    %2318 = vmatpush1.msra.mxu0 0.0
    %2319 = vmatprep.subr.mxu0 0.0
    %2320 = vmatpush1.msra.mxu0 0.0
    %2321 = vmatprep.subr.mxu0 0.0
    %2322 = vmatpush1.msra.mxu0 0.0
    %2323 = vmatprep.subr.mxu0 0.0
    %2324 = vmatpush1.msra.mxu0 0.0
    %2325 = vmatprep.subr.mxu0 0.0
    %2326 = vmatpush1.msra.mxu0 0.0
    %2327 = vmatprep.subr.mxu0 0.0
    %2328 = vmatpush1.msra.mxu0 0.0
    %2329 = vmatprep.subr.mxu0 0.0
    %2330 = vmatpush1.msra.mxu0 0.0
    %2331 = vmatprep.subr.mxu0 0.0
    %2332 = vmatpush1.msra.mxu0 0.0
    %2333 = vmatprep.subr.mxu0 0.0
    %2334 = vmatpush1.msra.mxu0 0.0
    %2335 = vmatprep.subr.mxu0 0.0
    %2336 = vmatpush1.msra.mxu0 0.0
    %2337 = vmatprep.subr.mxu0 0.0
    %2338 = vmatpush1.msra.mxu0 0.0
    %2339 = vmatprep.subr.mxu0 0.0
    %2340 = vmatpush1.msra.mxu0 0.0
    %2341 = vmatprep.subr.mxu0 0.0
    %2342 = vmatpush1.msra.mxu0 0.0
    %2343 = vmatprep.subr.mxu0 0.0
    %2344 = vmatpush1.msra.mxu0 0.0
    %2345 = vmatprep.subr.mxu0 0.0
    %2346 = vmatpush1.msra.mxu0 0.0
    %2347 = vmatprep.mubr.f32.mxu0 0.0
    %2348 = vmatmul.mubr.f32.gmra.mrb[0].mxu0 %v2269
    %v2349 = vpop.f32.mrb[0].mxu0
    %v2350 = vadd.f32 0.0, %v2349
    %v2351 = vpop.f32.mrb[0].mxu0
    %2352 = vmatprep.mubr.f32.mxu0 0.0
    %2353 = vmatmul.mubr.f32.gmra.mrb[0].mxu0 %v2272
    %v2354 = vpop.f32.mrb[0].mxu0
    %v2355 = vadd.f32 0.0, %v2354
    %v2356 = vpop.f32.mrb[0].mxu0
    %2357 = vmatprep.mubr.f32.mxu0 0.0
    %2358 = vmatmul.mubr.f32.gmra.mrb[0].mxu0 %v2275
    %v2359 = vpop.f32.mrb[0].mxu0
    %v2360 = vadd.f32 0.0, %v2359
    %v2361 = vpop.f32.mrb[0].mxu0
    %2362 = vmatprep.mubr.f32.mxu0 0.0
    %2363 = vmatmul.mubr.f32.gmra.mrb[0].mxu0 %v2278
    %v2364 = vpop.f32.mrb[0].mxu0
    %v2365 = vadd.f32 0.0, %v2364
    %v2366 = vpop.f32.mrb[0].mxu0
    %2367 = vmatprep.mubr.f32.mxu0 0.0
    %2368 = vmatmul.mubr.f32.gmra.mrb[0].mxu0 %v2281
    %v2369 = vpop.f32.mrb[0].mxu0
    %v2370 = vadd.f32 0.0, %v2369
    %v2371 = vpop.f32.mrb[0].mxu0
    %2372 = vdwg.mxu0
    %v2373 = vadd.f32 %v2255, %v2350
    %v2374 = vadd.f32 %v2256, %v2355
    %v2375 = vadd.f32 %v2257, %v2360
    %v2376 = vadd.f32 %v2258, %v2365
    %v2377 = vadd.f32 %v2259, %v2370
    %v2378 = vld [vmem:[#allocation2 + $0x44] sm:$0xff]
    %v2379 = vld [vmem:[#allocation2 + $0x4c] sm:$0xff]
    %v2380 = vld [vmem:[#allocation2 + $0x54] sm:$0xff]
    %v2381 = vld [vmem:[#allocation2 + $0x5c] sm:$0xff]
    %v2382 = vld [vmem:[#allocation2 + $0x64] sm:$0xff]
    %v2383 = vld [vmem:[%s1 + $0xb8] sm:$0xff]
    %v2384 = vld [vmem:[%s1 + $0xc0] sm:$0xff]
    %v2385 = vld [vmem:[%s1 + $0xc8] sm:$0xff]
    %v2387 = vsel %vm1577, %v2378, 0
    %v2390 = vsel %vm1577, %v2379, 0
    %v2393 = vsel %vm1577, %v2380, 0
    %v2396 = vsel %vm1577, %v2381, 0
    %v2399 = vsel %vm1577, %v2382, 0
    %2401 = vmatprep.subr.mxu0 0.0
    %2402 = vmatpush1.msra.mxu0 %v2383
    %2403 = vmatprep.subr.mxu0 0.0
    %2404 = vmatpush1.msra.mxu0 %v2384
    %2405 = vmatprep.subr.mxu0 0.0
    %2406 = vmatpush1.msra.mxu0 %v2385
    %2407 = vmatprep.subr.mxu0 0.0
    %2408 = vmatpush1.msra.mxu0 0.0
    %2409 = vmatprep.subr.mxu0 0.0
    %2410 = vmatpush1.msra.mxu0 0.0
    %2411 = vmatprep.subr.mxu0 0.0
    %2412 = vmatpush1.msra.mxu0 0.0
    %2413 = vmatprep.subr.mxu0 0.0
    %2414 = vmatpush1.msra.mxu0 0.0
    %2415 = vmatprep.subr.mxu0 0.0
    %2416 = vmatpush1.msra.mxu0 0.0
    %2417 = vmatprep.subr.mxu0 0.0
    %2418 = vmatpush1.msra.mxu0 0.0
    %2419 = vmatprep.subr.mxu0 0.0
    %2420 = vmatpush1.msra.mxu0 0.0
    %2421 = vmatprep.subr.mxu0 0.0
    %2422 = vmatpush1.msra.mxu0 0.0
    %2423 = vmatprep.subr.mxu0 0.0
    %2424 = vmatpush1.msra.mxu0 0.0
    %2425 = vmatprep.subr.mxu0 0.0
    %2426 = vmatpush1.msra.mxu0 0.0
    %2427 = vmatprep.subr.mxu0 0.0
    %2428 = vmatpush1.msra.mxu0 0.0
    %2429 = vmatprep.subr.mxu0 0.0
    %2430 = vmatpush1.msra.mxu0 0.0
    %2431 = vmatprep.subr.mxu0 0.0
    %2432 = vmatpush1.msra.mxu0 0.0
    %2433 = vmatprep.subr.mxu0 0.0
    %2434 = vmatpush1.msra.mxu0 0.0
    %2435 = vmatprep.subr.mxu0 0.0
    %2436 = vmatpush1.msra.mxu0 0.0
    %2437 = vmatprep.subr.mxu0 0.0
    %2438 = vmatpush1.msra.mxu0 0.0
    %2439 = vmatprep.subr.mxu0 0.0
    %2440 = vmatpush1.msra.mxu0 0.0
    %2441 = vmatprep.subr.mxu0 0.0
    %2442 = vmatpush1.msra.mxu0 0.0
    %2443 = vmatprep.subr.mxu0 0.0
    %2444 = vmatpush1.msra.mxu0 0.0
    %2445 = vmatprep.subr.mxu0 0.0
    %2446 = vmatpush1.msra.mxu0 0.0
    %2447 = vmatprep.subr.mxu0 0.0
    %2448 = vmatpush1.msra.mxu0 0.0
    %2449 = vmatprep.subr.mxu0 0.0
    %2450 = vmatpush1.msra.mxu0 0.0
    %2451 = vmatprep.subr.mxu0 0.0
    %2452 = vmatpush1.msra.mxu0 0.0
    %2453 = vmatprep.subr.mxu0 0.0
    %2454 = vmatpush1.msra.mxu0 0.0
    %2455 = vmatprep.subr.mxu0 0.0
    %2456 = vmatpush1.msra.mxu0 0.0
    %2457 = vmatprep.subr.mxu0 0.0
    %2458 = vmatpush1.msra.mxu0 0.0
    %2459 = vmatprep.subr.mxu0 0.0
    %2460 = vmatpush1.msra.mxu0 0.0
    %2461 = vmatprep.subr.mxu0 0.0
    %2462 = vmatpush1.msra.mxu0 0.0
    %2463 = vmatprep.subr.mxu0 0.0
    %2464 = vmatpush1.msra.mxu0 0.0
    %2465 = vmatprep.mubr.f32.mxu0 0.0
    %2466 = vmatmul.mubr.f32.gmra.mrb[0].mxu0 %v2387
    %v2467 = vpop.f32.mrb[0].mxu0
    %v2468 = vadd.f32 0.0, %v2467
    %v2469 = vpop.f32.mrb[0].mxu0
    %2470 = vmatprep.mubr.f32.mxu0 0.0
    %2471 = vmatmul.mubr.f32.gmra.mrb[0].mxu0 %v2390
    %v2472 = vpop.f32.mrb[0].mxu0
    %v2473 = vadd.f32 0.0, %v2472
    %v2474 = vpop.f32.mrb[0].mxu0
    %2475 = vmatprep.mubr.f32.mxu0 0.0
    %2476 = vmatmul.mubr.f32.gmra.mrb[0].mxu0 %v2393
    %v2477 = vpop.f32.mrb[0].mxu0
    %v2478 = vadd.f32 0.0, %v2477
    %v2479 = vpop.f32.mrb[0].mxu0
    %2480 = vmatprep.mubr.f32.mxu0 0.0
    %2481 = vmatmul.mubr.f32.gmra.mrb[0].mxu0 %v2396
    %v2482 = vpop.f32.mrb[0].mxu0
    %v2483 = vadd.f32 0.0, %v2482
    %v2484 = vpop.f32.mrb[0].mxu0
    %2485 = vmatprep.mubr.f32.mxu0 0.0
    %2486 = vmatmul.mubr.f32.gmra.mrb[0].mxu0 %v2399
    %v2487 = vpop.f32.mrb[0].mxu0
    %v2488 = vadd.f32 0.0, %v2487
    %v2489 = vpop.f32.mrb[0].mxu0
    %2490 = vdwg.mxu0
    %v2491 = vadd.f32 %v2373, %v2468
    %v2492 = vadd.f32 %v2374, %v2473
    %v2493 = vadd.f32 %v2375, %v2478
    %v2494 = vadd.f32 %v2376, %v2483
    %v2495 = vadd.f32 %v2377, %v2488
    %v2496 = vld [vmem:[#allocation2 + $0x10] sm:$0xff]
    %v2497 = vld [vmem:[#allocation2 + $0x18] sm:$0xff]
    %v2498 = vld [vmem:[#allocation2 + $0x20] sm:$0xff]
    %v2499 = vld [vmem:[#allocation2 + $0x28] sm:$0xff]
    %v2500 = vld [vmem:[#allocation2 + $0x30] sm:$0xff]
    %v2501 = vld [vmem:[%s1 + $0xd0] sm:$0xff]
    %v2502 = vld [vmem:[%s1 + $0xd8] sm:$0xff]
    %v2503 = vld [vmem:[%s1 + $0xe0] sm:$0xff]
    %v2505 = vsel %vm1577, %v2496, 0
    %v2508 = vsel %vm1577, %v2497, 0
    %v2511 = vsel %vm1577, %v2498, 0
    %v2514 = vsel %vm1577, %v2499, 0
    %v2517 = vsel %vm1577, %v2500, 0
    %2519 = vmatprep.subr.mxu0 0.0
    %2520 = vmatpush1.msra.mxu0 %v2501
    %2521 = vmatprep.subr.mxu0 0.0
    %2522 = vmatpush1.msra.mxu0 %v2502
    %2523 = vmatprep.subr.mxu0 0.0
    %2524 = vmatpush1.msra.mxu0 %v2503
    %2525 = vmatprep.subr.mxu0 0.0
    %2526 = vmatpush1.msra.mxu0 0.0
    %2527 = vmatprep.subr.mxu0 0.0
    %2528 = vmatpush1.msra.mxu0 0.0
    %2529 = vmatprep.subr.mxu0 0.0
    %2530 = vmatpush1.msra.mxu0 0.0
    %2531 = vmatprep.subr.mxu0 0.0
    %2532 = vmatpush1.msra.mxu0 0.0
    %2533 = vmatprep.subr.mxu0 0.0
    %2534 = vmatpush1.msra.mxu0 0.0
    %2535 = vmatprep.subr.mxu0 0.0
    %2536 = vmatpush1.msra.mxu0 0.0
    %2537 = vmatprep.subr.mxu0 0.0
    %2538 = vmatpush1.msra.mxu0 0.0
    %2539 = vmatprep.subr.mxu0 0.0
    %2540 = vmatpush1.msra.mxu0 0.0
    %2541 = vmatprep.subr.mxu0 0.0
    %2542 = vmatpush1.msra.mxu0 0.0
    %2543 = vmatprep.subr.mxu0 0.0
    %2544 = vmatpush1.msra.mxu0 0.0
    %2545 = vmatprep.subr.mxu0 0.0
    %2546 = vmatpush1.msra.mxu0 0.0
    %2547 = vmatprep.subr.mxu0 0.0
    %2548 = vmatpush1.msra.mxu0 0.0
    %2549 = vmatprep.subr.mxu0 0.0
    %2550 = vmatpush1.msra.mxu0 0.0
    %2551 = vmatprep.subr.mxu0 0.0
    %2552 = vmatpush1.msra.mxu0 0.0
    %2553 = vmatprep.subr.mxu0 0.0
    %2554 = vmatpush1.msra.mxu0 0.0
    %2555 = vmatprep.subr.mxu0 0.0
    %2556 = vmatpush1.msra.mxu0 0.0
    %2557 = vmatprep.subr.mxu0 0.0
    %2558 = vmatpush1.msra.mxu0 0.0
    %2559 = vmatprep.subr.mxu0 0.0
    %2560 = vmatpush1.msra.mxu0 0.0
    %2561 = vmatprep.subr.mxu0 0.0
    %2562 = vmatpush1.msra.mxu0 0.0
    %2563 = vmatprep.subr.mxu0 0.0
    %2564 = vmatpush1.msra.mxu0 0.0
    %2565 = vmatprep.subr.mxu0 0.0
    %2566 = vmatpush1.msra.mxu0 0.0
    %2567 = vmatprep.subr.mxu0 0.0
    %2568 = vmatpush1.msra.mxu0 0.0
    %2569 = vmatprep.subr.mxu0 0.0
    %2570 = vmatpush1.msra.mxu0 0.0
    %2571 = vmatprep.subr.mxu0 0.0
    %2572 = vmatpush1.msra.mxu0 0.0
    %2573 = vmatprep.subr.mxu0 0.0
    %2574 = vmatpush1.msra.mxu0 0.0
    %2575 = vmatprep.subr.mxu0 0.0
    %2576 = vmatpush1.msra.mxu0 0.0
    %2577 = vmatprep.subr.mxu0 0.0
    %2578 = vmatpush1.msra.mxu0 0.0
    %2579 = vmatprep.subr.mxu0 0.0
    %2580 = vmatpush1.msra.mxu0 0.0
    %2581 = vmatprep.subr.mxu0 0.0
    %2582 = vmatpush1.msra.mxu0 0.0
    %2583 = vmatprep.mubr.f32.mxu0 0.0
    %2584 = vmatmul.mubr.f32.gmra.mrb[0].mxu0 %v2505
    %v2585 = vpop.f32.mrb[0].mxu0
    %v2586 = vadd.f32 0.0, %v2585
    %v2587 = vpop.f32.mrb[0].mxu0
    %2588 = vmatprep.mubr.f32.mxu0 0.0
    %2589 = vmatmul.mubr.f32.gmra.mrb[0].mxu0 %v2508
    %v2590 = vpop.f32.mrb[0].mxu0
    %v2591 = vadd.f32 0.0, %v2590
    %v2592 = vpop.f32.mrb[0].mxu0
    %2593 = vmatprep.mubr.f32.mxu0 0.0
    %2594 = vmatmul.mubr.f32.gmra.mrb[0].mxu0 %v2511
    %v2595 = vpop.f32.mrb[0].mxu0
    %v2596 = vadd.f32 0.0, %v2595
    %v2597 = vpop.f32.mrb[0].mxu0
    %2598 = vmatprep.mubr.f32.mxu0 0.0
    %2599 = vmatmul.mubr.f32.gmra.mrb[0].mxu0 %v2514
    %v2600 = vpop.f32.mrb[0].mxu0
    %v2601 = vadd.f32 0.0, %v2600
    %v2602 = vpop.f32.mrb[0].mxu0
    %2603 = vmatprep.mubr.f32.mxu0 0.0
    %2604 = vmatmul.mubr.f32.gmra.mrb[0].mxu0 %v2517
    %v2605 = vpop.f32.mrb[0].mxu0
    %v2606 = vadd.f32 0.0, %v2605
    %v2607 = vpop.f32.mrb[0].mxu0
    %2608 = vdwg.mxu0
    %v2609 = vadd.f32 %v2491, %v2586
    %v2610 = vadd.f32 %v2492, %v2591
    %v2611 = vadd.f32 %v2493, %v2596
    %v2612 = vadd.f32 %v2494, %v2601
    %v2613 = vadd.f32 %v2495, %v2606
    %v2614 = vld [vmem:[#allocation2 + $0x48] sm:$0xff]
    %v2615 = vld [vmem:[#allocation2 + $0x50] sm:$0xff]
    %v2616 = vld [vmem:[#allocation2 + $0x58] sm:$0xff]
    %v2617 = vld [vmem:[#allocation2 + $0x60] sm:$0xff]
    %v2618 = vld [vmem:[#allocation2 + $0x68] sm:$0xff]
    %v2619 = vld [vmem:[%s1 + $0xe8] sm:$0xff]
    %v2620 = vld [vmem:[%s1 + $0xf0] sm:$0xff]
    %v2621 = vld [vmem:[%s1 + $0xf8] sm:$0xff]
    %v2623 = vsel %vm1577, %v2614, 0
    %v2626 = vsel %vm1577, %v2615, 0
    %v2629 = vsel %vm1577, %v2616, 0
    %v2632 = vsel %vm1577, %v2617, 0
    %v2635 = vsel %vm1577, %v2618, 0
    %2637 = vmatprep.subr.mxu0 0.0
    %2638 = vmatpush1.msra.mxu0 %v2619
    %2639 = vmatprep.subr.mxu0 0.0
    %2640 = vmatpush1.msra.mxu0 %v2620
    %2641 = vmatprep.subr.mxu0 0.0
    %2642 = vmatpush1.msra.mxu0 %v2621
    %2643 = vmatprep.subr.mxu0 0.0
    %2644 = vmatpush1.msra.mxu0 0.0
    %2645 = vmatprep.subr.mxu0 0.0
    %2646 = vmatpush1.msra.mxu0 0.0
    %2647 = vmatprep.subr.mxu0 0.0
    %2648 = vmatpush1.msra.mxu0 0.0
    %2649 = vmatprep.subr.mxu0 0.0
    %2650 = vmatpush1.msra.mxu0 0.0
    %2651 = vmatprep.subr.mxu0 0.0
    %2652 = vmatpush1.msra.mxu0 0.0
    %2653 = vmatprep.subr.mxu0 0.0
    %2654 = vmatpush1.msra.mxu0 0.0
    %2655 = vmatprep.subr.mxu0 0.0
    %2656 = vmatpush1.msra.mxu0 0.0
    %2657 = vmatprep.subr.mxu0 0.0
    %2658 = vmatpush1.msra.mxu0 0.0
    %2659 = vmatprep.subr.mxu0 0.0
    %2660 = vmatpush1.msra.mxu0 0.0
    %2661 = vmatprep.subr.mxu0 0.0
    %2662 = vmatpush1.msra.mxu0 0.0
    %2663 = vmatprep.subr.mxu0 0.0
    %2664 = vmatpush1.msra.mxu0 0.0
    %2665 = vmatprep.subr.mxu0 0.0
    %2666 = vmatpush1.msra.mxu0 0.0
    %2667 = vmatprep.subr.mxu0 0.0
    %2668 = vmatpush1.msra.mxu0 0.0
    %2669 = vmatprep.subr.mxu0 0.0
    %2670 = vmatpush1.msra.mxu0 0.0
    %2671 = vmatprep.subr.mxu0 0.0
    %2672 = vmatpush1.msra.mxu0 0.0
    %2673 = vmatprep.subr.mxu0 0.0
    %2674 = vmatpush1.msra.mxu0 0.0
    %2675 = vmatprep.subr.mxu0 0.0
    %2676 = vmatpush1.msra.mxu0 0.0
    %2677 = vmatprep.subr.mxu0 0.0
    %2678 = vmatpush1.msra.mxu0 0.0
    %2679 = vmatprep.subr.mxu0 0.0
    %2680 = vmatpush1.msra.mxu0 0.0
    %2681 = vmatprep.subr.mxu0 0.0
    %2682 = vmatpush1.msra.mxu0 0.0
    %2683 = vmatprep.subr.mxu0 0.0
    %2684 = vmatpush1.msra.mxu0 0.0
    %2685 = vmatprep.subr.mxu0 0.0
    %2686 = vmatpush1.msra.mxu0 0.0
    %2687 = vmatprep.subr.mxu0 0.0
    %2688 = vmatpush1.msra.mxu0 0.0
    %2689 = vmatprep.subr.mxu0 0.0
    %2690 = vmatpush1.msra.mxu0 0.0
    %2691 = vmatprep.subr.mxu0 0.0
    %2692 = vmatpush1.msra.mxu0 0.0
    %2693 = vmatprep.subr.mxu0 0.0
    %2694 = vmatpush1.msra.mxu0 0.0
    %2695 = vmatprep.subr.mxu0 0.0
    %2696 = vmatpush1.msra.mxu0 0.0
    %2697 = vmatprep.subr.mxu0 0.0
    %2698 = vmatpush1.msra.mxu0 0.0
    %2699 = vmatprep.subr.mxu0 0.0
    %2700 = vmatpush1.msra.mxu0 0.0
    %2701 = vmatprep.mubr.f32.mxu0 0.0
    %2702 = vmatmul.mubr.f32.gmra.mrb[0].mxu0 %v2623
    %v2703 = vpop.f32.mrb[0].mxu0
    %v2704 = vadd.f32 0.0, %v2703
    %v2705 = vpop.f32.mrb[0].mxu0
    %2706 = vmatprep.mubr.f32.mxu0 0.0
    %2707 = vmatmul.mubr.f32.gmra.mrb[0].mxu0 %v2626
    %v2708 = vpop.f32.mrb[0].mxu0
    %v2709 = vadd.f32 0.0, %v2708
    %v2710 = vpop.f32.mrb[0].mxu0
    %2711 = vmatprep.mubr.f32.mxu0 0.0
    %2712 = vmatmul.mubr.f32.gmra.mrb[0].mxu0 %v2629
    %v2713 = vpop.f32.mrb[0].mxu0
    %v2714 = vadd.f32 0.0, %v2713
    %v2715 = vpop.f32.mrb[0].mxu0
    %2716 = vmatprep.mubr.f32.mxu0 0.0
    %2717 = vmatmul.mubr.f32.gmra.mrb[0].mxu0 %v2632
    %v2718 = vpop.f32.mrb[0].mxu0
    %v2719 = vadd.f32 0.0, %v2718
    %v2720 = vpop.f32.mrb[0].mxu0
    %2721 = vmatprep.mubr.f32.mxu0 0.0
    %2722 = vmatmul.mubr.f32.gmra.mrb[0].mxu0 %v2635
    %v2723 = vpop.f32.mrb[0].mxu0
    %v2724 = vadd.f32 0.0, %v2723
    %v2725 = vpop.f32.mrb[0].mxu0
    %2726 = vdwg.mxu0
    %v2727 = vadd.f32 %v2609, %v2704
    %v2728 = vadd.f32 %v2610, %v2709
    %v2729 = vadd.f32 %v2611, %v2714
    %v2730 = vadd.f32 %v2612, %v2719
    %v2731 = vadd.f32 %v2613, %v2724
    %vm2732 = vcmask 326656
    %v2733 = vsel %vm2732, 1.0, 0
    %2735 = vmatprep.subr.mxu0 0.0
    %v2736 = vand.u32 %v2727, 4294901760
    %2737 = vmatpush1.msra.mxu0 %v2736
    %2738 = vmatprep.subr.mxu0 0.0
    %v2739 = vand.u32 %v2728, 4294901760
    %2740 = vmatpush1.msra.mxu0 %v2739
    %2741 = vmatprep.subr.mxu0 0.0
    %v2742 = vand.u32 %v2729, 4294901760
    %2743 = vmatpush1.msra.mxu0 %v2742
    %2744 = vmatprep.subr.mxu0 0.0
    %v2745 = vand.u32 %v2730, 4294901760
    %2746 = vmatpush1.msra.mxu0 %v2745
    %2747 = vmatprep.subr.mxu0 0.0
    %v2748 = vand.u32 %v2731, 4294901760
    %2749 = vmatpush1.msra.mxu0 %v2748
    %2750 = vmatprep.subr.mxu0 0.0
    %2751 = vmatpush1.msra.mxu0 0.0
    %2752 = vmatprep.subr.mxu0 0.0
    %2753 = vmatpush1.msra.mxu0 0.0
    %2754 = vmatprep.subr.mxu0 0.0
    %2755 = vmatpush1.msra.mxu0 0.0
    %2756 = vmatprep.subr.mxu0 0.0
    %2757 = vmatpush1.msra.mxu0 0.0
    %2758 = vmatprep.subr.mxu0 0.0
    %2759 = vmatpush1.msra.mxu0 0.0
    %2760 = vmatprep.subr.mxu0 0.0
    %2761 = vmatpush1.msra.mxu0 0.0
    %2762 = vmatprep.subr.mxu0 0.0
    %2763 = vmatpush1.msra.mxu0 0.0
    %2764 = vmatprep.subr.mxu0 0.0
    %2765 = vmatpush1.msra.mxu0 0.0
    %2766 = vmatprep.subr.mxu0 0.0
    %2767 = vmatpush1.msra.mxu0 0.0
    %2768 = vmatprep.subr.mxu0 0.0
    %2769 = vmatpush1.msra.mxu0 0.0
    %2770 = vmatprep.subr.mxu0 0.0
    %2771 = vmatpush1.msra.mxu0 0.0
    %2772 = vmatprep.subr.mxu0 0.0
    %2773 = vmatpush1.msra.mxu0 0.0
    %2774 = vmatprep.subr.mxu0 0.0
    %2775 = vmatpush1.msra.mxu0 0.0
    %2776 = vmatprep.subr.mxu0 0.0
    %2777 = vmatpush1.msra.mxu0 0.0
    %2778 = vmatprep.subr.mxu0 0.0
    %2779 = vmatpush1.msra.mxu0 0.0
    %2780 = vmatprep.subr.mxu0 0.0
    %2781 = vmatpush1.msra.mxu0 0.0
    %2782 = vmatprep.subr.mxu0 0.0
    %2783 = vmatpush1.msra.mxu0 0.0
    %2784 = vmatprep.subr.mxu0 0.0
    %2785 = vmatpush1.msra.mxu0 0.0
    %2786 = vmatprep.subr.mxu0 0.0
    %2787 = vmatpush1.msra.mxu0 0.0
    %2788 = vmatprep.subr.mxu0 0.0
    %2789 = vmatpush1.msra.mxu0 0.0
    %2790 = vmatprep.subr.mxu0 0.0
    %2791 = vmatpush1.msra.mxu0 0.0
    %2792 = vmatprep.subr.mxu0 0.0
    %2793 = vmatpush1.msra.mxu0 0.0
    %2794 = vmatprep.subr.mxu0 0.0
    %2795 = vmatpush1.msra.mxu0 0.0
    %2796 = vmatprep.subr.mxu0 0.0
    %2797 = vmatpush1.msra.mxu0 0.0
    %2798 = vmatprep.subr.mxu0 0.0
    %2799 = vmatpush1.msra.mxu0 0.0
    %2800 = vmatprep.subr.mxu0 0.0
    %2801 = vmatpush1.msra.mxu0 0.0
    %2802 = vmatprep.subr.mxu0 0.0
    %2803 = vmatpush1.msra.mxu0 0.0
    %2804 = vmatprep.mubr.f32.mxu0 0.0
    %v2805 = vand.u32 %v2733, 4294901760
    %v2806 = vsub.f32 %v2733, %v2805
    %v2807 = vand.u32 %v2806, 4294901760
    %v2808 = vsub.f32 %v2806, %v2807
    %v2809 = vand.u32 %v2808, 4294901760
    %2810 = vmatmul.mubr.f32.gmra.mrb[0].mxu0 %v2809
    %v2811 = vpop.f32.mrb[0].mxu0
    %v2812 = vadd.f32 0.0, %v2811
    %v2813 = vpop.f32.mrb[0].mxu0
    %2814 = vdwg.mxu0
    %2815 = vmatprep.subr.mxu0 0.0
    %v2816 = vand.u32 %v2727, 4294901760
    %v2817 = vsub.f32 %v2727, %v2816
    %v2818 = vand.u32 %v2817, 4294901760
    %v2819 = vsub.f32 %v2817, %v2818
    %v2820 = vand.u32 %v2819, 4294901760
    %2821 = vmatpush1.msra.mxu0 %v2820
    %2822 = vmatprep.subr.mxu0 0.0
    %v2823 = vand.u32 %v2728, 4294901760
    %v2824 = vsub.f32 %v2728, %v2823
    %v2825 = vand.u32 %v2824, 4294901760
    %v2826 = vsub.f32 %v2824, %v2825
    %v2827 = vand.u32 %v2826, 4294901760
    %2828 = vmatpush1.msra.mxu0 %v2827
    %2829 = vmatprep.subr.mxu0 0.0
    %v2830 = vand.u32 %v2729, 4294901760
    %v2831 = vsub.f32 %v2729, %v2830
    %v2832 = vand.u32 %v2831, 4294901760
    %v2833 = vsub.f32 %v2831, %v2832
    %v2834 = vand.u32 %v2833, 4294901760
    %2835 = vmatpush1.msra.mxu0 %v2834
    %2836 = vmatprep.subr.mxu0 0.0
    %v2837 = vand.u32 %v2730, 4294901760
    %v2838 = vsub.f32 %v2730, %v2837
    %v2839 = vand.u32 %v2838, 4294901760
    %v2840 = vsub.f32 %v2838, %v2839
    %v2841 = vand.u32 %v2840, 4294901760
    %2842 = vmatpush1.msra.mxu0 %v2841
    %2843 = vmatprep.subr.mxu0 0.0
    %v2844 = vand.u32 %v2731, 4294901760
    %v2845 = vsub.f32 %v2731, %v2844
    %v2846 = vand.u32 %v2845, 4294901760
    %v2847 = vsub.f32 %v2845, %v2846
    %v2848 = vand.u32 %v2847, 4294901760
    %2849 = vmatpush1.msra.mxu0 %v2848
    %2850 = vmatprep.subr.mxu0 0.0
    %2851 = vmatpush1.msra.mxu0 0.0
    %2852 = vmatprep.subr.mxu0 0.0
    %2853 = vmatpush1.msra.mxu0 0.0
    %2854 = vmatprep.subr.mxu0 0.0
    %2855 = vmatpush1.msra.mxu0 0.0
    %2856 = vmatprep.subr.mxu0 0.0
    %2857 = vmatpush1.msra.mxu0 0.0
    %2858 = vmatprep.subr.mxu0 0.0
    %2859 = vmatpush1.msra.mxu0 0.0
    %2860 = vmatprep.subr.mxu0 0.0
    %2861 = vmatpush1.msra.mxu0 0.0
    %2862 = vmatprep.subr.mxu0 0.0
    %2863 = vmatpush1.msra.mxu0 0.0
    %2864 = vmatprep.subr.mxu0 0.0
    %2865 = vmatpush1.msra.mxu0 0.0
    %2866 = vmatprep.subr.mxu0 0.0
    %2867 = vmatpush1.msra.mxu0 0.0
    %2868 = vmatprep.subr.mxu0 0.0
    %2869 = vmatpush1.msra.mxu0 0.0
    %2870 = vmatprep.subr.mxu0 0.0
    %2871 = vmatpush1.msra.mxu0 0.0
    %2872 = vmatprep.subr.mxu0 0.0
    %2873 = vmatpush1.msra.mxu0 0.0
    %2874 = vmatprep.subr.mxu0 0.0
    %2875 = vmatpush1.msra.mxu0 0.0
    %2876 = vmatprep.subr.mxu0 0.0
    %2877 = vmatpush1.msra.mxu0 0.0
    %2878 = vmatprep.subr.mxu0 0.0
    %2879 = vmatpush1.msra.mxu0 0.0
    %2880 = vmatprep.subr.mxu0 0.0
    %2881 = vmatpush1.msra.mxu0 0.0
    %2882 = vmatprep.subr.mxu0 0.0
    %2883 = vmatpush1.msra.mxu0 0.0
    %2884 = vmatprep.subr.mxu0 0.0
    %2885 = vmatpush1.msra.mxu0 0.0
    %2886 = vmatprep.subr.mxu0 0.0
    %2887 = vmatpush1.msra.mxu0 0.0
    %2888 = vmatprep.subr.mxu0 0.0
    %2889 = vmatpush1.msra.mxu0 0.0
    %2890 = vmatprep.subr.mxu0 0.0
    %2891 = vmatpush1.msra.mxu0 0.0
    %2892 = vmatprep.subr.mxu0 0.0
    %2893 = vmatpush1.msra.mxu0 0.0
    %2894 = vmatprep.subr.mxu0 0.0
    %2895 = vmatpush1.msra.mxu0 0.0
    %2896 = vmatprep.subr.mxu0 0.0
    %2897 = vmatpush1.msra.mxu0 0.0
    %2898 = vmatprep.subr.mxu0 0.0
    %2899 = vmatpush1.msra.mxu0 0.0
    %2900 = vmatprep.subr.mxu0 0.0
    %2901 = vmatpush1.msra.mxu0 0.0
    %2902 = vmatprep.subr.mxu0 0.0
    %2903 = vmatpush1.msra.mxu0 0.0
    %2904 = vmatprep.mubr.f32.mxu0 0.0
    %v2905 = vand.u32 %v2733, 4294901760
    %2906 = vmatmul.mubr.f32.gmra.mrb[0].mxu0 %v2905
    %v2907 = vpop.f32.mrb[0].mxu0
    %v2908 = vadd.f32 %v2812, %v2907
    %v2909 = vpop.f32.mrb[0].mxu0
    %2910 = vdwg.mxu0
    %2911 = vmatprep.subr.mxu0 0.0
    %v2912 = vand.u32 %v2727, 4294901760
    %v2913 = vsub.f32 %v2727, %v2912
    %2914 = vmatpush1.msra.mxu0 %v2913
    %2915 = vmatprep.subr.mxu0 0.0
    %v2916 = vand.u32 %v2728, 4294901760
    %v2917 = vsub.f32 %v2728, %v2916
    %2918 = vmatpush1.msra.mxu0 %v2917
    %2919 = vmatprep.subr.mxu0 0.0
    %v2920 = vand.u32 %v2729, 4294901760
    %v2921 = vsub.f32 %v2729, %v2920
    %2922 = vmatpush1.msra.mxu0 %v2921
    %2923 = vmatprep.subr.mxu0 0.0
    %v2924 = vand.u32 %v2730, 4294901760
    %v2925 = vsub.f32 %v2730, %v2924
    %2926 = vmatpush1.msra.mxu0 %v2925
    %2927 = vmatprep.subr.mxu0 0.0
    %v2928 = vand.u32 %v2731, 4294901760
    %v2929 = vsub.f32 %v2731, %v2928
    %2930 = vmatpush1.msra.mxu0 %v2929
    %2931 = vmatprep.subr.mxu0 0.0
    %2932 = vmatpush1.msra.mxu0 0.0
    %2933 = vmatprep.subr.mxu0 0.0
    %2934 = vmatpush1.msra.mxu0 0.0
    %2935 = vmatprep.subr.mxu0 0.0
    %2936 = vmatpush1.msra.mxu0 0.0
    %2937 = vmatprep.subr.mxu0 0.0
    %2938 = vmatpush1.msra.mxu0 0.0
    %2939 = vmatprep.subr.mxu0 0.0
    %2940 = vmatpush1.msra.mxu0 0.0
    %2941 = vmatprep.subr.mxu0 0.0
    %2942 = vmatpush1.msra.mxu0 0.0
    %2943 = vmatprep.subr.mxu0 0.0
    %2944 = vmatpush1.msra.mxu0 0.0
    %2945 = vmatprep.subr.mxu0 0.0
    %2946 = vmatpush1.msra.mxu0 0.0
    %2947 = vmatprep.subr.mxu0 0.0
    %2948 = vmatpush1.msra.mxu0 0.0
    %2949 = vmatprep.subr.mxu0 0.0
    %2950 = vmatpush1.msra.mxu0 0.0
    %2951 = vmatprep.subr.mxu0 0.0
    %2952 = vmatpush1.msra.mxu0 0.0
    %2953 = vmatprep.subr.mxu0 0.0
    %2954 = vmatpush1.msra.mxu0 0.0
    %2955 = vmatprep.subr.mxu0 0.0
    %2956 = vmatpush1.msra.mxu0 0.0
    %2957 = vmatprep.subr.mxu0 0.0
    %2958 = vmatpush1.msra.mxu0 0.0
    %2959 = vmatprep.subr.mxu0 0.0
    %2960 = vmatpush1.msra.mxu0 0.0
    %2961 = vmatprep.subr.mxu0 0.0
    %2962 = vmatpush1.msra.mxu0 0.0
    %2963 = vmatprep.subr.mxu0 0.0
    %2964 = vmatpush1.msra.mxu0 0.0
    %2965 = vmatprep.subr.mxu0 0.0
    %2966 = vmatpush1.msra.mxu0 0.0
    %2967 = vmatprep.subr.mxu0 0.0
    %2968 = vmatpush1.msra.mxu0 0.0
    %2969 = vmatprep.subr.mxu0 0.0
    %2970 = vmatpush1.msra.mxu0 0.0
    %2971 = vmatprep.subr.mxu0 0.0
    %2972 = vmatpush1.msra.mxu0 0.0
    %2973 = vmatprep.subr.mxu0 0.0
    %2974 = vmatpush1.msra.mxu0 0.0
    %2975 = vmatprep.subr.mxu0 0.0
    %2976 = vmatpush1.msra.mxu0 0.0
    %2977 = vmatprep.subr.mxu0 0.0
    %2978 = vmatpush1.msra.mxu0 0.0
    %2979 = vmatprep.subr.mxu0 0.0
    %2980 = vmatpush1.msra.mxu0 0.0
    %2981 = vmatprep.subr.mxu0 0.0
    %2982 = vmatpush1.msra.mxu0 0.0
    %2983 = vmatprep.subr.mxu0 0.0
    %2984 = vmatpush1.msra.mxu0 0.0
    %2985 = vmatprep.mubr.f32.mxu0 0.0
    %v2986 = vand.u32 %v2733, 4294901760
    %v2987 = vsub.f32 %v2733, %v2986
    %2988 = vmatmul.mubr.f32.gmra.mrb[0].mxu0 %v2987
    %v2989 = vpop.f32.mrb[0].mxu0
    %v2990 = vadd.f32 %v2908, %v2989
    %v2991 = vpop.f32.mrb[0].mxu0
    %2992 = vdwg.mxu0
    %2993 = vmatprep.subr.mxu0 0.0
    %v2994 = vand.u32 %v2727, 4294901760
    %2995 = vmatpush1.msra.mxu0 %v2994
    %2996 = vmatprep.subr.mxu0 0.0
    %v2997 = vand.u32 %v2728, 4294901760
    %2998 = vmatpush1.msra.mxu0 %v2997
    %2999 = vmatprep.subr.mxu0 0.0
    %v3000 = vand.u32 %v2729, 4294901760
    %3001 = vmatpush1.msra.mxu0 %v3000
    %3002 = vmatprep.subr.mxu0 0.0
    %v3003 = vand.u32 %v2730, 4294901760
    %3004 = vmatpush1.msra.mxu0 %v3003
    %3005 = vmatprep.subr.mxu0 0.0
    %v3006 = vand.u32 %v2731, 4294901760
    %3007 = vmatpush1.msra.mxu0 %v3006
    %3008 = vmatprep.subr.mxu0 0.0
    %3009 = vmatpush1.msra.mxu0 0.0
    %3010 = vmatprep.subr.mxu0 0.0
    %3011 = vmatpush1.msra.mxu0 0.0
    %3012 = vmatprep.subr.mxu0 0.0
    %3013 = vmatpush1.msra.mxu0 0.0
    %3014 = vmatprep.subr.mxu0 0.0
    %3015 = vmatpush1.msra.mxu0 0.0
    %3016 = vmatprep.subr.mxu0 0.0
    %3017 = vmatpush1.msra.mxu0 0.0
    %3018 = vmatprep.subr.mxu0 0.0
    %3019 = vmatpush1.msra.mxu0 0.0
    %3020 = vmatprep.subr.mxu0 0.0
    %3021 = vmatpush1.msra.mxu0 0.0
    %3022 = vmatprep.subr.mxu0 0.0
    %3023 = vmatpush1.msra.mxu0 0.0
    %3024 = vmatprep.subr.mxu0 0.0
    %3025 = vmatpush1.msra.mxu0 0.0
    %3026 = vmatprep.subr.mxu0 0.0
    %3027 = vmatpush1.msra.mxu0 0.0
    %3028 = vmatprep.subr.mxu0 0.0
    %3029 = vmatpush1.msra.mxu0 0.0
    %3030 = vmatprep.subr.mxu0 0.0
    %3031 = vmatpush1.msra.mxu0 0.0
    %3032 = vmatprep.subr.mxu0 0.0
    %3033 = vmatpush1.msra.mxu0 0.0
    %3034 = vmatprep.subr.mxu0 0.0
    %3035 = vmatpush1.msra.mxu0 0.0
    %3036 = vmatprep.subr.mxu0 0.0
    %3037 = vmatpush1.msra.mxu0 0.0
    %3038 = vmatprep.subr.mxu0 0.0
    %3039 = vmatpush1.msra.mxu0 0.0
    %3040 = vmatprep.subr.mxu0 0.0
    %3041 = vmatpush1.msra.mxu0 0.0
    %3042 = vmatprep.subr.mxu0 0.0
    %3043 = vmatpush1.msra.mxu0 0.0
    %3044 = vmatprep.subr.mxu0 0.0
    %3045 = vmatpush1.msra.mxu0 0.0
    %3046 = vmatprep.subr.mxu0 0.0
    %3047 = vmatpush1.msra.mxu0 0.0
    %3048 = vmatprep.subr.mxu0 0.0
    %3049 = vmatpush1.msra.mxu0 0.0
    %3050 = vmatprep.subr.mxu0 0.0
    %3051 = vmatpush1.msra.mxu0 0.0
    %3052 = vmatprep.subr.mxu0 0.0
    %3053 = vmatpush1.msra.mxu0 0.0
    %3054 = vmatprep.subr.mxu0 0.0
    %3055 = vmatpush1.msra.mxu0 0.0
    %3056 = vmatprep.subr.mxu0 0.0
    %3057 = vmatpush1.msra.mxu0 0.0
    %3058 = vmatprep.subr.mxu0 0.0
    %3059 = vmatpush1.msra.mxu0 0.0
    %3060 = vmatprep.subr.mxu0 0.0
    %3061 = vmatpush1.msra.mxu0 0.0
    %3062 = vmatprep.mubr.f32.mxu0 0.0
    %v3063 = vand.u32 %v2733, 4294901760
    %v3064 = vsub.f32 %v2733, %v3063
    %v3065 = vand.u32 %v3064, 4294901760
    %3066 = vmatmul.mubr.f32.gmra.mrb[0].mxu0 %v3065
    %v3067 = vpop.f32.mrb[0].mxu0
    %v3068 = vadd.f32 %v2990, %v3067
    %v3069 = vpop.f32.mrb[0].mxu0
    %3070 = vdwg.mxu0
    %3071 = vmatprep.subr.mxu0 0.0
    %v3072 = vand.u32 %v2727, 4294901760
    %v3073 = vsub.f32 %v2727, %v3072
    %v3074 = vand.u32 %v3073, 4294901760
    %3075 = vmatpush1.msra.mxu0 %v3074
    %3076 = vmatprep.subr.mxu0 0.0
    %v3077 = vand.u32 %v2728, 4294901760
    %v3078 = vsub.f32 %v2728, %v3077
    %v3079 = vand.u32 %v3078, 4294901760
    %3080 = vmatpush1.msra.mxu0 %v3079
    %3081 = vmatprep.subr.mxu0 0.0
    %v3082 = vand.u32 %v2729, 4294901760
    %v3083 = vsub.f32 %v2729, %v3082
    %v3084 = vand.u32 %v3083, 4294901760
    %3085 = vmatpush1.msra.mxu0 %v3084
    %3086 = vmatprep.subr.mxu0 0.0
    %v3087 = vand.u32 %v2730, 4294901760
    %v3088 = vsub.f32 %v2730, %v3087
    %v3089 = vand.u32 %v3088, 4294901760
    %3090 = vmatpush1.msra.mxu0 %v3089
    %3091 = vmatprep.subr.mxu0 0.0
    %v3092 = vand.u32 %v2731, 4294901760
    %v3093 = vsub.f32 %v2731, %v3092
    %v3094 = vand.u32 %v3093, 4294901760
    %3095 = vmatpush1.msra.mxu0 %v3094
    %3096 = vmatprep.subr.mxu0 0.0
    %3097 = vmatpush1.msra.mxu0 0.0
    %3098 = vmatprep.subr.mxu0 0.0
    %3099 = vmatpush1.msra.mxu0 0.0
    %3100 = vmatprep.subr.mxu0 0.0
    %3101 = vmatpush1.msra.mxu0 0.0
    %3102 = vmatprep.subr.mxu0 0.0
    %3103 = vmatpush1.msra.mxu0 0.0
    %3104 = vmatprep.subr.mxu0 0.0
    %3105 = vmatpush1.msra.mxu0 0.0
    %3106 = vmatprep.subr.mxu0 0.0
    %3107 = vmatpush1.msra.mxu0 0.0
    %3108 = vmatprep.subr.mxu0 0.0
    %3109 = vmatpush1.msra.mxu0 0.0
    %3110 = vmatprep.subr.mxu0 0.0
    %3111 = vmatpush1.msra.mxu0 0.0
    %3112 = vmatprep.subr.mxu0 0.0
    %3113 = vmatpush1.msra.mxu0 0.0
    %3114 = vmatprep.subr.mxu0 0.0
    %3115 = vmatpush1.msra.mxu0 0.0
    %3116 = vmatprep.subr.mxu0 0.0
    %3117 = vmatpush1.msra.mxu0 0.0
    %3118 = vmatprep.subr.mxu0 0.0
    %3119 = vmatpush1.msra.mxu0 0.0
    %3120 = vmatprep.subr.mxu0 0.0
    %3121 = vmatpush1.msra.mxu0 0.0
    %3122 = vmatprep.subr.mxu0 0.0
    %3123 = vmatpush1.msra.mxu0 0.0
    %3124 = vmatprep.subr.mxu0 0.0
    %3125 = vmatpush1.msra.mxu0 0.0
    %3126 = vmatprep.subr.mxu0 0.0
    %3127 = vmatpush1.msra.mxu0 0.0
    %3128 = vmatprep.subr.mxu0 0.0
    %3129 = vmatpush1.msra.mxu0 0.0
    %3130 = vmatprep.subr.mxu0 0.0
    %3131 = vmatpush1.msra.mxu0 0.0
    %3132 = vmatprep.subr.mxu0 0.0
    %3133 = vmatpush1.msra.mxu0 0.0
    %3134 = vmatprep.subr.mxu0 0.0
    %3135 = vmatpush1.msra.mxu0 0.0
    %3136 = vmatprep.subr.mxu0 0.0
    %3137 = vmatpush1.msra.mxu0 0.0
    %3138 = vmatprep.subr.mxu0 0.0
    %3139 = vmatpush1.msra.mxu0 0.0
    %3140 = vmatprep.subr.mxu0 0.0
    %3141 = vmatpush1.msra.mxu0 0.0
    %3142 = vmatprep.subr.mxu0 0.0
    %3143 = vmatpush1.msra.mxu0 0.0
    %3144 = vmatprep.subr.mxu0 0.0
    %3145 = vmatpush1.msra.mxu0 0.0
    %3146 = vmatprep.subr.mxu0 0.0
    %3147 = vmatpush1.msra.mxu0 0.0
    %3148 = vmatprep.subr.mxu0 0.0
    %3149 = vmatpush1.msra.mxu0 0.0
    %3150 = vmatprep.mubr.f32.mxu0 0.0
    %v3151 = vand.u32 %v2733, 4294901760
    %3152 = vmatmul.mubr.f32.gmra.mrb[0].mxu0 %v3151
    %v3153 = vpop.f32.mrb[0].mxu0
    %v3154 = vadd.f32 %v3068, %v3153
    %v3155 = vpop.f32.mrb[0].mxu0
    %3156 = vdwg.mxu0
    %3157 = vmatprep.subr.mxu0 0.0
    %v3158 = vand.u32 %v2727, 4294901760
    %3159 = vmatpush1.msra.mxu0 %v3158
    %3160 = vmatprep.subr.mxu0 0.0
    %v3161 = vand.u32 %v2728, 4294901760
    %3162 = vmatpush1.msra.mxu0 %v3161
    %3163 = vmatprep.subr.mxu0 0.0
    %v3164 = vand.u32 %v2729, 4294901760
    %3165 = vmatpush1.msra.mxu0 %v3164
    %3166 = vmatprep.subr.mxu0 0.0
    %v3167 = vand.u32 %v2730, 4294901760
    %3168 = vmatpush1.msra.mxu0 %v3167
    %3169 = vmatprep.subr.mxu0 0.0
    %v3170 = vand.u32 %v2731, 4294901760
    %3171 = vmatpush1.msra.mxu0 %v3170
    %3172 = vmatprep.subr.mxu0 0.0
    %3173 = vmatpush1.msra.mxu0 0.0
    %3174 = vmatprep.subr.mxu0 0.0
    %3175 = vmatpush1.msra.mxu0 0.0
    %3176 = vmatprep.subr.mxu0 0.0
    %3177 = vmatpush1.msra.mxu0 0.0
    %3178 = vmatprep.subr.mxu0 0.0
    %3179 = vmatpush1.msra.mxu0 0.0
    %3180 = vmatprep.subr.mxu0 0.0
    %3181 = vmatpush1.msra.mxu0 0.0
    %3182 = vmatprep.subr.mxu0 0.0
    %3183 = vmatpush1.msra.mxu0 0.0
    %3184 = vmatprep.subr.mxu0 0.0
    %3185 = vmatpush1.msra.mxu0 0.0
    %3186 = vmatprep.subr.mxu0 0.0
    %3187 = vmatpush1.msra.mxu0 0.0
    %3188 = vmatprep.subr.mxu0 0.0
    %3189 = vmatpush1.msra.mxu0 0.0
    %3190 = vmatprep.subr.mxu0 0.0
    %3191 = vmatpush1.msra.mxu0 0.0
    %3192 = vmatprep.subr.mxu0 0.0
    %3193 = vmatpush1.msra.mxu0 0.0
    %3194 = vmatprep.subr.mxu0 0.0
    %3195 = vmatpush1.msra.mxu0 0.0
    %3196 = vmatprep.subr.mxu0 0.0
    %3197 = vmatpush1.msra.mxu0 0.0
    %3198 = vmatprep.subr.mxu0 0.0
    %3199 = vmatpush1.msra.mxu0 0.0
    %3200 = vmatprep.subr.mxu0 0.0
    %3201 = vmatpush1.msra.mxu0 0.0
    %3202 = vmatprep.subr.mxu0 0.0
    %3203 = vmatpush1.msra.mxu0 0.0
    %3204 = vmatprep.subr.mxu0 0.0
    %3205 = vmatpush1.msra.mxu0 0.0
    %3206 = vmatprep.subr.mxu0 0.0
    %3207 = vmatpush1.msra.mxu0 0.0
    %3208 = vmatprep.subr.mxu0 0.0
    %3209 = vmatpush1.msra.mxu0 0.0
    %3210 = vmatprep.subr.mxu0 0.0
    %3211 = vmatpush1.msra.mxu0 0.0
    %3212 = vmatprep.subr.mxu0 0.0
    %3213 = vmatpush1.msra.mxu0 0.0
    %3214 = vmatprep.subr.mxu0 0.0
    %3215 = vmatpush1.msra.mxu0 0.0
    %3216 = vmatprep.subr.mxu0 0.0
    %3217 = vmatpush1.msra.mxu0 0.0
    %3218 = vmatprep.subr.mxu0 0.0
    %3219 = vmatpush1.msra.mxu0 0.0
    %3220 = vmatprep.subr.mxu0 0.0
    %3221 = vmatpush1.msra.mxu0 0.0
    %3222 = vmatprep.subr.mxu0 0.0
    %3223 = vmatpush1.msra.mxu0 0.0
    %3224 = vmatprep.subr.mxu0 0.0
    %3225 = vmatpush1.msra.mxu0 0.0
    %3226 = vmatprep.mubr.f32.mxu0 0.0
    %v3227 = vand.u32 %v2733, 4294901760
    %3228 = vmatmul.mubr.f32.gmra.mrb[0].mxu0 %v3227
    %v3229 = vpop.f32.mrb[0].mxu0
    %v3230 = vadd.f32 %v3154, %v3229
    %v3231 = vpop.f32.mrb[0].mxu0
    %3232 = vdwg.mxu0
    %v3233 = vmul.f32 %v3230, 0.025
    %v3234 = vlaneseq
    %v3235 = vshrl.u32 %v3234, 7
    %v3236 = vsub.s32 0, %v3235
    %v3237 = vrot.slane %v3233, %v3236
    %v3238 = vsub.f32 %v2727, %v3237
    %v3239 = vsub.f32 %v2728, %v3237
    %v3240 = vsub.f32 %v2729, %v3237
    %v3241 = vsub.f32 %v2730, %v3237
    %v3242 = vsub.f32 %v2731, %v3237
    %v3243 = vmul.f32 %v3238, %v3238
    %v3244 = vmul.f32 %v3239, %v3239
    %v3245 = vmul.f32 %v3240, %v3240
    %v3246 = vmul.f32 %v3241, %v3241
    %v3247 = vmul.f32 %v3242, %v3242
    %3248 = vmatprep.subr.mxu0 0.0
    %v3249 = vand.u32 %v3243, 4294901760
    %3250 = vmatpush1.msra.mxu0 %v3249
    %3251 = vmatprep.subr.mxu0 0.0
    %v3252 = vand.u32 %v3244, 4294901760
    %3253 = vmatpush1.msra.mxu0 %v3252
    %3254 = vmatprep.subr.mxu0 0.0
    %v3255 = vand.u32 %v3245, 4294901760
    %3256 = vmatpush1.msra.mxu0 %v3255
    %3257 = vmatprep.subr.mxu0 0.0
    %v3258 = vand.u32 %v3246, 4294901760
    %3259 = vmatpush1.msra.mxu0 %v3258
    %3260 = vmatprep.subr.mxu0 0.0
    %v3261 = vand.u32 %v3247, 4294901760
    %3262 = vmatpush1.msra.mxu0 %v3261
    %3263 = vmatprep.subr.mxu0 0.0
    %3264 = vmatpush1.msra.mxu0 0.0
    %3265 = vmatprep.subr.mxu0 0.0
    %3266 = vmatpush1.msra.mxu0 0.0
    %3267 = vmatprep.subr.mxu0 0.0
    %3268 = vmatpush1.msra.mxu0 0.0
    %3269 = vmatprep.subr.mxu0 0.0
    %3270 = vmatpush1.msra.mxu0 0.0
    %3271 = vmatprep.subr.mxu0 0.0
    %3272 = vmatpush1.msra.mxu0 0.0
    %3273 = vmatprep.subr.mxu0 0.0
    %3274 = vmatpush1.msra.mxu0 0.0
    %3275 = vmatprep.subr.mxu0 0.0
    %3276 = vmatpush1.msra.mxu0 0.0
    %3277 = vmatprep.subr.mxu0 0.0
    %3278 = vmatpush1.msra.mxu0 0.0
    %3279 = vmatprep.subr.mxu0 0.0
    %3280 = vmatpush1.msra.mxu0 0.0
    %3281 = vmatprep.subr.mxu0 0.0
    %3282 = vmatpush1.msra.mxu0 0.0
    %3283 = vmatprep.subr.mxu0 0.0
    %3284 = vmatpush1.msra.mxu0 0.0
    %3285 = vmatprep.subr.mxu0 0.0
    %3286 = vmatpush1.msra.mxu0 0.0
    %3287 = vmatprep.subr.mxu0 0.0
    %3288 = vmatpush1.msra.mxu0 0.0
    %3289 = vmatprep.subr.mxu0 0.0
    %3290 = vmatpush1.msra.mxu0 0.0
    %3291 = vmatprep.subr.mxu0 0.0
    %3292 = vmatpush1.msra.mxu0 0.0
    %3293 = vmatprep.subr.mxu0 0.0
    %3294 = vmatpush1.msra.mxu0 0.0
    %3295 = vmatprep.subr.mxu0 0.0
    %3296 = vmatpush1.msra.mxu0 0.0
    %3297 = vmatprep.subr.mxu0 0.0
    %3298 = vmatpush1.msra.mxu0 0.0
    %3299 = vmatprep.subr.mxu0 0.0
    %3300 = vmatpush1.msra.mxu0 0.0
    %3301 = vmatprep.subr.mxu0 0.0
    %3302 = vmatpush1.msra.mxu0 0.0
    %3303 = vmatprep.subr.mxu0 0.0
    %3304 = vmatpush1.msra.mxu0 0.0
    %3305 = vmatprep.subr.mxu0 0.0
    %3306 = vmatpush1.msra.mxu0 0.0
    %3307 = vmatprep.subr.mxu0 0.0
    %3308 = vmatpush1.msra.mxu0 0.0
    %3309 = vmatprep.subr.mxu0 0.0
    %3310 = vmatpush1.msra.mxu0 0.0
    %3311 = vmatprep.subr.mxu0 0.0
    %3312 = vmatpush1.msra.mxu0 0.0
    %3313 = vmatprep.subr.mxu0 0.0
    %3314 = vmatpush1.msra.mxu0 0.0
    %3315 = vmatprep.subr.mxu0 0.0
    %3316 = vmatpush1.msra.mxu0 0.0
    %3317 = vmatprep.mubr.f32.mxu0 0.0
    %v3318 = vand.u32 %v2733, 4294901760
    %v3319 = vsub.f32 %v2733, %v3318
    %v3320 = vand.u32 %v3319, 4294901760
    %v3321 = vsub.f32 %v3319, %v3320
    %v3322 = vand.u32 %v3321, 4294901760
    %3323 = vmatmul.mubr.f32.gmra.mrb[0].mxu0 %v3322
    %v3324 = vpop.f32.mrb[0].mxu0
    %v3325 = vadd.f32 0.0, %v3324
    %v3326 = vpop.f32.mrb[0].mxu0
    %3327 = vdwg.mxu0
    %3328 = vmatprep.subr.mxu0 0.0
    %v3329 = vand.u32 %v3243, 4294901760
    %v3330 = vsub.f32 %v3243, %v3329
    %v3331 = vand.u32 %v3330, 4294901760
    %v3332 = vsub.f32 %v3330, %v3331
    %v3333 = vand.u32 %v3332, 4294901760
    %3334 = vmatpush1.msra.mxu0 %v3333
    %3335 = vmatprep.subr.mxu0 0.0
    %v3336 = vand.u32 %v3244, 4294901760
    %v3337 = vsub.f32 %v3244, %v3336
    %v3338 = vand.u32 %v3337, 4294901760
    %v3339 = vsub.f32 %v3337, %v3338
    %v3340 = vand.u32 %v3339, 4294901760
    %3341 = vmatpush1.msra.mxu0 %v3340
    %3342 = vmatprep.subr.mxu0 0.0
    %v3343 = vand.u32 %v3245, 4294901760
    %v3344 = vsub.f32 %v3245, %v3343
    %v3345 = vand.u32 %v3344, 4294901760
    %v3346 = vsub.f32 %v3344, %v3345
    %v3347 = vand.u32 %v3346, 4294901760
    %3348 = vmatpush1.msra.mxu0 %v3347
    %3349 = vmatprep.subr.mxu0 0.0
    %v3350 = vand.u32 %v3246, 4294901760
    %v3351 = vsub.f32 %v3246, %v3350
    %v3352 = vand.u32 %v3351, 4294901760
    %v3353 = vsub.f32 %v3351, %v3352
    %v3354 = vand.u32 %v3353, 4294901760
    %3355 = vmatpush1.msra.mxu0 %v3354
    %3356 = vmatprep.subr.mxu0 0.0
    %v3357 = vand.u32 %v3247, 4294901760
    %v3358 = vsub.f32 %v3247, %v3357
    %v3359 = vand.u32 %v3358, 4294901760
    %v3360 = vsub.f32 %v3358, %v3359
    %v3361 = vand.u32 %v3360, 4294901760
    %3362 = vmatpush1.msra.mxu0 %v3361
    %3363 = vmatprep.subr.mxu0 0.0
    %3364 = vmatpush1.msra.mxu0 0.0
    %3365 = vmatprep.subr.mxu0 0.0
    %3366 = vmatpush1.msra.mxu0 0.0
    %3367 = vmatprep.subr.mxu0 0.0
    %3368 = vmatpush1.msra.mxu0 0.0
    %3369 = vmatprep.subr.mxu0 0.0
    %3370 = vmatpush1.msra.mxu0 0.0
    %3371 = vmatprep.subr.mxu0 0.0
    %3372 = vmatpush1.msra.mxu0 0.0
    %3373 = vmatprep.subr.mxu0 0.0
    %3374 = vmatpush1.msra.mxu0 0.0
    %3375 = vmatprep.subr.mxu0 0.0
    %3376 = vmatpush1.msra.mxu0 0.0
    %3377 = vmatprep.subr.mxu0 0.0
    %3378 = vmatpush1.msra.mxu0 0.0
    %3379 = vmatprep.subr.mxu0 0.0
    %3380 = vmatpush1.msra.mxu0 0.0
    %3381 = vmatprep.subr.mxu0 0.0
    %3382 = vmatpush1.msra.mxu0 0.0
    %3383 = vmatprep.subr.mxu0 0.0
    %3384 = vmatpush1.msra.mxu0 0.0
    %3385 = vmatprep.subr.mxu0 0.0
    %3386 = vmatpush1.msra.mxu0 0.0
    %3387 = vmatprep.subr.mxu0 0.0
    %3388 = vmatpush1.msra.mxu0 0.0
    %3389 = vmatprep.subr.mxu0 0.0
    %3390 = vmatpush1.msra.mxu0 0.0
    %3391 = vmatprep.subr.mxu0 0.0
    %3392 = vmatpush1.msra.mxu0 0.0
    %3393 = vmatprep.subr.mxu0 0.0
    %3394 = vmatpush1.msra.mxu0 0.0
    %3395 = vmatprep.subr.mxu0 0.0
    %3396 = vmatpush1.msra.mxu0 0.0
    %3397 = vmatprep.subr.mxu0 0.0
    %3398 = vmatpush1.msra.mxu0 0.0
    %3399 = vmatprep.subr.mxu0 0.0
    %3400 = vmatpush1.msra.mxu0 0.0
    %3401 = vmatprep.subr.mxu0 0.0
    %3402 = vmatpush1.msra.mxu0 0.0
    %3403 = vmatprep.subr.mxu0 0.0
    %3404 = vmatpush1.msra.mxu0 0.0
    %3405 = vmatprep.subr.mxu0 0.0
    %3406 = vmatpush1.msra.mxu0 0.0
    %3407 = vmatprep.subr.mxu0 0.0
    %3408 = vmatpush1.msra.mxu0 0.0
    %3409 = vmatprep.subr.mxu0 0.0
    %3410 = vmatpush1.msra.mxu0 0.0
    %3411 = vmatprep.subr.mxu0 0.0
    %3412 = vmatpush1.msra.mxu0 0.0
    %3413 = vmatprep.subr.mxu0 0.0
    %3414 = vmatpush1.msra.mxu0 0.0
    %3415 = vmatprep.subr.mxu0 0.0
    %3416 = vmatpush1.msra.mxu0 0.0
    %3417 = vmatprep.mubr.f32.mxu0 0.0
    %v3418 = vand.u32 %v2733, 4294901760
    %3419 = vmatmul.mubr.f32.gmra.mrb[0].mxu0 %v3418
    %v3420 = vpop.f32.mrb[0].mxu0
    %v3421 = vadd.f32 %v3325, %v3420
    %v3422 = vpop.f32.mrb[0].mxu0
    %3423 = vdwg.mxu0
    %3424 = vmatprep.subr.mxu0 0.0
    %v3425 = vand.u32 %v3243, 4294901760
    %v3426 = vsub.f32 %v3243, %v3425
    %3427 = vmatpush1.msra.mxu0 %v3426
    %3428 = vmatprep.subr.mxu0 0.0
    %v3429 = vand.u32 %v3244, 4294901760
    %v3430 = vsub.f32 %v3244, %v3429
    %3431 = vmatpush1.msra.mxu0 %v3430
    %3432 = vmatprep.subr.mxu0 0.0
    %v3433 = vand.u32 %v3245, 4294901760
    %v3434 = vsub.f32 %v3245, %v3433
    %3435 = vmatpush1.msra.mxu0 %v3434
    %3436 = vmatprep.subr.mxu0 0.0
    %v3437 = vand.u32 %v3246, 4294901760
    %v3438 = vsub.f32 %v3246, %v3437
    %3439 = vmatpush1.msra.mxu0 %v3438
    %3440 = vmatprep.subr.mxu0 0.0
    %v3441 = vand.u32 %v3247, 4294901760
    %v3442 = vsub.f32 %v3247, %v3441
    %3443 = vmatpush1.msra.mxu0 %v3442
    %3444 = vmatprep.subr.mxu0 0.0
    %3445 = vmatpush1.msra.mxu0 0.0
    %3446 = vmatprep.subr.mxu0 0.0
    %3447 = vmatpush1.msra.mxu0 0.0
    %3448 = vmatprep.subr.mxu0 0.0
    %3449 = vmatpush1.msra.mxu0 0.0
    %3450 = vmatprep.subr.mxu0 0.0
    %3451 = vmatpush1.msra.mxu0 0.0
    %3452 = vmatprep.subr.mxu0 0.0
    %3453 = vmatpush1.msra.mxu0 0.0
    %3454 = vmatprep.subr.mxu0 0.0
    %3455 = vmatpush1.msra.mxu0 0.0
    %3456 = vmatprep.subr.mxu0 0.0
    %3457 = vmatpush1.msra.mxu0 0.0
    %3458 = vmatprep.subr.mxu0 0.0
    %3459 = vmatpush1.msra.mxu0 0.0
    %3460 = vmatprep.subr.mxu0 0.0
    %3461 = vmatpush1.msra.mxu0 0.0
    %3462 = vmatprep.subr.mxu0 0.0
    %3463 = vmatpush1.msra.mxu0 0.0
    %3464 = vmatprep.subr.mxu0 0.0
    %3465 = vmatpush1.msra.mxu0 0.0
    %3466 = vmatprep.subr.mxu0 0.0
    %3467 = vmatpush1.msra.mxu0 0.0
    %3468 = vmatprep.subr.mxu0 0.0
    %3469 = vmatpush1.msra.mxu0 0.0
    %3470 = vmatprep.subr.mxu0 0.0
    %3471 = vmatpush1.msra.mxu0 0.0
    %3472 = vmatprep.subr.mxu0 0.0
    %3473 = vmatpush1.msra.mxu0 0.0
    %3474 = vmatprep.subr.mxu0 0.0
    %3475 = vmatpush1.msra.mxu0 0.0
    %3476 = vmatprep.subr.mxu0 0.0
    %3477 = vmatpush1.msra.mxu0 0.0
    %3478 = vmatprep.subr.mxu0 0.0
    %3479 = vmatpush1.msra.mxu0 0.0
    %3480 = vmatprep.subr.mxu0 0.0
    %3481 = vmatpush1.msra.mxu0 0.0
    %3482 = vmatprep.subr.mxu0 0.0
    %3483 = vmatpush1.msra.mxu0 0.0
    %3484 = vmatprep.subr.mxu0 0.0
    %3485 = vmatpush1.msra.mxu0 0.0
    %3486 = vmatprep.subr.mxu0 0.0
    %3487 = vmatpush1.msra.mxu0 0.0
    %3488 = vmatprep.subr.mxu0 0.0
    %3489 = vmatpush1.msra.mxu0 0.0
    %3490 = vmatprep.subr.mxu0 0.0
    %3491 = vmatpush1.msra.mxu0 0.0
    %3492 = vmatprep.subr.mxu0 0.0
    %3493 = vmatpush1.msra.mxu0 0.0
    %3494 = vmatprep.subr.mxu0 0.0
    %3495 = vmatpush1.msra.mxu0 0.0
    %3496 = vmatprep.subr.mxu0 0.0
    %3497 = vmatpush1.msra.mxu0 0.0
    %3498 = vmatprep.mubr.f32.mxu0 0.0
    %v3499 = vand.u32 %v2733, 4294901760
    %v3500 = vsub.f32 %v2733, %v3499
    %3501 = vmatmul.mubr.f32.gmra.mrb[0].mxu0 %v3500
    %v3502 = vpop.f32.mrb[0].mxu0
    %v3503 = vadd.f32 %v3421, %v3502
    %v3504 = vpop.f32.mrb[0].mxu0
    %3505 = vdwg.mxu0
    %3506 = vmatprep.subr.mxu0 0.0
    %v3507 = vand.u32 %v3243, 4294901760
    %3508 = vmatpush1.msra.mxu0 %v3507
    %3509 = vmatprep.subr.mxu0 0.0
    %v3510 = vand.u32 %v3244, 4294901760
    %3511 = vmatpush1.msra.mxu0 %v3510
    %3512 = vmatprep.subr.mxu0 0.0
    %v3513 = vand.u32 %v3245, 4294901760
    %3514 = vmatpush1.msra.mxu0 %v3513
    %3515 = vmatprep.subr.mxu0 0.0
    %v3516 = vand.u32 %v3246, 4294901760
    %3517 = vmatpush1.msra.mxu0 %v3516
    %3518 = vmatprep.subr.mxu0 0.0
    %v3519 = vand.u32 %v3247, 4294901760
    %3520 = vmatpush1.msra.mxu0 %v3519
    %3521 = vmatprep.subr.mxu0 0.0
    %3522 = vmatpush1.msra.mxu0 0.0
    %3523 = vmatprep.subr.mxu0 0.0
    %3524 = vmatpush1.msra.mxu0 0.0
    %3525 = vmatprep.subr.mxu0 0.0
    %3526 = vmatpush1.msra.mxu0 0.0
    %3527 = vmatprep.subr.mxu0 0.0
    %3528 = vmatpush1.msra.mxu0 0.0
    %3529 = vmatprep.subr.mxu0 0.0
    %3530 = vmatpush1.msra.mxu0 0.0
    %3531 = vmatprep.subr.mxu0 0.0
    %3532 = vmatpush1.msra.mxu0 0.0
    %3533 = vmatprep.subr.mxu0 0.0
    %3534 = vmatpush1.msra.mxu0 0.0
    %3535 = vmatprep.subr.mxu0 0.0
    %3536 = vmatpush1.msra.mxu0 0.0
    %3537 = vmatprep.subr.mxu0 0.0
    %3538 = vmatpush1.msra.mxu0 0.0
    %3539 = vmatprep.subr.mxu0 0.0
    %3540 = vmatpush1.msra.mxu0 0.0
    %3541 = vmatprep.subr.mxu0 0.0
    %3542 = vmatpush1.msra.mxu0 0.0
    %3543 = vmatprep.subr.mxu0 0.0
    %3544 = vmatpush1.msra.mxu0 0.0
    %3545 = vmatprep.subr.mxu0 0.0
    %3546 = vmatpush1.msra.mxu0 0.0
    %3547 = vmatprep.subr.mxu0 0.0
    %3548 = vmatpush1.msra.mxu0 0.0
    %3549 = vmatprep.subr.mxu0 0.0
    %3550 = vmatpush1.msra.mxu0 0.0
    %3551 = vmatprep.subr.mxu0 0.0
    %3552 = vmatpush1.msra.mxu0 0.0
    %3553 = vmatprep.subr.mxu0 0.0
    %3554 = vmatpush1.msra.mxu0 0.0
    %3555 = vmatprep.subr.mxu0 0.0
    %3556 = vmatpush1.msra.mxu0 0.0
    %3557 = vmatprep.subr.mxu0 0.0
    %3558 = vmatpush1.msra.mxu0 0.0
    %3559 = vmatprep.subr.mxu0 0.0
    %3560 = vmatpush1.msra.mxu0 0.0
    %3561 = vmatprep.subr.mxu0 0.0
    %3562 = vmatpush1.msra.mxu0 0.0
    %3563 = vmatprep.subr.mxu0 0.0
    %3564 = vmatpush1.msra.mxu0 0.0
    %3565 = vmatprep.subr.mxu0 0.0
    %3566 = vmatpush1.msra.mxu0 0.0
    %3567 = vmatprep.subr.mxu0 0.0
    %3568 = vmatpush1.msra.mxu0 0.0
    %3569 = vmatprep.subr.mxu0 0.0
    %3570 = vmatpush1.msra.mxu0 0.0
    %3571 = vmatprep.subr.mxu0 0.0
    %3572 = vmatpush1.msra.mxu0 0.0
    %3573 = vmatprep.subr.mxu0 0.0
    %3574 = vmatpush1.msra.mxu0 0.0
    %3575 = vmatprep.mubr.f32.mxu0 0.0
    %v3576 = vand.u32 %v2733, 4294901760
    %v3577 = vsub.f32 %v2733, %v3576
    %v3578 = vand.u32 %v3577, 4294901760
    %3579 = vmatmul.mubr.f32.gmra.mrb[0].mxu0 %v3578
    %v3580 = vpop.f32.mrb[0].mxu0
    %v3581 = vadd.f32 %v3503, %v3580
    %v3582 = vpop.f32.mrb[0].mxu0
    %3583 = vdwg.mxu0
    %3584 = vmatprep.subr.mxu0 0.0
    %v3585 = vand.u32 %v3243, 4294901760
    %v3586 = vsub.f32 %v3243, %v3585
    %v3587 = vand.u32 %v3586, 4294901760
    %3588 = vmatpush1.msra.mxu0 %v3587
    %3589 = vmatprep.subr.mxu0 0.0
    %v3590 = vand.u32 %v3244, 4294901760
    %v3591 = vsub.f32 %v3244, %v3590
    %v3592 = vand.u32 %v3591, 4294901760
    %3593 = vmatpush1.msra.mxu0 %v3592
    %3594 = vmatprep.subr.mxu0 0.0
    %v3595 = vand.u32 %v3245, 4294901760
    %v3596 = vsub.f32 %v3245, %v3595
    %v3597 = vand.u32 %v3596, 4294901760
    %3598 = vmatpush1.msra.mxu0 %v3597
    %3599 = vmatprep.subr.mxu0 0.0
    %v3600 = vand.u32 %v3246, 4294901760
    %v3601 = vsub.f32 %v3246, %v3600
    %v3602 = vand.u32 %v3601, 4294901760
    %3603 = vmatpush1.msra.mxu0 %v3602
    %3604 = vmatprep.subr.mxu0 0.0
    %v3605 = vand.u32 %v3247, 4294901760
    %v3606 = vsub.f32 %v3247, %v3605
    %v3607 = vand.u32 %v3606, 4294901760
    %3608 = vmatpush1.msra.mxu0 %v3607
    %3609 = vmatprep.subr.mxu0 0.0
    %3610 = vmatpush1.msra.mxu0 0.0
    %3611 = vmatprep.subr.mxu0 0.0
    %3612 = vmatpush1.msra.mxu0 0.0
    %3613 = vmatprep.subr.mxu0 0.0
    %3614 = vmatpush1.msra.mxu0 0.0
    %3615 = vmatprep.subr.mxu0 0.0
    %3616 = vmatpush1.msra.mxu0 0.0
    %3617 = vmatprep.subr.mxu0 0.0
    %3618 = vmatpush1.msra.mxu0 0.0
    %3619 = vmatprep.subr.mxu0 0.0
    %3620 = vmatpush1.msra.mxu0 0.0
    %3621 = vmatprep.subr.mxu0 0.0
    %3622 = vmatpush1.msra.mxu0 0.0
    %3623 = vmatprep.subr.mxu0 0.0
    %3624 = vmatpush1.msra.mxu0 0.0
    %3625 = vmatprep.subr.mxu0 0.0
    %3626 = vmatpush1.msra.mxu0 0.0
    %3627 = vmatprep.subr.mxu0 0.0
    %3628 = vmatpush1.msra.mxu0 0.0
    %3629 = vmatprep.subr.mxu0 0.0
    %3630 = vmatpush1.msra.mxu0 0.0
    %3631 = vmatprep.subr.mxu0 0.0
    %3632 = vmatpush1.msra.mxu0 0.0
    %3633 = vmatprep.subr.mxu0 0.0
    %3634 = vmatpush1.msra.mxu0 0.0
    %3635 = vmatprep.subr.mxu0 0.0
    %3636 = vmatpush1.msra.mxu0 0.0
    %3637 = vmatprep.subr.mxu0 0.0
    %3638 = vmatpush1.msra.mxu0 0.0
    %3639 = vmatprep.subr.mxu0 0.0
    %3640 = vmatpush1.msra.mxu0 0.0
    %3641 = vmatprep.subr.mxu0 0.0
    %3642 = vmatpush1.msra.mxu0 0.0
    %3643 = vmatprep.subr.mxu0 0.0
    %3644 = vmatpush1.msra.mxu0 0.0
    %3645 = vmatprep.subr.mxu0 0.0
    %3646 = vmatpush1.msra.mxu0 0.0
    %3647 = vmatprep.subr.mxu0 0.0
    %3648 = vmatpush1.msra.mxu0 0.0
    %3649 = vmatprep.subr.mxu0 0.0
    %3650 = vmatpush1.msra.mxu0 0.0
    %3651 = vmatprep.subr.mxu0 0.0
    %3652 = vmatpush1.msra.mxu0 0.0
    %3653 = vmatprep.subr.mxu0 0.0
    %3654 = vmatpush1.msra.mxu0 0.0
    %3655 = vmatprep.subr.mxu0 0.0
    %3656 = vmatpush1.msra.mxu0 0.0
    %3657 = vmatprep.subr.mxu0 0.0
    %3658 = vmatpush1.msra.mxu0 0.0
    %3659 = vmatprep.subr.mxu0 0.0
    %3660 = vmatpush1.msra.mxu0 0.0
    %3661 = vmatprep.subr.mxu0 0.0
    %3662 = vmatpush1.msra.mxu0 0.0
    %3663 = vmatprep.mubr.f32.mxu0 0.0
    %v3664 = vand.u32 %v2733, 4294901760
    %3665 = vmatmul.mubr.f32.gmra.mrb[0].mxu0 %v3664
    %v3666 = vpop.f32.mrb[0].mxu0
    %v3667 = vadd.f32 %v3581, %v3666
    %v3668 = vpop.f32.mrb[0].mxu0
    %3669 = vdwg.mxu0
    %3670 = vmatprep.subr.mxu0 0.0
    %v3671 = vand.u32 %v3243, 4294901760
    %3672 = vmatpush1.msra.mxu0 %v3671
    %3673 = vmatprep.subr.mxu0 0.0
    %v3674 = vand.u32 %v3244, 4294901760
    %3675 = vmatpush1.msra.mxu0 %v3674
    %3676 = vmatprep.subr.mxu0 0.0
    %v3677 = vand.u32 %v3245, 4294901760
    %3678 = vmatpush1.msra.mxu0 %v3677
    %3679 = vmatprep.subr.mxu0 0.0
    %v3680 = vand.u32 %v3246, 4294901760
    %3681 = vmatpush1.msra.mxu0 %v3680
    %3682 = vmatprep.subr.mxu0 0.0
    %v3683 = vand.u32 %v3247, 4294901760
    %3684 = vmatpush1.msra.mxu0 %v3683
    %3685 = vmatprep.subr.mxu0 0.0
    %3686 = vmatpush1.msra.mxu0 0.0
    %3687 = vmatprep.subr.mxu0 0.0
    %3688 = vmatpush1.msra.mxu0 0.0
    %3689 = vmatprep.subr.mxu0 0.0
    %3690 = vmatpush1.msra.mxu0 0.0
    %3691 = vmatprep.subr.mxu0 0.0
    %3692 = vmatpush1.msra.mxu0 0.0
    %3693 = vmatprep.subr.mxu0 0.0
    %3694 = vmatpush1.msra.mxu0 0.0
    %3695 = vmatprep.subr.mxu0 0.0
    %3696 = vmatpush1.msra.mxu0 0.0
    %3697 = vmatprep.subr.mxu0 0.0
    %3698 = vmatpush1.msra.mxu0 0.0
    %3699 = vmatprep.subr.mxu0 0.0
    %3700 = vmatpush1.msra.mxu0 0.0
    %3701 = vmatprep.subr.mxu0 0.0
    %3702 = vmatpush1.msra.mxu0 0.0
    %3703 = vmatprep.subr.mxu0 0.0
    %3704 = vmatpush1.msra.mxu0 0.0
    %3705 = vmatprep.subr.mxu0 0.0
    %3706 = vmatpush1.msra.mxu0 0.0
    %3707 = vmatprep.subr.mxu0 0.0
    %3708 = vmatpush1.msra.mxu0 0.0
    %3709 = vmatprep.subr.mxu0 0.0
    %3710 = vmatpush1.msra.mxu0 0.0
    %3711 = vmatprep.subr.mxu0 0.0
    %3712 = vmatpush1.msra.mxu0 0.0
    %3713 = vmatprep.subr.mxu0 0.0
    %3714 = vmatpush1.msra.mxu0 0.0
    %3715 = vmatprep.subr.mxu0 0.0
    %3716 = vmatpush1.msra.mxu0 0.0
    %3717 = vmatprep.subr.mxu0 0.0
    %3718 = vmatpush1.msra.mxu0 0.0
    %3719 = vmatprep.subr.mxu0 0.0
    %3720 = vmatpush1.msra.mxu0 0.0
    %3721 = vmatprep.subr.mxu0 0.0
    %3722 = vmatpush1.msra.mxu0 0.0
    %3723 = vmatprep.subr.mxu0 0.0
    %3724 = vmatpush1.msra.mxu0 0.0
    %3725 = vmatprep.subr.mxu0 0.0
    %3726 = vmatpush1.msra.mxu0 0.0
    %3727 = vmatprep.subr.mxu0 0.0
    %3728 = vmatpush1.msra.mxu0 0.0
    %3729 = vmatprep.subr.mxu0 0.0
    %3730 = vmatpush1.msra.mxu0 0.0
    %3731 = vmatprep.subr.mxu0 0.0
    %3732 = vmatpush1.msra.mxu0 0.0
    %3733 = vmatprep.subr.mxu0 0.0
    %3734 = vmatpush1.msra.mxu0 0.0
    %3735 = vmatprep.subr.mxu0 0.0
    %3736 = vmatpush1.msra.mxu0 0.0
    %3737 = vmatprep.subr.mxu0 0.0
    %3738 = vmatpush1.msra.mxu0 0.0
    %3739 = vmatprep.mubr.f32.mxu0 0.0
    %v3740 = vand.u32 %v2733, 4294901760
    %3741 = vmatmul.mubr.f32.gmra.mrb[0].mxu0 %v3740
    %v3742 = vpop.f32.mrb[0].mxu0
    %v3743 = vadd.f32 %v3667, %v3742
    %v3744 = vpop.f32.mrb[0].mxu0
    %3745 = vdwg.mxu0
    %v3746 = vmul.f32 %v3743, 0.025
    %v3747 = vadd.f32 %v3746, 1e-05
    %v3748 = vrsqrt.pop %v3747
    %v3749 = vmul.f32 %v14, %v3748
    %v3750 = vlaneseq
    %v3751 = vshrl.u32 %v3750, 7
    %v3752 = vsub.s32 0, %v3751
    %v3753 = vrot.slane %v3749, %v3752
    %v3754 = vmul.f32 %v3238, %v3753
    %v3755 = vmul.f32 %v3239, %v3753
    %v3756 = vmul.f32 %v3240, %v3753
    %v3757 = vmul.f32 %v3241, %v3753
    %v3758 = vmul.f32 %v3242, %v3753
    %v3759 = vlaneseq
    %v3760 = vshrl.u32 %v3759, 7
    %v3761 = vsub.s32 0, %v3760
    %v3762 = vrot.slane %v15, %v3761
    %v3763 = vadd.f32 %v3754, %v3762
    %v3764 = vadd.f32 %v3755, %v3762
    %v3765 = vadd.f32 %v3756, %v3762
    %v3766 = vadd.f32 %v3757, %v3762
    %v3767 = vadd.f32 %v3758, %v3762
    %v3768 = vmul.f32 %v3763, 0.01
    %v3769 = vmul.f32 %v3764, 0.01
    %v3770 = vmul.f32 %v3765, 0.01
    %v3771 = vmul.f32 %v3766, 0.01
    %v3772 = vmul.f32 %v3767, 0.01
    %v3773 = vmax.f32 %v3763, %v3768
    %v3774 = vmax.f32 %v3764, %v3769
    %v3775 = vmax.f32 %v3765, %v3770
    %v3776 = vmax.f32 %v3766, %v3771
    %v3777 = vmax.f32 %v3767, %v3772
    %3778 = vst [vmem:[#allocation3] sm:$0xff] %v3773
    %3779 = vst [vmem:[#allocation3 + $0x8] sm:$0xff] %v3774
    %3780 = vst [vmem:[#allocation3 + $0x10] sm:$0xff] %v3775
    %3781 = vst [vmem:[#allocation3 + $0x18] sm:$0xff] %v3776
    %3782 = vst [vmem:[#allocation3 + $0x20] sm:$0xff] %v3777
    %v3783 = vld [vmem:[#allocation3] sm:$0xf]
    %v3784 = vld [vmem:[%s1 + $0x100] sm:$0xff]
    %v3785 = vld [vmem:[%s1 + $0x108] sm:$0xff]
    %v3786 = vld [vmem:[#allocation3 + $0x4] sm:$0xf]
    %v3787 = vld [vmem:[%s1 + $0x110] sm:$0xff]
    %v3788 = vld [vmem:[%s1 + $0x118] sm:$0xff]
    %v3790 = vsel %vm34, %v3786, 0
    %3792 = vmatprep.subr.mxu0 0.0
    %3793 = vmatpush1.msra.mxu0 %v3787
    %3794 = vmatprep.subr.mxu0 0.0
    %3795 = vmatpush1.msra.mxu0 %v3788
    %3796 = vmatprep.subr.mxu0 0.0
    %3797 = vmatpush1.msra.mxu0 0.0
    %3798 = vmatprep.subr.mxu0 0.0
    %3799 = vmatpush1.msra.mxu0 0.0
    %3800 = vmatprep.subr.mxu0 0.0
    %3801 = vmatpush1.msra.mxu0 0.0
    %3802 = vmatprep.subr.mxu0 0.0
    %3803 = vmatpush1.msra.mxu0 0.0
    %3804 = vmatprep.subr.mxu0 0.0
    %3805 = vmatpush1.msra.mxu0 0.0
    %3806 = vmatprep.subr.mxu0 0.0
    %3807 = vmatpush1.msra.mxu0 0.0
    %3808 = vmatprep.subr.mxu0 0.0
    %3809 = vmatpush1.msra.mxu0 0.0
    %3810 = vmatprep.subr.mxu0 0.0
    %3811 = vmatpush1.msra.mxu0 0.0
    %3812 = vmatprep.subr.mxu0 0.0
    %3813 = vmatpush1.msra.mxu0 0.0
    %3814 = vmatprep.subr.mxu0 0.0
    %3815 = vmatpush1.msra.mxu0 0.0
    %3816 = vmatprep.subr.mxu0 0.0
    %3817 = vmatpush1.msra.mxu0 0.0
    %3818 = vmatprep.subr.mxu0 0.0
    %3819 = vmatpush1.msra.mxu0 0.0
    %3820 = vmatprep.subr.mxu0 0.0
    %3821 = vmatpush1.msra.mxu0 0.0
    %3822 = vmatprep.subr.mxu0 0.0
    %3823 = vmatpush1.msra.mxu0 0.0
    %3824 = vmatprep.subr.mxu0 0.0
    %3825 = vmatpush1.msra.mxu0 0.0
    %3826 = vmatprep.subr.mxu0 0.0
    %3827 = vmatpush1.msra.mxu0 0.0
    %3828 = vmatprep.subr.mxu0 0.0
    %3829 = vmatpush1.msra.mxu0 0.0
    %3830 = vmatprep.subr.mxu0 0.0
    %3831 = vmatpush1.msra.mxu0 0.0
    %3832 = vmatprep.subr.mxu0 0.0
    %3833 = vmatpush1.msra.mxu0 0.0
    %3834 = vmatprep.subr.mxu0 0.0
    %3835 = vmatpush1.msra.mxu0 0.0
    %3836 = vmatprep.subr.mxu0 0.0
    %3837 = vmatpush1.msra.mxu0 0.0
    %3838 = vmatprep.subr.mxu0 0.0
    %3839 = vmatpush1.msra.mxu0 0.0
    %3840 = vmatprep.subr.mxu0 0.0
    %3841 = vmatpush1.msra.mxu0 0.0
    %3842 = vmatprep.subr.mxu0 0.0
    %3843 = vmatpush1.msra.mxu0 0.0
    %3844 = vmatprep.subr.mxu0 0.0
    %3845 = vmatpush1.msra.mxu0 0.0
    %3846 = vmatprep.subr.mxu0 0.0
    %3847 = vmatpush1.msra.mxu0 0.0
    %3848 = vmatprep.subr.mxu0 0.0
    %3849 = vmatpush1.msra.mxu0 0.0
    %3850 = vmatprep.subr.mxu0 0.0
    %3851 = vmatpush1.msra.mxu0 0.0
    %3852 = vmatprep.subr.mxu0 0.0
    %3853 = vmatpush1.msra.mxu0 0.0
    %3854 = vmatprep.subr.mxu0 0.0
    %3855 = vmatpush1.msra.mxu0 0.0
    %3856 = vmatprep.mubr.f32.mxu0 0.0
    %3857 = vmatmul.mubr.f32.gmra.mrb[0].mxu0 %v3790
    %v3858 = vpop.f32.mrb[0].mxu0
    %v3859 = vadd.f32 0.0, %v3858
    %v3860 = vpop.f32.mrb[0].mxu0
    %3861 = vdwg.mxu0
    %v3863 = vsel %vm34, %v3783, 0
    %3865 = vmatprep.subr.mxu0 0.0
    %3866 = vmatpush1.msra.mxu0 %v3784
    %3867 = vmatprep.subr.mxu0 0.0
    %3868 = vmatpush1.msra.mxu0 %v3785
    %3869 = vmatprep.subr.mxu0 0.0
    %3870 = vmatpush1.msra.mxu0 0.0
    %3871 = vmatprep.subr.mxu0 0.0
    %3872 = vmatpush1.msra.mxu0 0.0
    %3873 = vmatprep.subr.mxu0 0.0
    %3874 = vmatpush1.msra.mxu0 0.0
    %3875 = vmatprep.subr.mxu0 0.0
    %3876 = vmatpush1.msra.mxu0 0.0
    %3877 = vmatprep.subr.mxu0 0.0
    %3878 = vmatpush1.msra.mxu0 0.0
    %3879 = vmatprep.subr.mxu0 0.0
    %3880 = vmatpush1.msra.mxu0 0.0
    %3881 = vmatprep.subr.mxu0 0.0
    %3882 = vmatpush1.msra.mxu0 0.0
    %3883 = vmatprep.subr.mxu0 0.0
    %3884 = vmatpush1.msra.mxu0 0.0
    %3885 = vmatprep.subr.mxu0 0.0
    %3886 = vmatpush1.msra.mxu0 0.0
    %3887 = vmatprep.subr.mxu0 0.0
    %3888 = vmatpush1.msra.mxu0 0.0
    %3889 = vmatprep.subr.mxu0 0.0
    %3890 = vmatpush1.msra.mxu0 0.0
    %3891 = vmatprep.subr.mxu0 0.0
    %3892 = vmatpush1.msra.mxu0 0.0
    %3893 = vmatprep.subr.mxu0 0.0
    %3894 = vmatpush1.msra.mxu0 0.0
    %3895 = vmatprep.subr.mxu0 0.0
    %3896 = vmatpush1.msra.mxu0 0.0
    %3897 = vmatprep.subr.mxu0 0.0
    %3898 = vmatpush1.msra.mxu0 0.0
    %3899 = vmatprep.subr.mxu0 0.0
    %3900 = vmatpush1.msra.mxu0 0.0
    %3901 = vmatprep.subr.mxu0 0.0
    %3902 = vmatpush1.msra.mxu0 0.0
    %3903 = vmatprep.subr.mxu0 0.0
    %3904 = vmatpush1.msra.mxu0 0.0
    %3905 = vmatprep.subr.mxu0 0.0
    %3906 = vmatpush1.msra.mxu0 0.0
    %3907 = vmatprep.subr.mxu0 0.0
    %3908 = vmatpush1.msra.mxu0 0.0
    %3909 = vmatprep.subr.mxu0 0.0
    %3910 = vmatpush1.msra.mxu0 0.0
    %3911 = vmatprep.subr.mxu0 0.0
    %3912 = vmatpush1.msra.mxu0 0.0
    %3913 = vmatprep.subr.mxu0 0.0
    %3914 = vmatpush1.msra.mxu0 0.0
    %3915 = vmatprep.subr.mxu0 0.0
    %3916 = vmatpush1.msra.mxu0 0.0
    %3917 = vmatprep.subr.mxu0 0.0
    %3918 = vmatpush1.msra.mxu0 0.0
    %3919 = vmatprep.subr.mxu0 0.0
    %3920 = vmatpush1.msra.mxu0 0.0
    %3921 = vmatprep.subr.mxu0 0.0
    %3922 = vmatpush1.msra.mxu0 0.0
    %3923 = vmatprep.subr.mxu0 0.0
    %3924 = vmatpush1.msra.mxu0 0.0
    %3925 = vmatprep.subr.mxu0 0.0
    %3926 = vmatpush1.msra.mxu0 0.0
    %3927 = vmatprep.subr.mxu0 0.0
    %3928 = vmatpush1.msra.mxu0 0.0
    %3929 = vmatprep.mubr.f32.mxu0 0.0
    %3930 = vmatmul.mubr.f32.gmra.mrb[0].mxu0 %v3863
    %v3931 = vpop.f32.mrb[0].mxu0
    %v3932 = vadd.f32 %v3859, %v3931
    %v3933 = vpop.f32.mrb[0].mxu0
    %3934 = vdwg.mxu0
    %v3935 = vld [vmem:[#allocation3 + $0x8] sm:$0xf]
    %v3936 = vld [vmem:[%s1 + $0x120] sm:$0xff]
    %v3937 = vld [vmem:[%s1 + $0x128] sm:$0xff]
    %v3939 = vsel %vm34, %v3935, 0
    %3941 = vmatprep.subr.mxu0 0.0
    %3942 = vmatpush1.msra.mxu0 %v3936
    %3943 = vmatprep.subr.mxu0 0.0
    %3944 = vmatpush1.msra.mxu0 %v3937
    %3945 = vmatprep.subr.mxu0 0.0
    %3946 = vmatpush1.msra.mxu0 0.0
    %3947 = vmatprep.subr.mxu0 0.0
    %3948 = vmatpush1.msra.mxu0 0.0
    %3949 = vmatprep.subr.mxu0 0.0
    %3950 = vmatpush1.msra.mxu0 0.0
    %3951 = vmatprep.subr.mxu0 0.0
    %3952 = vmatpush1.msra.mxu0 0.0
    %3953 = vmatprep.subr.mxu0 0.0
    %3954 = vmatpush1.msra.mxu0 0.0
    %3955 = vmatprep.subr.mxu0 0.0
    %3956 = vmatpush1.msra.mxu0 0.0
    %3957 = vmatprep.subr.mxu0 0.0
    %3958 = vmatpush1.msra.mxu0 0.0
    %3959 = vmatprep.subr.mxu0 0.0
    %3960 = vmatpush1.msra.mxu0 0.0
    %3961 = vmatprep.subr.mxu0 0.0
    %3962 = vmatpush1.msra.mxu0 0.0
    %3963 = vmatprep.subr.mxu0 0.0
    %3964 = vmatpush1.msra.mxu0 0.0
    %3965 = vmatprep.subr.mxu0 0.0
    %3966 = vmatpush1.msra.mxu0 0.0
    %3967 = vmatprep.subr.mxu0 0.0
    %3968 = vmatpush1.msra.mxu0 0.0
    %3969 = vmatprep.subr.mxu0 0.0
    %3970 = vmatpush1.msra.mxu0 0.0
    %3971 = vmatprep.subr.mxu0 0.0
    %3972 = vmatpush1.msra.mxu0 0.0
    %3973 = vmatprep.subr.mxu0 0.0
    %3974 = vmatpush1.msra.mxu0 0.0
    %3975 = vmatprep.subr.mxu0 0.0
    %3976 = vmatpush1.msra.mxu0 0.0
    %3977 = vmatprep.subr.mxu0 0.0
    %3978 = vmatpush1.msra.mxu0 0.0
    %3979 = vmatprep.subr.mxu0 0.0
    %3980 = vmatpush1.msra.mxu0 0.0
    %3981 = vmatprep.subr.mxu0 0.0
    %3982 = vmatpush1.msra.mxu0 0.0
    %3983 = vmatprep.subr.mxu0 0.0
    %3984 = vmatpush1.msra.mxu0 0.0
    %3985 = vmatprep.subr.mxu0 0.0
    %3986 = vmatpush1.msra.mxu0 0.0
    %3987 = vmatprep.subr.mxu0 0.0
    %3988 = vmatpush1.msra.mxu0 0.0
    %3989 = vmatprep.subr.mxu0 0.0
    %3990 = vmatpush1.msra.mxu0 0.0
    %3991 = vmatprep.subr.mxu0 0.0
    %3992 = vmatpush1.msra.mxu0 0.0
    %3993 = vmatprep.subr.mxu0 0.0
    %3994 = vmatpush1.msra.mxu0 0.0
    %3995 = vmatprep.subr.mxu0 0.0
    %3996 = vmatpush1.msra.mxu0 0.0
    %3997 = vmatprep.subr.mxu0 0.0
    %3998 = vmatpush1.msra.mxu0 0.0
    %3999 = vmatprep.subr.mxu0 0.0
    %4000 = vmatpush1.msra.mxu0 0.0
    %4001 = vmatprep.subr.mxu0 0.0
    %4002 = vmatpush1.msra.mxu0 0.0
    %4003 = vmatprep.subr.mxu0 0.0
    %4004 = vmatpush1.msra.mxu0 0.0
    %4005 = vmatprep.mubr.f32.mxu0 0.0
    %4006 = vmatmul.mubr.f32.gmra.mrb[0].mxu0 %v3939
    %v4007 = vpop.f32.mrb[0].mxu0
    %v4008 = vadd.f32 0.0, %v4007
    %v4009 = vpop.f32.mrb[0].mxu0
    %4010 = vdwg.mxu0
    %v4011 = vadd.f32 %v3932, %v4008
    %v4012 = vld [vmem:[#allocation3 + $0xc] sm:$0xf]
    %v4013 = vld [vmem:[%s1 + $0x130] sm:$0xff]
    %v4014 = vld [vmem:[%s1 + $0x138] sm:$0xff]
    %v4016 = vsel %vm34, %v4012, 0
    %4018 = vmatprep.subr.mxu0 0.0
    %4019 = vmatpush1.msra.mxu0 %v4013
    %4020 = vmatprep.subr.mxu0 0.0
    %4021 = vmatpush1.msra.mxu0 %v4014
    %4022 = vmatprep.subr.mxu0 0.0
    %4023 = vmatpush1.msra.mxu0 0.0
    %4024 = vmatprep.subr.mxu0 0.0
    %4025 = vmatpush1.msra.mxu0 0.0
    %4026 = vmatprep.subr.mxu0 0.0
    %4027 = vmatpush1.msra.mxu0 0.0
    %4028 = vmatprep.subr.mxu0 0.0
    %4029 = vmatpush1.msra.mxu0 0.0
    %4030 = vmatprep.subr.mxu0 0.0
    %4031 = vmatpush1.msra.mxu0 0.0
    %4032 = vmatprep.subr.mxu0 0.0
    %4033 = vmatpush1.msra.mxu0 0.0
    %4034 = vmatprep.subr.mxu0 0.0
    %4035 = vmatpush1.msra.mxu0 0.0
    %4036 = vmatprep.subr.mxu0 0.0
    %4037 = vmatpush1.msra.mxu0 0.0
    %4038 = vmatprep.subr.mxu0 0.0
    %4039 = vmatpush1.msra.mxu0 0.0
    %4040 = vmatprep.subr.mxu0 0.0
    %4041 = vmatpush1.msra.mxu0 0.0
    %4042 = vmatprep.subr.mxu0 0.0
    %4043 = vmatpush1.msra.mxu0 0.0
    %4044 = vmatprep.subr.mxu0 0.0
    %4045 = vmatpush1.msra.mxu0 0.0
    %4046 = vmatprep.subr.mxu0 0.0
    %4047 = vmatpush1.msra.mxu0 0.0
    %4048 = vmatprep.subr.mxu0 0.0
    %4049 = vmatpush1.msra.mxu0 0.0
    %4050 = vmatprep.subr.mxu0 0.0
    %4051 = vmatpush1.msra.mxu0 0.0
    %4052 = vmatprep.subr.mxu0 0.0
    %4053 = vmatpush1.msra.mxu0 0.0
    %4054 = vmatprep.subr.mxu0 0.0
    %4055 = vmatpush1.msra.mxu0 0.0
    %4056 = vmatprep.subr.mxu0 0.0
    %4057 = vmatpush1.msra.mxu0 0.0
    %4058 = vmatprep.subr.mxu0 0.0
    %4059 = vmatpush1.msra.mxu0 0.0
    %4060 = vmatprep.subr.mxu0 0.0
    %4061 = vmatpush1.msra.mxu0 0.0
    %4062 = vmatprep.subr.mxu0 0.0
    %4063 = vmatpush1.msra.mxu0 0.0
    %4064 = vmatprep.subr.mxu0 0.0
    %4065 = vmatpush1.msra.mxu0 0.0
    %4066 = vmatprep.subr.mxu0 0.0
    %4067 = vmatpush1.msra.mxu0 0.0
    %4068 = vmatprep.subr.mxu0 0.0
    %4069 = vmatpush1.msra.mxu0 0.0
    %4070 = vmatprep.subr.mxu0 0.0
    %4071 = vmatpush1.msra.mxu0 0.0
    %4072 = vmatprep.subr.mxu0 0.0
    %4073 = vmatpush1.msra.mxu0 0.0
    %4074 = vmatprep.subr.mxu0 0.0
    %4075 = vmatpush1.msra.mxu0 0.0
    %4076 = vmatprep.subr.mxu0 0.0
    %4077 = vmatpush1.msra.mxu0 0.0
    %4078 = vmatprep.subr.mxu0 0.0
    %4079 = vmatpush1.msra.mxu0 0.0
    %4080 = vmatprep.subr.mxu0 0.0
    %4081 = vmatpush1.msra.mxu0 0.0
    %4082 = vmatprep.mubr.f32.mxu0 0.0
    %4083 = vmatmul.mubr.f32.gmra.mrb[0].mxu0 %v4016
    %v4084 = vpop.f32.mrb[0].mxu0
    %v4085 = vadd.f32 0.0, %v4084
    %v4086 = vpop.f32.mrb[0].mxu0
    %4087 = vdwg.mxu0
    %v4088 = vadd.f32 %v4011, %v4085
    %v4089 = vld [vmem:[#allocation3 + $0x10] sm:$0xf]
    %v4090 = vld [vmem:[%s1 + $0x140] sm:$0xff]
    %v4091 = vld [vmem:[%s1 + $0x148] sm:$0xff]
    %v4093 = vsel %vm34, %v4089, 0
    %4095 = vmatprep.subr.mxu0 0.0
    %4096 = vmatpush1.msra.mxu0 %v4090
    %4097 = vmatprep.subr.mxu0 0.0
    %4098 = vmatpush1.msra.mxu0 %v4091
    %4099 = vmatprep.subr.mxu0 0.0
    %4100 = vmatpush1.msra.mxu0 0.0
    %4101 = vmatprep.subr.mxu0 0.0
    %4102 = vmatpush1.msra.mxu0 0.0
    %4103 = vmatprep.subr.mxu0 0.0
    %4104 = vmatpush1.msra.mxu0 0.0
    %4105 = vmatprep.subr.mxu0 0.0
    %4106 = vmatpush1.msra.mxu0 0.0
    %4107 = vmatprep.subr.mxu0 0.0
    %4108 = vmatpush1.msra.mxu0 0.0
    %4109 = vmatprep.subr.mxu0 0.0
    %4110 = vmatpush1.msra.mxu0 0.0
    %4111 = vmatprep.subr.mxu0 0.0
    %4112 = vmatpush1.msra.mxu0 0.0
    %4113 = vmatprep.subr.mxu0 0.0
    %4114 = vmatpush1.msra.mxu0 0.0
    %4115 = vmatprep.subr.mxu0 0.0
    %4116 = vmatpush1.msra.mxu0 0.0
    %4117 = vmatprep.subr.mxu0 0.0
    %4118 = vmatpush1.msra.mxu0 0.0
    %4119 = vmatprep.subr.mxu0 0.0
    %4120 = vmatpush1.msra.mxu0 0.0
    %4121 = vmatprep.subr.mxu0 0.0
    %4122 = vmatpush1.msra.mxu0 0.0
    %4123 = vmatprep.subr.mxu0 0.0
    %4124 = vmatpush1.msra.mxu0 0.0
    %4125 = vmatprep.subr.mxu0 0.0
    %4126 = vmatpush1.msra.mxu0 0.0
    %4127 = vmatprep.subr.mxu0 0.0
    %4128 = vmatpush1.msra.mxu0 0.0
    %4129 = vmatprep.subr.mxu0 0.0
    %4130 = vmatpush1.msra.mxu0 0.0
    %4131 = vmatprep.subr.mxu0 0.0
    %4132 = vmatpush1.msra.mxu0 0.0
    %4133 = vmatprep.subr.mxu0 0.0
    %4134 = vmatpush1.msra.mxu0 0.0
    %4135 = vmatprep.subr.mxu0 0.0
    %4136 = vmatpush1.msra.mxu0 0.0
    %4137 = vmatprep.subr.mxu0 0.0
    %4138 = vmatpush1.msra.mxu0 0.0
    %4139 = vmatprep.subr.mxu0 0.0
    %4140 = vmatpush1.msra.mxu0 0.0
    %4141 = vmatprep.subr.mxu0 0.0
    %4142 = vmatpush1.msra.mxu0 0.0
    %4143 = vmatprep.subr.mxu0 0.0
    %4144 = vmatpush1.msra.mxu0 0.0
    %4145 = vmatprep.subr.mxu0 0.0
    %4146 = vmatpush1.msra.mxu0 0.0
    %4147 = vmatprep.subr.mxu0 0.0
    %4148 = vmatpush1.msra.mxu0 0.0
    %4149 = vmatprep.subr.mxu0 0.0
    %4150 = vmatpush1.msra.mxu0 0.0
    %4151 = vmatprep.subr.mxu0 0.0
    %4152 = vmatpush1.msra.mxu0 0.0
    %4153 = vmatprep.subr.mxu0 0.0
    %4154 = vmatpush1.msra.mxu0 0.0
    %4155 = vmatprep.subr.mxu0 0.0
    %4156 = vmatpush1.msra.mxu0 0.0
    %4157 = vmatprep.subr.mxu0 0.0
    %4158 = vmatpush1.msra.mxu0 0.0
    %4159 = vmatprep.mubr.f32.mxu0 0.0
    %4160 = vmatmul.mubr.f32.gmra.mrb[0].mxu0 %v4093
    %v4161 = vpop.f32.mrb[0].mxu0
    %v4162 = vadd.f32 0.0, %v4161
    %v4163 = vpop.f32.mrb[0].mxu0
    %4164 = vdwg.mxu0
    %v4165 = vadd.f32 %v4088, %v4162
    %v4166 = vld [vmem:[#allocation3 + $0x14] sm:$0xf]
    %v4167 = vld [vmem:[%s1 + $0x150] sm:$0xff]
    %v4168 = vld [vmem:[%s1 + $0x158] sm:$0xff]
    %v4170 = vsel %vm34, %v4166, 0
    %4172 = vmatprep.subr.mxu0 0.0
    %4173 = vmatpush1.msra.mxu0 %v4167
    %4174 = vmatprep.subr.mxu0 0.0
    %4175 = vmatpush1.msra.mxu0 %v4168
    %4176 = vmatprep.subr.mxu0 0.0
    %4177 = vmatpush1.msra.mxu0 0.0
    %4178 = vmatprep.subr.mxu0 0.0
    %4179 = vmatpush1.msra.mxu0 0.0
    %4180 = vmatprep.subr.mxu0 0.0
    %4181 = vmatpush1.msra.mxu0 0.0
    %4182 = vmatprep.subr.mxu0 0.0
    %4183 = vmatpush1.msra.mxu0 0.0
    %4184 = vmatprep.subr.mxu0 0.0
    %4185 = vmatpush1.msra.mxu0 0.0
    %4186 = vmatprep.subr.mxu0 0.0
    %4187 = vmatpush1.msra.mxu0 0.0
    %4188 = vmatprep.subr.mxu0 0.0
    %4189 = vmatpush1.msra.mxu0 0.0
    %4190 = vmatprep.subr.mxu0 0.0
    %4191 = vmatpush1.msra.mxu0 0.0
    %4192 = vmatprep.subr.mxu0 0.0
    %4193 = vmatpush1.msra.mxu0 0.0
    %4194 = vmatprep.subr.mxu0 0.0
    %4195 = vmatpush1.msra.mxu0 0.0
    %4196 = vmatprep.subr.mxu0 0.0
    %4197 = vmatpush1.msra.mxu0 0.0
    %4198 = vmatprep.subr.mxu0 0.0
    %4199 = vmatpush1.msra.mxu0 0.0
    %4200 = vmatprep.subr.mxu0 0.0
    %4201 = vmatpush1.msra.mxu0 0.0
    %4202 = vmatprep.subr.mxu0 0.0
    %4203 = vmatpush1.msra.mxu0 0.0
    %4204 = vmatprep.subr.mxu0 0.0
    %4205 = vmatpush1.msra.mxu0 0.0
    %4206 = vmatprep.subr.mxu0 0.0
    %4207 = vmatpush1.msra.mxu0 0.0
    %4208 = vmatprep.subr.mxu0 0.0
    %4209 = vmatpush1.msra.mxu0 0.0
    %4210 = vmatprep.subr.mxu0 0.0
    %4211 = vmatpush1.msra.mxu0 0.0
    %4212 = vmatprep.subr.mxu0 0.0
    %4213 = vmatpush1.msra.mxu0 0.0
    %4214 = vmatprep.subr.mxu0 0.0
    %4215 = vmatpush1.msra.mxu0 0.0
    %4216 = vmatprep.subr.mxu0 0.0
    %4217 = vmatpush1.msra.mxu0 0.0
    %4218 = vmatprep.subr.mxu0 0.0
    %4219 = vmatpush1.msra.mxu0 0.0
    %4220 = vmatprep.subr.mxu0 0.0
    %4221 = vmatpush1.msra.mxu0 0.0
    %4222 = vmatprep.subr.mxu0 0.0
    %4223 = vmatpush1.msra.mxu0 0.0
    %4224 = vmatprep.subr.mxu0 0.0
    %4225 = vmatpush1.msra.mxu0 0.0
    %4226 = vmatprep.subr.mxu0 0.0
    %4227 = vmatpush1.msra.mxu0 0.0
    %4228 = vmatprep.subr.mxu0 0.0
    %4229 = vmatpush1.msra.mxu0 0.0
    %4230 = vmatprep.subr.mxu0 0.0
    %4231 = vmatpush1.msra.mxu0 0.0
    %4232 = vmatprep.subr.mxu0 0.0
    %4233 = vmatpush1.msra.mxu0 0.0
    %4234 = vmatprep.subr.mxu0 0.0
    %4235 = vmatpush1.msra.mxu0 0.0
    %4236 = vmatprep.mubr.f32.mxu0 0.0
    %4237 = vmatmul.mubr.f32.gmra.mrb[0].mxu0 %v4170
    %v4238 = vpop.f32.mrb[0].mxu0
    %v4239 = vadd.f32 0.0, %v4238
    %v4240 = vpop.f32.mrb[0].mxu0
    %4241 = vdwg.mxu0
    %v4242 = vadd.f32 %v4165, %v4239
    %v4243 = vld [vmem:[#allocation3 + $0x18] sm:$0xf]
    %v4244 = vld [vmem:[%s1 + $0x160] sm:$0xff]
    %v4245 = vld [vmem:[%s1 + $0x168] sm:$0xff]
    %v4247 = vsel %vm34, %v4243, 0
    %4249 = vmatprep.subr.mxu0 0.0
    %4250 = vmatpush1.msra.mxu0 %v4244
    %4251 = vmatprep.subr.mxu0 0.0
    %4252 = vmatpush1.msra.mxu0 %v4245
    %4253 = vmatprep.subr.mxu0 0.0
    %4254 = vmatpush1.msra.mxu0 0.0
    %4255 = vmatprep.subr.mxu0 0.0
    %4256 = vmatpush1.msra.mxu0 0.0
    %4257 = vmatprep.subr.mxu0 0.0
    %4258 = vmatpush1.msra.mxu0 0.0
    %4259 = vmatprep.subr.mxu0 0.0
    %4260 = vmatpush1.msra.mxu0 0.0
    %4261 = vmatprep.subr.mxu0 0.0
    %4262 = vmatpush1.msra.mxu0 0.0
    %4263 = vmatprep.subr.mxu0 0.0
    %4264 = vmatpush1.msra.mxu0 0.0
    %4265 = vmatprep.subr.mxu0 0.0
    %4266 = vmatpush1.msra.mxu0 0.0
    %4267 = vmatprep.subr.mxu0 0.0
    %4268 = vmatpush1.msra.mxu0 0.0
    %4269 = vmatprep.subr.mxu0 0.0
    %4270 = vmatpush1.msra.mxu0 0.0
    %4271 = vmatprep.subr.mxu0 0.0
    %4272 = vmatpush1.msra.mxu0 0.0
    %4273 = vmatprep.subr.mxu0 0.0
    %4274 = vmatpush1.msra.mxu0 0.0
    %4275 = vmatprep.subr.mxu0 0.0
    %4276 = vmatpush1.msra.mxu0 0.0
    %4277 = vmatprep.subr.mxu0 0.0
    %4278 = vmatpush1.msra.mxu0 0.0
    %4279 = vmatprep.subr.mxu0 0.0
    %4280 = vmatpush1.msra.mxu0 0.0
    %4281 = vmatprep.subr.mxu0 0.0
    %4282 = vmatpush1.msra.mxu0 0.0
    %4283 = vmatprep.subr.mxu0 0.0
    %4284 = vmatpush1.msra.mxu0 0.0
    %4285 = vmatprep.subr.mxu0 0.0
    %4286 = vmatpush1.msra.mxu0 0.0
    %4287 = vmatprep.subr.mxu0 0.0
    %4288 = vmatpush1.msra.mxu0 0.0
    %4289 = vmatprep.subr.mxu0 0.0
    %4290 = vmatpush1.msra.mxu0 0.0
    %4291 = vmatprep.subr.mxu0 0.0
    %4292 = vmatpush1.msra.mxu0 0.0
    %4293 = vmatprep.subr.mxu0 0.0
    %4294 = vmatpush1.msra.mxu0 0.0
    %4295 = vmatprep.subr.mxu0 0.0
    %4296 = vmatpush1.msra.mxu0 0.0
    %4297 = vmatprep.subr.mxu0 0.0
    %4298 = vmatpush1.msra.mxu0 0.0
    %4299 = vmatprep.subr.mxu0 0.0
    %4300 = vmatpush1.msra.mxu0 0.0
    %4301 = vmatprep.subr.mxu0 0.0
    %4302 = vmatpush1.msra.mxu0 0.0
    %4303 = vmatprep.subr.mxu0 0.0
    %4304 = vmatpush1.msra.mxu0 0.0
    %4305 = vmatprep.subr.mxu0 0.0
    %4306 = vmatpush1.msra.mxu0 0.0
    %4307 = vmatprep.subr.mxu0 0.0
    %4308 = vmatpush1.msra.mxu0 0.0
    %4309 = vmatprep.subr.mxu0 0.0
    %4310 = vmatpush1.msra.mxu0 0.0
    %4311 = vmatprep.subr.mxu0 0.0
    %4312 = vmatpush1.msra.mxu0 0.0
    %4313 = vmatprep.mubr.f32.mxu0 0.0
    %4314 = vmatmul.mubr.f32.gmra.mrb[0].mxu0 %v4247
    %v4315 = vpop.f32.mrb[0].mxu0
    %v4316 = vadd.f32 0.0, %v4315
    %v4317 = vpop.f32.mrb[0].mxu0
    %4318 = vdwg.mxu0
    %v4319 = vadd.f32 %v4242, %v4316
    %v4320 = vld [vmem:[#allocation3 + $0x1c] sm:$0xf]
    %v4321 = vld [vmem:[%s1 + $0x170] sm:$0xff]
    %v4322 = vld [vmem:[%s1 + $0x178] sm:$0xff]
    %v4324 = vsel %vm34, %v4320, 0
    %4326 = vmatprep.subr.mxu0 0.0
    %4327 = vmatpush1.msra.mxu0 %v4321
    %4328 = vmatprep.subr.mxu0 0.0
    %4329 = vmatpush1.msra.mxu0 %v4322
    %4330 = vmatprep.subr.mxu0 0.0
    %4331 = vmatpush1.msra.mxu0 0.0
    %4332 = vmatprep.subr.mxu0 0.0
    %4333 = vmatpush1.msra.mxu0 0.0
    %4334 = vmatprep.subr.mxu0 0.0
    %4335 = vmatpush1.msra.mxu0 0.0
    %4336 = vmatprep.subr.mxu0 0.0
    %4337 = vmatpush1.msra.mxu0 0.0
    %4338 = vmatprep.subr.mxu0 0.0
    %4339 = vmatpush1.msra.mxu0 0.0
    %4340 = vmatprep.subr.mxu0 0.0
    %4341 = vmatpush1.msra.mxu0 0.0
    %4342 = vmatprep.subr.mxu0 0.0
    %4343 = vmatpush1.msra.mxu0 0.0
    %4344 = vmatprep.subr.mxu0 0.0
    %4345 = vmatpush1.msra.mxu0 0.0
    %4346 = vmatprep.subr.mxu0 0.0
    %4347 = vmatpush1.msra.mxu0 0.0
    %4348 = vmatprep.subr.mxu0 0.0
    %4349 = vmatpush1.msra.mxu0 0.0
    %4350 = vmatprep.subr.mxu0 0.0
    %4351 = vmatpush1.msra.mxu0 0.0
    %4352 = vmatprep.subr.mxu0 0.0
    %4353 = vmatpush1.msra.mxu0 0.0
    %4354 = vmatprep.subr.mxu0 0.0
    %4355 = vmatpush1.msra.mxu0 0.0
    %4356 = vmatprep.subr.mxu0 0.0
    %4357 = vmatpush1.msra.mxu0 0.0
    %4358 = vmatprep.subr.mxu0 0.0
    %4359 = vmatpush1.msra.mxu0 0.0
    %4360 = vmatprep.subr.mxu0 0.0
    %4361 = vmatpush1.msra.mxu0 0.0
    %4362 = vmatprep.subr.mxu0 0.0
    %4363 = vmatpush1.msra.mxu0 0.0
    %4364 = vmatprep.subr.mxu0 0.0
    %4365 = vmatpush1.msra.mxu0 0.0
    %4366 = vmatprep.subr.mxu0 0.0
    %4367 = vmatpush1.msra.mxu0 0.0
    %4368 = vmatprep.subr.mxu0 0.0
    %4369 = vmatpush1.msra.mxu0 0.0
    %4370 = vmatprep.subr.mxu0 0.0
    %4371 = vmatpush1.msra.mxu0 0.0
    %4372 = vmatprep.subr.mxu0 0.0
    %4373 = vmatpush1.msra.mxu0 0.0
    %4374 = vmatprep.subr.mxu0 0.0
    %4375 = vmatpush1.msra.mxu0 0.0
    %4376 = vmatprep.subr.mxu0 0.0
    %4377 = vmatpush1.msra.mxu0 0.0
    %4378 = vmatprep.subr.mxu0 0.0
    %4379 = vmatpush1.msra.mxu0 0.0
    %4380 = vmatprep.subr.mxu0 0.0
    %4381 = vmatpush1.msra.mxu0 0.0
    %4382 = vmatprep.subr.mxu0 0.0
    %4383 = vmatpush1.msra.mxu0 0.0
    %4384 = vmatprep.subr.mxu0 0.0
    %4385 = vmatpush1.msra.mxu0 0.0
    %4386 = vmatprep.subr.mxu0 0.0
    %4387 = vmatpush1.msra.mxu0 0.0
    %4388 = vmatprep.subr.mxu0 0.0
    %4389 = vmatpush1.msra.mxu0 0.0
    %4390 = vmatprep.mubr.f32.mxu0 0.0
    %4391 = vmatmul.mubr.f32.gmra.mrb[0].mxu0 %v4324
    %v4392 = vpop.f32.mrb[0].mxu0
    %v4393 = vadd.f32 0.0, %v4392
    %v4394 = vpop.f32.mrb[0].mxu0
    %4395 = vdwg.mxu0
    %v4396 = vadd.f32 %v4319, %v4393
    %v4397 = vld [vmem:[#allocation3 + $0x20] sm:$0xf]
    %v4398 = vld [vmem:[%s1 + $0x180] sm:$0xff]
    %v4399 = vld [vmem:[%s1 + $0x188] sm:$0xff]
    %v4401 = vsel %vm34, %v4397, 0
    %4403 = vmatprep.subr.mxu0 0.0
    %4404 = vmatpush1.msra.mxu0 %v4398
    %4405 = vmatprep.subr.mxu0 0.0
    %4406 = vmatpush1.msra.mxu0 %v4399
    %4407 = vmatprep.subr.mxu0 0.0
    %4408 = vmatpush1.msra.mxu0 0.0
    %4409 = vmatprep.subr.mxu0 0.0
    %4410 = vmatpush1.msra.mxu0 0.0
    %4411 = vmatprep.subr.mxu0 0.0
    %4412 = vmatpush1.msra.mxu0 0.0
    %4413 = vmatprep.subr.mxu0 0.0
    %4414 = vmatpush1.msra.mxu0 0.0
    %4415 = vmatprep.subr.mxu0 0.0
    %4416 = vmatpush1.msra.mxu0 0.0
    %4417 = vmatprep.subr.mxu0 0.0
    %4418 = vmatpush1.msra.mxu0 0.0
    %4419 = vmatprep.subr.mxu0 0.0
    %4420 = vmatpush1.msra.mxu0 0.0
    %4421 = vmatprep.subr.mxu0 0.0
    %4422 = vmatpush1.msra.mxu0 0.0
    %4423 = vmatprep.subr.mxu0 0.0
    %4424 = vmatpush1.msra.mxu0 0.0
    %4425 = vmatprep.subr.mxu0 0.0
    %4426 = vmatpush1.msra.mxu0 0.0
    %4427 = vmatprep.subr.mxu0 0.0
    %4428 = vmatpush1.msra.mxu0 0.0
    %4429 = vmatprep.subr.mxu0 0.0
    %4430 = vmatpush1.msra.mxu0 0.0
    %4431 = vmatprep.subr.mxu0 0.0
    %4432 = vmatpush1.msra.mxu0 0.0
    %4433 = vmatprep.subr.mxu0 0.0
    %4434 = vmatpush1.msra.mxu0 0.0
    %4435 = vmatprep.subr.mxu0 0.0
    %4436 = vmatpush1.msra.mxu0 0.0
    %4437 = vmatprep.subr.mxu0 0.0
    %4438 = vmatpush1.msra.mxu0 0.0
    %4439 = vmatprep.subr.mxu0 0.0
    %4440 = vmatpush1.msra.mxu0 0.0
    %4441 = vmatprep.subr.mxu0 0.0
    %4442 = vmatpush1.msra.mxu0 0.0
    %4443 = vmatprep.subr.mxu0 0.0
    %4444 = vmatpush1.msra.mxu0 0.0
    %4445 = vmatprep.subr.mxu0 0.0
    %4446 = vmatpush1.msra.mxu0 0.0
    %4447 = vmatprep.subr.mxu0 0.0
    %4448 = vmatpush1.msra.mxu0 0.0
    %4449 = vmatprep.subr.mxu0 0.0
    %4450 = vmatpush1.msra.mxu0 0.0
    %4451 = vmatprep.subr.mxu0 0.0
    %4452 = vmatpush1.msra.mxu0 0.0
    %4453 = vmatprep.subr.mxu0 0.0
    %4454 = vmatpush1.msra.mxu0 0.0
    %4455 = vmatprep.subr.mxu0 0.0
    %4456 = vmatpush1.msra.mxu0 0.0
    %4457 = vmatprep.subr.mxu0 0.0
    %4458 = vmatpush1.msra.mxu0 0.0
    %4459 = vmatprep.subr.mxu0 0.0
    %4460 = vmatpush1.msra.mxu0 0.0
    %4461 = vmatprep.subr.mxu0 0.0
    %4462 = vmatpush1.msra.mxu0 0.0
    %4463 = vmatprep.subr.mxu0 0.0
    %4464 = vmatpush1.msra.mxu0 0.0
    %4465 = vmatprep.subr.mxu0 0.0
    %4466 = vmatpush1.msra.mxu0 0.0
    %4467 = vmatprep.mubr.f32.mxu0 0.0
    %4468 = vmatmul.mubr.f32.gmra.mrb[0].mxu0 %v4401
    %v4469 = vpop.f32.mrb[0].mxu0
    %v4470 = vadd.f32 0.0, %v4469
    %v4471 = vpop.f32.mrb[0].mxu0
    %4472 = vdwg.mxu0
    %v4473 = vadd.f32 %v4396, %v4470
    %v4474 = vld [vmem:[#allocation3 + $0x24] sm:$0xf]
    %v4475 = vld [vmem:[%s1 + $0x190] sm:$0xff]
    %v4476 = vld [vmem:[%s1 + $0x198] sm:$0xff]
    %v4478 = vsel %vm34, %v4474, 0
    %4480 = vmatprep.subr.mxu0 0.0
    %4481 = vmatpush1.msra.mxu0 %v4475
    %4482 = vmatprep.subr.mxu0 0.0
    %4483 = vmatpush1.msra.mxu0 %v4476
    %4484 = vmatprep.subr.mxu0 0.0
    %4485 = vmatpush1.msra.mxu0 0.0
    %4486 = vmatprep.subr.mxu0 0.0
    %4487 = vmatpush1.msra.mxu0 0.0
    %4488 = vmatprep.subr.mxu0 0.0
    %4489 = vmatpush1.msra.mxu0 0.0
    %4490 = vmatprep.subr.mxu0 0.0
    %4491 = vmatpush1.msra.mxu0 0.0
    %4492 = vmatprep.subr.mxu0 0.0
    %4493 = vmatpush1.msra.mxu0 0.0
    %4494 = vmatprep.subr.mxu0 0.0
    %4495 = vmatpush1.msra.mxu0 0.0
    %4496 = vmatprep.subr.mxu0 0.0
    %4497 = vmatpush1.msra.mxu0 0.0
    %4498 = vmatprep.subr.mxu0 0.0
    %4499 = vmatpush1.msra.mxu0 0.0
    %4500 = vmatprep.subr.mxu0 0.0
    %4501 = vmatpush1.msra.mxu0 0.0
    %4502 = vmatprep.subr.mxu0 0.0
    %4503 = vmatpush1.msra.mxu0 0.0
    %4504 = vmatprep.subr.mxu0 0.0
    %4505 = vmatpush1.msra.mxu0 0.0
    %4506 = vmatprep.subr.mxu0 0.0
    %4507 = vmatpush1.msra.mxu0 0.0
    %4508 = vmatprep.subr.mxu0 0.0
    %4509 = vmatpush1.msra.mxu0 0.0
    %4510 = vmatprep.subr.mxu0 0.0
    %4511 = vmatpush1.msra.mxu0 0.0
    %4512 = vmatprep.subr.mxu0 0.0
    %4513 = vmatpush1.msra.mxu0 0.0
    %4514 = vmatprep.subr.mxu0 0.0
    %4515 = vmatpush1.msra.mxu0 0.0
    %4516 = vmatprep.subr.mxu0 0.0
    %4517 = vmatpush1.msra.mxu0 0.0
    %4518 = vmatprep.subr.mxu0 0.0
    %4519 = vmatpush1.msra.mxu0 0.0
    %4520 = vmatprep.subr.mxu0 0.0
    %4521 = vmatpush1.msra.mxu0 0.0
    %4522 = vmatprep.subr.mxu0 0.0
    %4523 = vmatpush1.msra.mxu0 0.0
    %4524 = vmatprep.subr.mxu0 0.0
    %4525 = vmatpush1.msra.mxu0 0.0
    %4526 = vmatprep.subr.mxu0 0.0
    %4527 = vmatpush1.msra.mxu0 0.0
    %4528 = vmatprep.subr.mxu0 0.0
    %4529 = vmatpush1.msra.mxu0 0.0
    %4530 = vmatprep.subr.mxu0 0.0
    %4531 = vmatpush1.msra.mxu0 0.0
    %4532 = vmatprep.subr.mxu0 0.0
    %4533 = vmatpush1.msra.mxu0 0.0
    %4534 = vmatprep.subr.mxu0 0.0
    %4535 = vmatpush1.msra.mxu0 0.0
    %4536 = vmatprep.subr.mxu0 0.0
    %4537 = vmatpush1.msra.mxu0 0.0
    %4538 = vmatprep.subr.mxu0 0.0
    %4539 = vmatpush1.msra.mxu0 0.0
    %4540 = vmatprep.subr.mxu0 0.0
    %4541 = vmatpush1.msra.mxu0 0.0
    %4542 = vmatprep.subr.mxu0 0.0
    %4543 = vmatpush1.msra.mxu0 0.0
    %4544 = vmatprep.mubr.f32.mxu0 0.0
    %4545 = vmatmul.mubr.f32.gmra.mrb[0].mxu0 %v4478
    %v4546 = vpop.f32.mrb[0].mxu0
    %v4547 = vadd.f32 0.0, %v4546
    %v4548 = vpop.f32.mrb[0].mxu0
    %4549 = vdwg.mxu0
    %v4550 = vadd.f32 %v4473, %v4547
    %vm4551 = vcmask 31744
    %v4552 = vsel %vm4551, 1.0, 0
    %vm4554 = vcmask 1043456
    %v4556 = vsel %vm4554, %v4550, 0
    %4558 = vmatprep.subr.mxu0 0.0
    %v4559 = vand.u32 %v4556, 4294901760
    %4560 = vmatpush1.msra.mxu0 %v4559
    %4561 = vmatprep.subr.mxu0 0.0
    %4562 = vmatpush1.msra.mxu0 0.0
    %4563 = vmatprep.subr.mxu0 0.0
    %4564 = vmatpush1.msra.mxu0 0.0
    %4565 = vmatprep.subr.mxu0 0.0
    %4566 = vmatpush1.msra.mxu0 0.0
    %4567 = vmatprep.subr.mxu0 0.0
    %4568 = vmatpush1.msra.mxu0 0.0
    %4569 = vmatprep.subr.mxu0 0.0
    %4570 = vmatpush1.msra.mxu0 0.0
    %4571 = vmatprep.subr.mxu0 0.0
    %4572 = vmatpush1.msra.mxu0 0.0
    %4573 = vmatprep.subr.mxu0 0.0
    %4574 = vmatpush1.msra.mxu0 0.0
    %4575 = vmatprep.subr.mxu0 0.0
    %4576 = vmatpush1.msra.mxu0 0.0
    %4577 = vmatprep.subr.mxu0 0.0
    %4578 = vmatpush1.msra.mxu0 0.0
    %4579 = vmatprep.subr.mxu0 0.0
    %4580 = vmatpush1.msra.mxu0 0.0
    %4581 = vmatprep.subr.mxu0 0.0
    %4582 = vmatpush1.msra.mxu0 0.0
    %4583 = vmatprep.subr.mxu0 0.0
    %4584 = vmatpush1.msra.mxu0 0.0
    %4585 = vmatprep.subr.mxu0 0.0
    %4586 = vmatpush1.msra.mxu0 0.0
    %4587 = vmatprep.subr.mxu0 0.0
    %4588 = vmatpush1.msra.mxu0 0.0
    %4589 = vmatprep.subr.mxu0 0.0
    %4590 = vmatpush1.msra.mxu0 0.0
    %4591 = vmatprep.subr.mxu0 0.0
    %4592 = vmatpush1.msra.mxu0 0.0
    %4593 = vmatprep.subr.mxu0 0.0
    %4594 = vmatpush1.msra.mxu0 0.0
    %4595 = vmatprep.subr.mxu0 0.0
    %4596 = vmatpush1.msra.mxu0 0.0
    %4597 = vmatprep.subr.mxu0 0.0
    %4598 = vmatpush1.msra.mxu0 0.0
    %4599 = vmatprep.subr.mxu0 0.0
    %4600 = vmatpush1.msra.mxu0 0.0
    %4601 = vmatprep.subr.mxu0 0.0
    %4602 = vmatpush1.msra.mxu0 0.0
    %4603 = vmatprep.subr.mxu0 0.0
    %4604 = vmatpush1.msra.mxu0 0.0
    %4605 = vmatprep.subr.mxu0 0.0
    %4606 = vmatpush1.msra.mxu0 0.0
    %4607 = vmatprep.subr.mxu0 0.0
    %4608 = vmatpush1.msra.mxu0 0.0
    %4609 = vmatprep.subr.mxu0 0.0
    %4610 = vmatpush1.msra.mxu0 0.0
    %4611 = vmatprep.subr.mxu0 0.0
    %4612 = vmatpush1.msra.mxu0 0.0
    %4613 = vmatprep.subr.mxu0 0.0
    %4614 = vmatpush1.msra.mxu0 0.0
    %4615 = vmatprep.subr.mxu0 0.0
    %4616 = vmatpush1.msra.mxu0 0.0
    %4617 = vmatprep.subr.mxu0 0.0
    %4618 = vmatpush1.msra.mxu0 0.0
    %4619 = vmatprep.subr.mxu0 0.0
    %4620 = vmatpush1.msra.mxu0 0.0
    %4621 = vmatprep.subr.mxu0 0.0
    %4622 = vmatpush1.msra.mxu0 0.0
    %4623 = vmatprep.mubr.f32.mxu0 0.0
    %v4624 = vand.u32 %v4552, 4294901760
    %v4625 = vsub.f32 %v4552, %v4624
    %v4626 = vand.u32 %v4625, 4294901760
    %v4627 = vsub.f32 %v4625, %v4626
    %v4628 = vand.u32 %v4627, 4294901760
    %4629 = vmatmul.mubr.f32.gmra.mrb[0].mxu0 %v4628
    %v4630 = vpop.f32.mrb[0].mxu0
    %v4631 = vadd.f32 0.0, %v4630
    %v4632 = vpop.f32.mrb[0].mxu0
    %4633 = vdwg.mxu0
    %4634 = vmatprep.subr.mxu0 0.0
    %v4635 = vand.u32 %v4556, 4294901760
    %v4636 = vsub.f32 %v4556, %v4635
    %v4637 = vand.u32 %v4636, 4294901760
    %v4638 = vsub.f32 %v4636, %v4637
    %v4639 = vand.u32 %v4638, 4294901760
    %4640 = vmatpush1.msra.mxu0 %v4639
    %4641 = vmatprep.subr.mxu0 0.0
    %4642 = vmatpush1.msra.mxu0 0.0
    %4643 = vmatprep.subr.mxu0 0.0
    %4644 = vmatpush1.msra.mxu0 0.0
    %4645 = vmatprep.subr.mxu0 0.0
    %4646 = vmatpush1.msra.mxu0 0.0
    %4647 = vmatprep.subr.mxu0 0.0
    %4648 = vmatpush1.msra.mxu0 0.0
    %4649 = vmatprep.subr.mxu0 0.0
    %4650 = vmatpush1.msra.mxu0 0.0
    %4651 = vmatprep.subr.mxu0 0.0
    %4652 = vmatpush1.msra.mxu0 0.0
    %4653 = vmatprep.subr.mxu0 0.0
    %4654 = vmatpush1.msra.mxu0 0.0
    %4655 = vmatprep.subr.mxu0 0.0
    %4656 = vmatpush1.msra.mxu0 0.0
    %4657 = vmatprep.subr.mxu0 0.0
    %4658 = vmatpush1.msra.mxu0 0.0
    %4659 = vmatprep.subr.mxu0 0.0
    %4660 = vmatpush1.msra.mxu0 0.0
    %4661 = vmatprep.subr.mxu0 0.0
    %4662 = vmatpush1.msra.mxu0 0.0
    %4663 = vmatprep.subr.mxu0 0.0
    %4664 = vmatpush1.msra.mxu0 0.0
    %4665 = vmatprep.subr.mxu0 0.0
    %4666 = vmatpush1.msra.mxu0 0.0
    %4667 = vmatprep.subr.mxu0 0.0
    %4668 = vmatpush1.msra.mxu0 0.0
    %4669 = vmatprep.subr.mxu0 0.0
    %4670 = vmatpush1.msra.mxu0 0.0
    %4671 = vmatprep.subr.mxu0 0.0
    %4672 = vmatpush1.msra.mxu0 0.0
    %4673 = vmatprep.subr.mxu0 0.0
    %4674 = vmatpush1.msra.mxu0 0.0
    %4675 = vmatprep.subr.mxu0 0.0
    %4676 = vmatpush1.msra.mxu0 0.0
    %4677 = vmatprep.subr.mxu0 0.0
    %4678 = vmatpush1.msra.mxu0 0.0
    %4679 = vmatprep.subr.mxu0 0.0
    %4680 = vmatpush1.msra.mxu0 0.0
    %4681 = vmatprep.subr.mxu0 0.0
    %4682 = vmatpush1.msra.mxu0 0.0
    %4683 = vmatprep.subr.mxu0 0.0
    %4684 = vmatpush1.msra.mxu0 0.0
    %4685 = vmatprep.subr.mxu0 0.0
    %4686 = vmatpush1.msra.mxu0 0.0
    %4687 = vmatprep.subr.mxu0 0.0
    %4688 = vmatpush1.msra.mxu0 0.0
    %4689 = vmatprep.subr.mxu0 0.0
    %4690 = vmatpush1.msra.mxu0 0.0
    %4691 = vmatprep.subr.mxu0 0.0
    %4692 = vmatpush1.msra.mxu0 0.0
    %4693 = vmatprep.subr.mxu0 0.0
    %4694 = vmatpush1.msra.mxu0 0.0
    %4695 = vmatprep.subr.mxu0 0.0
    %4696 = vmatpush1.msra.mxu0 0.0
    %4697 = vmatprep.subr.mxu0 0.0
    %4698 = vmatpush1.msra.mxu0 0.0
    %4699 = vmatprep.subr.mxu0 0.0
    %4700 = vmatpush1.msra.mxu0 0.0
    %4701 = vmatprep.subr.mxu0 0.0
    %4702 = vmatpush1.msra.mxu0 0.0
    %4703 = vmatprep.mubr.f32.mxu0 0.0
    %v4704 = vand.u32 %v4552, 4294901760
    %4705 = vmatmul.mubr.f32.gmra.mrb[0].mxu0 %v4704
    %v4706 = vpop.f32.mrb[0].mxu0
    %v4707 = vadd.f32 %v4631, %v4706
    %v4708 = vpop.f32.mrb[0].mxu0
    %4709 = vdwg.mxu0
    %4710 = vmatprep.subr.mxu0 0.0
    %v4711 = vand.u32 %v4556, 4294901760
    %v4712 = vsub.f32 %v4556, %v4711
    %4713 = vmatpush1.msra.mxu0 %v4712
    %4714 = vmatprep.subr.mxu0 0.0
    %4715 = vmatpush1.msra.mxu0 0.0
    %4716 = vmatprep.subr.mxu0 0.0
    %4717 = vmatpush1.msra.mxu0 0.0
    %4718 = vmatprep.subr.mxu0 0.0
    %4719 = vmatpush1.msra.mxu0 0.0
    %4720 = vmatprep.subr.mxu0 0.0
    %4721 = vmatpush1.msra.mxu0 0.0
    %4722 = vmatprep.subr.mxu0 0.0
    %4723 = vmatpush1.msra.mxu0 0.0
    %4724 = vmatprep.subr.mxu0 0.0
    %4725 = vmatpush1.msra.mxu0 0.0
    %4726 = vmatprep.subr.mxu0 0.0
    %4727 = vmatpush1.msra.mxu0 0.0
    %4728 = vmatprep.subr.mxu0 0.0
    %4729 = vmatpush1.msra.mxu0 0.0
    %4730 = vmatprep.subr.mxu0 0.0
    %4731 = vmatpush1.msra.mxu0 0.0
    %4732 = vmatprep.subr.mxu0 0.0
    %4733 = vmatpush1.msra.mxu0 0.0
    %4734 = vmatprep.subr.mxu0 0.0
    %4735 = vmatpush1.msra.mxu0 0.0
    %4736 = vmatprep.subr.mxu0 0.0
    %4737 = vmatpush1.msra.mxu0 0.0
    %4738 = vmatprep.subr.mxu0 0.0
    %4739 = vmatpush1.msra.mxu0 0.0
    %4740 = vmatprep.subr.mxu0 0.0
    %4741 = vmatpush1.msra.mxu0 0.0
    %4742 = vmatprep.subr.mxu0 0.0
    %4743 = vmatpush1.msra.mxu0 0.0
    %4744 = vmatprep.subr.mxu0 0.0
    %4745 = vmatpush1.msra.mxu0 0.0
    %4746 = vmatprep.subr.mxu0 0.0
    %4747 = vmatpush1.msra.mxu0 0.0
    %4748 = vmatprep.subr.mxu0 0.0
    %4749 = vmatpush1.msra.mxu0 0.0
    %4750 = vmatprep.subr.mxu0 0.0
    %4751 = vmatpush1.msra.mxu0 0.0
    %4752 = vmatprep.subr.mxu0 0.0
    %4753 = vmatpush1.msra.mxu0 0.0
    %4754 = vmatprep.subr.mxu0 0.0
    %4755 = vmatpush1.msra.mxu0 0.0
    %4756 = vmatprep.subr.mxu0 0.0
    %4757 = vmatpush1.msra.mxu0 0.0
    %4758 = vmatprep.subr.mxu0 0.0
    %4759 = vmatpush1.msra.mxu0 0.0
    %4760 = vmatprep.subr.mxu0 0.0
    %4761 = vmatpush1.msra.mxu0 0.0
    %4762 = vmatprep.subr.mxu0 0.0
    %4763 = vmatpush1.msra.mxu0 0.0
    %4764 = vmatprep.subr.mxu0 0.0
    %4765 = vmatpush1.msra.mxu0 0.0
    %4766 = vmatprep.subr.mxu0 0.0
    %4767 = vmatpush1.msra.mxu0 0.0
    %4768 = vmatprep.subr.mxu0 0.0
    %4769 = vmatpush1.msra.mxu0 0.0
    %4770 = vmatprep.subr.mxu0 0.0
    %4771 = vmatpush1.msra.mxu0 0.0
    %4772 = vmatprep.subr.mxu0 0.0
    %4773 = vmatpush1.msra.mxu0 0.0
    %4774 = vmatprep.subr.mxu0 0.0
    %4775 = vmatpush1.msra.mxu0 0.0
    %4776 = vmatprep.mubr.f32.mxu0 0.0
    %v4777 = vand.u32 %v4552, 4294901760
    %v4778 = vsub.f32 %v4552, %v4777
    %4779 = vmatmul.mubr.f32.gmra.mrb[0].mxu0 %v4778
    %v4780 = vpop.f32.mrb[0].mxu0
    %v4781 = vadd.f32 %v4707, %v4780
    %v4782 = vpop.f32.mrb[0].mxu0
    %4783 = vdwg.mxu0
    %4784 = vmatprep.subr.mxu0 0.0
    %v4785 = vand.u32 %v4556, 4294901760
    %4786 = vmatpush1.msra.mxu0 %v4785
    %4787 = vmatprep.subr.mxu0 0.0
    %4788 = vmatpush1.msra.mxu0 0.0
    %4789 = vmatprep.subr.mxu0 0.0
    %4790 = vmatpush1.msra.mxu0 0.0
    %4791 = vmatprep.subr.mxu0 0.0
    %4792 = vmatpush1.msra.mxu0 0.0
    %4793 = vmatprep.subr.mxu0 0.0
    %4794 = vmatpush1.msra.mxu0 0.0
    %4795 = vmatprep.subr.mxu0 0.0
    %4796 = vmatpush1.msra.mxu0 0.0
    %4797 = vmatprep.subr.mxu0 0.0
    %4798 = vmatpush1.msra.mxu0 0.0
    %4799 = vmatprep.subr.mxu0 0.0
    %4800 = vmatpush1.msra.mxu0 0.0
    %4801 = vmatprep.subr.mxu0 0.0
    %4802 = vmatpush1.msra.mxu0 0.0
    %4803 = vmatprep.subr.mxu0 0.0
    %4804 = vmatpush1.msra.mxu0 0.0
    %4805 = vmatprep.subr.mxu0 0.0
    %4806 = vmatpush1.msra.mxu0 0.0
    %4807 = vmatprep.subr.mxu0 0.0
    %4808 = vmatpush1.msra.mxu0 0.0
    %4809 = vmatprep.subr.mxu0 0.0
    %4810 = vmatpush1.msra.mxu0 0.0
    %4811 = vmatprep.subr.mxu0 0.0
    %4812 = vmatpush1.msra.mxu0 0.0
    %4813 = vmatprep.subr.mxu0 0.0
    %4814 = vmatpush1.msra.mxu0 0.0
    %4815 = vmatprep.subr.mxu0 0.0
    %4816 = vmatpush1.msra.mxu0 0.0
    %4817 = vmatprep.subr.mxu0 0.0
    %4818 = vmatpush1.msra.mxu0 0.0
    %4819 = vmatprep.subr.mxu0 0.0
    %4820 = vmatpush1.msra.mxu0 0.0
    %4821 = vmatprep.subr.mxu0 0.0
    %4822 = vmatpush1.msra.mxu0 0.0
    %4823 = vmatprep.subr.mxu0 0.0
    %4824 = vmatpush1.msra.mxu0 0.0
    %4825 = vmatprep.subr.mxu0 0.0
    %4826 = vmatpush1.msra.mxu0 0.0
    %4827 = vmatprep.subr.mxu0 0.0
    %4828 = vmatpush1.msra.mxu0 0.0
    %4829 = vmatprep.subr.mxu0 0.0
    %4830 = vmatpush1.msra.mxu0 0.0
    %4831 = vmatprep.subr.mxu0 0.0
    %4832 = vmatpush1.msra.mxu0 0.0
    %4833 = vmatprep.subr.mxu0 0.0
    %4834 = vmatpush1.msra.mxu0 0.0
    %4835 = vmatprep.subr.mxu0 0.0
    %4836 = vmatpush1.msra.mxu0 0.0
    %4837 = vmatprep.subr.mxu0 0.0
    %4838 = vmatpush1.msra.mxu0 0.0
    %4839 = vmatprep.subr.mxu0 0.0
    %4840 = vmatpush1.msra.mxu0 0.0
    %4841 = vmatprep.subr.mxu0 0.0
    %4842 = vmatpush1.msra.mxu0 0.0
    %4843 = vmatprep.subr.mxu0 0.0
    %4844 = vmatpush1.msra.mxu0 0.0
    %4845 = vmatprep.subr.mxu0 0.0
    %4846 = vmatpush1.msra.mxu0 0.0
    %4847 = vmatprep.subr.mxu0 0.0
    %4848 = vmatpush1.msra.mxu0 0.0
    %4849 = vmatprep.mubr.f32.mxu0 0.0
    %v4850 = vand.u32 %v4552, 4294901760
    %v4851 = vsub.f32 %v4552, %v4850
    %v4852 = vand.u32 %v4851, 4294901760
    %4853 = vmatmul.mubr.f32.gmra.mrb[0].mxu0 %v4852
    %v4854 = vpop.f32.mrb[0].mxu0
    %v4855 = vadd.f32 %v4781, %v4854
    %v4856 = vpop.f32.mrb[0].mxu0
    %4857 = vdwg.mxu0
    %4858 = vmatprep.subr.mxu0 0.0
    %v4859 = vand.u32 %v4556, 4294901760
    %v4860 = vsub.f32 %v4556, %v4859
    %v4861 = vand.u32 %v4860, 4294901760
    %4862 = vmatpush1.msra.mxu0 %v4861
    %4863 = vmatprep.subr.mxu0 0.0
    %4864 = vmatpush1.msra.mxu0 0.0
    %4865 = vmatprep.subr.mxu0 0.0
    %4866 = vmatpush1.msra.mxu0 0.0
    %4867 = vmatprep.subr.mxu0 0.0
    %4868 = vmatpush1.msra.mxu0 0.0
    %4869 = vmatprep.subr.mxu0 0.0
    %4870 = vmatpush1.msra.mxu0 0.0
    %4871 = vmatprep.subr.mxu0 0.0
    %4872 = vmatpush1.msra.mxu0 0.0
    %4873 = vmatprep.subr.mxu0 0.0
    %4874 = vmatpush1.msra.mxu0 0.0
    %4875 = vmatprep.subr.mxu0 0.0
    %4876 = vmatpush1.msra.mxu0 0.0
    %4877 = vmatprep.subr.mxu0 0.0
    %4878 = vmatpush1.msra.mxu0 0.0
    %4879 = vmatprep.subr.mxu0 0.0
    %4880 = vmatpush1.msra.mxu0 0.0
    %4881 = vmatprep.subr.mxu0 0.0
    %4882 = vmatpush1.msra.mxu0 0.0
    %4883 = vmatprep.subr.mxu0 0.0
    %4884 = vmatpush1.msra.mxu0 0.0
    %4885 = vmatprep.subr.mxu0 0.0
    %4886 = vmatpush1.msra.mxu0 0.0
    %4887 = vmatprep.subr.mxu0 0.0
    %4888 = vmatpush1.msra.mxu0 0.0
    %4889 = vmatprep.subr.mxu0 0.0
    %4890 = vmatpush1.msra.mxu0 0.0
    %4891 = vmatprep.subr.mxu0 0.0
    %4892 = vmatpush1.msra.mxu0 0.0
    %4893 = vmatprep.subr.mxu0 0.0
    %4894 = vmatpush1.msra.mxu0 0.0
    %4895 = vmatprep.subr.mxu0 0.0
    %4896 = vmatpush1.msra.mxu0 0.0
    %4897 = vmatprep.subr.mxu0 0.0
    %4898 = vmatpush1.msra.mxu0 0.0
    %4899 = vmatprep.subr.mxu0 0.0
    %4900 = vmatpush1.msra.mxu0 0.0
    %4901 = vmatprep.subr.mxu0 0.0
    %4902 = vmatpush1.msra.mxu0 0.0
    %4903 = vmatprep.subr.mxu0 0.0
    %4904 = vmatpush1.msra.mxu0 0.0
    %4905 = vmatprep.subr.mxu0 0.0
    %4906 = vmatpush1.msra.mxu0 0.0
    %4907 = vmatprep.subr.mxu0 0.0
    %4908 = vmatpush1.msra.mxu0 0.0
    %4909 = vmatprep.subr.mxu0 0.0
    %4910 = vmatpush1.msra.mxu0 0.0
    %4911 = vmatprep.subr.mxu0 0.0
    %4912 = vmatpush1.msra.mxu0 0.0
    %4913 = vmatprep.subr.mxu0 0.0
    %4914 = vmatpush1.msra.mxu0 0.0
    %4915 = vmatprep.subr.mxu0 0.0
    %4916 = vmatpush1.msra.mxu0 0.0
    %4917 = vmatprep.subr.mxu0 0.0
    %4918 = vmatpush1.msra.mxu0 0.0
    %4919 = vmatprep.subr.mxu0 0.0
    %4920 = vmatpush1.msra.mxu0 0.0
    %4921 = vmatprep.subr.mxu0 0.0
    %4922 = vmatpush1.msra.mxu0 0.0
    %4923 = vmatprep.subr.mxu0 0.0
    %4924 = vmatpush1.msra.mxu0 0.0
    %4925 = vmatprep.mubr.f32.mxu0 0.0
    %v4926 = vand.u32 %v4552, 4294901760
    %4927 = vmatmul.mubr.f32.gmra.mrb[0].mxu0 %v4926
    %v4928 = vpop.f32.mrb[0].mxu0
    %v4929 = vadd.f32 %v4855, %v4928
    %v4930 = vpop.f32.mrb[0].mxu0
    %4931 = vdwg.mxu0
    %4932 = vmatprep.subr.mxu0 0.0
    %v4933 = vand.u32 %v4556, 4294901760
    %4934 = vmatpush1.msra.mxu0 %v4933
    %4935 = vmatprep.subr.mxu0 0.0
    %4936 = vmatpush1.msra.mxu0 0.0
    %4937 = vmatprep.subr.mxu0 0.0
    %4938 = vmatpush1.msra.mxu0 0.0
    %4939 = vmatprep.subr.mxu0 0.0
    %4940 = vmatpush1.msra.mxu0 0.0
    %4941 = vmatprep.subr.mxu0 0.0
    %4942 = vmatpush1.msra.mxu0 0.0
    %4943 = vmatprep.subr.mxu0 0.0
    %4944 = vmatpush1.msra.mxu0 0.0
    %4945 = vmatprep.subr.mxu0 0.0
    %4946 = vmatpush1.msra.mxu0 0.0
    %4947 = vmatprep.subr.mxu0 0.0
    %4948 = vmatpush1.msra.mxu0 0.0
    %4949 = vmatprep.subr.mxu0 0.0
    %4950 = vmatpush1.msra.mxu0 0.0
    %4951 = vmatprep.subr.mxu0 0.0
    %4952 = vmatpush1.msra.mxu0 0.0
    %4953 = vmatprep.subr.mxu0 0.0
    %4954 = vmatpush1.msra.mxu0 0.0
    %4955 = vmatprep.subr.mxu0 0.0
    %4956 = vmatpush1.msra.mxu0 0.0
    %4957 = vmatprep.subr.mxu0 0.0
    %4958 = vmatpush1.msra.mxu0 0.0
    %4959 = vmatprep.subr.mxu0 0.0
    %4960 = vmatpush1.msra.mxu0 0.0
    %4961 = vmatprep.subr.mxu0 0.0
    %4962 = vmatpush1.msra.mxu0 0.0
    %4963 = vmatprep.subr.mxu0 0.0
    %4964 = vmatpush1.msra.mxu0 0.0
    %4965 = vmatprep.subr.mxu0 0.0
    %4966 = vmatpush1.msra.mxu0 0.0
    %4967 = vmatprep.subr.mxu0 0.0
    %4968 = vmatpush1.msra.mxu0 0.0
    %4969 = vmatprep.subr.mxu0 0.0
    %4970 = vmatpush1.msra.mxu0 0.0
    %4971 = vmatprep.subr.mxu0 0.0
    %4972 = vmatpush1.msra.mxu0 0.0
    %4973 = vmatprep.subr.mxu0 0.0
    %4974 = vmatpush1.msra.mxu0 0.0
    %4975 = vmatprep.subr.mxu0 0.0
    %4976 = vmatpush1.msra.mxu0 0.0
    %4977 = vmatprep.subr.mxu0 0.0
    %4978 = vmatpush1.msra.mxu0 0.0
    %4979 = vmatprep.subr.mxu0 0.0
    %4980 = vmatpush1.msra.mxu0 0.0
    %4981 = vmatprep.subr.mxu0 0.0
    %4982 = vmatpush1.msra.mxu0 0.0
    %4983 = vmatprep.subr.mxu0 0.0
    %4984 = vmatpush1.msra.mxu0 0.0
    %4985 = vmatprep.subr.mxu0 0.0
    %4986 = vmatpush1.msra.mxu0 0.0
    %4987 = vmatprep.subr.mxu0 0.0
    %4988 = vmatpush1.msra.mxu0 0.0
    %4989 = vmatprep.subr.mxu0 0.0
    %4990 = vmatpush1.msra.mxu0 0.0
    %4991 = vmatprep.subr.mxu0 0.0
    %4992 = vmatpush1.msra.mxu0 0.0
    %4993 = vmatprep.subr.mxu0 0.0
    %4994 = vmatpush1.msra.mxu0 0.0
    %4995 = vmatprep.subr.mxu0 0.0
    %4996 = vmatpush1.msra.mxu0 0.0
    %4997 = vmatprep.mubr.f32.mxu0 0.0
    %v4998 = vand.u32 %v4552, 4294901760
    %4999 = vmatmul.mubr.f32.gmra.mrb[0].mxu0 %v4998
    %v5000 = vpop.f32.mrb[0].mxu0
    %v5001 = vadd.f32 %v4929, %v5000
    %v5002 = vpop.f32.mrb[0].mxu0
    %5003 = vdwg.mxu0
    %v5004 = vmul.f32 %v5001, 0.25
    %v5005 = vlaneseq
    %v5006 = vshrl.u32 %v5005, 7
    %v5007 = vsub.s32 0, %v5006
    %v5008 = vrot.slane %v5004, %v5007
    %v5009 = vsub.f32 %v4550, %v5008
    %v5010 = vmul.f32 %v5009, %v5009
    %v5012 = vsel %vm4554, %v5010, 0
    %5014 = vmatprep.subr.mxu0 0.0
    %v5015 = vand.u32 %v5012, 4294901760
    %5016 = vmatpush1.msra.mxu0 %v5015
    %5017 = vmatprep.subr.mxu0 0.0
    %5018 = vmatpush1.msra.mxu0 0.0
    %5019 = vmatprep.subr.mxu0 0.0
    %5020 = vmatpush1.msra.mxu0 0.0
    %5021 = vmatprep.subr.mxu0 0.0
    %5022 = vmatpush1.msra.mxu0 0.0
    %5023 = vmatprep.subr.mxu0 0.0
    %5024 = vmatpush1.msra.mxu0 0.0
    %5025 = vmatprep.subr.mxu0 0.0
    %5026 = vmatpush1.msra.mxu0 0.0
    %5027 = vmatprep.subr.mxu0 0.0
    %5028 = vmatpush1.msra.mxu0 0.0
    %5029 = vmatprep.subr.mxu0 0.0
    %5030 = vmatpush1.msra.mxu0 0.0
    %5031 = vmatprep.subr.mxu0 0.0
    %5032 = vmatpush1.msra.mxu0 0.0
    %5033 = vmatprep.subr.mxu0 0.0
    %5034 = vmatpush1.msra.mxu0 0.0
    %5035 = vmatprep.subr.mxu0 0.0
    %5036 = vmatpush1.msra.mxu0 0.0
    %5037 = vmatprep.subr.mxu0 0.0
    %5038 = vmatpush1.msra.mxu0 0.0
    %5039 = vmatprep.subr.mxu0 0.0
    %5040 = vmatpush1.msra.mxu0 0.0
    %5041 = vmatprep.subr.mxu0 0.0
    %5042 = vmatpush1.msra.mxu0 0.0
    %5043 = vmatprep.subr.mxu0 0.0
    %5044 = vmatpush1.msra.mxu0 0.0
    %5045 = vmatprep.subr.mxu0 0.0
    %5046 = vmatpush1.msra.mxu0 0.0
    %5047 = vmatprep.subr.mxu0 0.0
    %5048 = vmatpush1.msra.mxu0 0.0
    %5049 = vmatprep.subr.mxu0 0.0
    %5050 = vmatpush1.msra.mxu0 0.0
    %5051 = vmatprep.subr.mxu0 0.0
    %5052 = vmatpush1.msra.mxu0 0.0
    %5053 = vmatprep.subr.mxu0 0.0
    %5054 = vmatpush1.msra.mxu0 0.0
    %5055 = vmatprep.subr.mxu0 0.0
    %5056 = vmatpush1.msra.mxu0 0.0
    %5057 = vmatprep.subr.mxu0 0.0
    %5058 = vmatpush1.msra.mxu0 0.0
    %5059 = vmatprep.subr.mxu0 0.0
    %5060 = vmatpush1.msra.mxu0 0.0
    %5061 = vmatprep.subr.mxu0 0.0
    %5062 = vmatpush1.msra.mxu0 0.0
    %5063 = vmatprep.subr.mxu0 0.0
    %5064 = vmatpush1.msra.mxu0 0.0
    %5065 = vmatprep.subr.mxu0 0.0
    %5066 = vmatpush1.msra.mxu0 0.0
    %5067 = vmatprep.subr.mxu0 0.0
    %5068 = vmatpush1.msra.mxu0 0.0
    %5069 = vmatprep.subr.mxu0 0.0
    %5070 = vmatpush1.msra.mxu0 0.0
    %5071 = vmatprep.subr.mxu0 0.0
    %5072 = vmatpush1.msra.mxu0 0.0
    %5073 = vmatprep.subr.mxu0 0.0
    %5074 = vmatpush1.msra.mxu0 0.0
    %5075 = vmatprep.subr.mxu0 0.0
    %5076 = vmatpush1.msra.mxu0 0.0
    %5077 = vmatprep.subr.mxu0 0.0
    %5078 = vmatpush1.msra.mxu0 0.0
    %5079 = vmatprep.mubr.f32.mxu0 0.0
    %v5080 = vand.u32 %v4552, 4294901760
    %v5081 = vsub.f32 %v4552, %v5080
    %v5082 = vand.u32 %v5081, 4294901760
    %v5083 = vsub.f32 %v5081, %v5082
    %v5084 = vand.u32 %v5083, 4294901760
    %5085 = vmatmul.mubr.f32.gmra.mrb[0].mxu0 %v5084
    %v5086 = vpop.f32.mrb[0].mxu0
    %v5087 = vadd.f32 0.0, %v5086
    %v5088 = vpop.f32.mrb[0].mxu0
    %5089 = vdwg.mxu0
    %5090 = vmatprep.subr.mxu0 0.0
    %v5091 = vand.u32 %v5012, 4294901760
    %v5092 = vsub.f32 %v5012, %v5091
    %v5093 = vand.u32 %v5092, 4294901760
    %v5094 = vsub.f32 %v5092, %v5093
    %v5095 = vand.u32 %v5094, 4294901760
    %5096 = vmatpush1.msra.mxu0 %v5095
    %5097 = vmatprep.subr.mxu0 0.0
    %5098 = vmatpush1.msra.mxu0 0.0
    %5099 = vmatprep.subr.mxu0 0.0
    %5100 = vmatpush1.msra.mxu0 0.0
    %5101 = vmatprep.subr.mxu0 0.0
    %5102 = vmatpush1.msra.mxu0 0.0
    %5103 = vmatprep.subr.mxu0 0.0
    %5104 = vmatpush1.msra.mxu0 0.0
    %5105 = vmatprep.subr.mxu0 0.0
    %5106 = vmatpush1.msra.mxu0 0.0
    %5107 = vmatprep.subr.mxu0 0.0
    %5108 = vmatpush1.msra.mxu0 0.0
    %5109 = vmatprep.subr.mxu0 0.0
    %5110 = vmatpush1.msra.mxu0 0.0
    %5111 = vmatprep.subr.mxu0 0.0
    %5112 = vmatpush1.msra.mxu0 0.0
    %5113 = vmatprep.subr.mxu0 0.0
    %5114 = vmatpush1.msra.mxu0 0.0
    %5115 = vmatprep.subr.mxu0 0.0
    %5116 = vmatpush1.msra.mxu0 0.0
    %5117 = vmatprep.subr.mxu0 0.0
    %5118 = vmatpush1.msra.mxu0 0.0
    %5119 = vmatprep.subr.mxu0 0.0
    %5120 = vmatpush1.msra.mxu0 0.0
    %5121 = vmatprep.subr.mxu0 0.0
    %5122 = vmatpush1.msra.mxu0 0.0
    %5123 = vmatprep.subr.mxu0 0.0
    %5124 = vmatpush1.msra.mxu0 0.0
    %5125 = vmatprep.subr.mxu0 0.0
    %5126 = vmatpush1.msra.mxu0 0.0
    %5127 = vmatprep.subr.mxu0 0.0
    %5128 = vmatpush1.msra.mxu0 0.0
    %5129 = vmatprep.subr.mxu0 0.0
    %5130 = vmatpush1.msra.mxu0 0.0
    %5131 = vmatprep.subr.mxu0 0.0
    %5132 = vmatpush1.msra.mxu0 0.0
    %5133 = vmatprep.subr.mxu0 0.0
    %5134 = vmatpush1.msra.mxu0 0.0
    %5135 = vmatprep.subr.mxu0 0.0
    %5136 = vmatpush1.msra.mxu0 0.0
    %5137 = vmatprep.subr.mxu0 0.0
    %5138 = vmatpush1.msra.mxu0 0.0
    %5139 = vmatprep.subr.mxu0 0.0
    %5140 = vmatpush1.msra.mxu0 0.0
    %5141 = vmatprep.subr.mxu0 0.0
    %5142 = vmatpush1.msra.mxu0 0.0
    %5143 = vmatprep.subr.mxu0 0.0
    %5144 = vmatpush1.msra.mxu0 0.0
    %5145 = vmatprep.subr.mxu0 0.0
    %5146 = vmatpush1.msra.mxu0 0.0
    %5147 = vmatprep.subr.mxu0 0.0
    %5148 = vmatpush1.msra.mxu0 0.0
    %5149 = vmatprep.subr.mxu0 0.0
    %5150 = vmatpush1.msra.mxu0 0.0
    %5151 = vmatprep.subr.mxu0 0.0
    %5152 = vmatpush1.msra.mxu0 0.0
    %5153 = vmatprep.subr.mxu0 0.0
    %5154 = vmatpush1.msra.mxu0 0.0
    %5155 = vmatprep.subr.mxu0 0.0
    %5156 = vmatpush1.msra.mxu0 0.0
    %5157 = vmatprep.subr.mxu0 0.0
    %5158 = vmatpush1.msra.mxu0 0.0
    %5159 = vmatprep.mubr.f32.mxu0 0.0
    %v5160 = vand.u32 %v4552, 4294901760
    %5161 = vmatmul.mubr.f32.gmra.mrb[0].mxu0 %v5160
    %v5162 = vpop.f32.mrb[0].mxu0
    %v5163 = vadd.f32 %v5087, %v5162
    %v5164 = vpop.f32.mrb[0].mxu0
    %5165 = vdwg.mxu0
    %5166 = vmatprep.subr.mxu0 0.0
    %v5167 = vand.u32 %v5012, 4294901760
    %v5168 = vsub.f32 %v5012, %v5167
    %5169 = vmatpush1.msra.mxu0 %v5168
    %5170 = vmatprep.subr.mxu0 0.0
    %5171 = vmatpush1.msra.mxu0 0.0
    %5172 = vmatprep.subr.mxu0 0.0
    %5173 = vmatpush1.msra.mxu0 0.0
    %5174 = vmatprep.subr.mxu0 0.0
    %5175 = vmatpush1.msra.mxu0 0.0
    %5176 = vmatprep.subr.mxu0 0.0
    %5177 = vmatpush1.msra.mxu0 0.0
    %5178 = vmatprep.subr.mxu0 0.0
    %5179 = vmatpush1.msra.mxu0 0.0
    %5180 = vmatprep.subr.mxu0 0.0
    %5181 = vmatpush1.msra.mxu0 0.0
    %5182 = vmatprep.subr.mxu0 0.0
    %5183 = vmatpush1.msra.mxu0 0.0
    %5184 = vmatprep.subr.mxu0 0.0
    %5185 = vmatpush1.msra.mxu0 0.0
    %5186 = vmatprep.subr.mxu0 0.0
    %5187 = vmatpush1.msra.mxu0 0.0
    %5188 = vmatprep.subr.mxu0 0.0
    %5189 = vmatpush1.msra.mxu0 0.0
    %5190 = vmatprep.subr.mxu0 0.0
    %5191 = vmatpush1.msra.mxu0 0.0
    %5192 = vmatprep.subr.mxu0 0.0
    %5193 = vmatpush1.msra.mxu0 0.0
    %5194 = vmatprep.subr.mxu0 0.0
    %5195 = vmatpush1.msra.mxu0 0.0
    %5196 = vmatprep.subr.mxu0 0.0
    %5197 = vmatpush1.msra.mxu0 0.0
    %5198 = vmatprep.subr.mxu0 0.0
    %5199 = vmatpush1.msra.mxu0 0.0
    %5200 = vmatprep.subr.mxu0 0.0
    %5201 = vmatpush1.msra.mxu0 0.0
    %5202 = vmatprep.subr.mxu0 0.0
    %5203 = vmatpush1.msra.mxu0 0.0
    %5204 = vmatprep.subr.mxu0 0.0
    %5205 = vmatpush1.msra.mxu0 0.0
    %5206 = vmatprep.subr.mxu0 0.0
    %5207 = vmatpush1.msra.mxu0 0.0
    %5208 = vmatprep.subr.mxu0 0.0
    %5209 = vmatpush1.msra.mxu0 0.0
    %5210 = vmatprep.subr.mxu0 0.0
    %5211 = vmatpush1.msra.mxu0 0.0
    %5212 = vmatprep.subr.mxu0 0.0
    %5213 = vmatpush1.msra.mxu0 0.0
    %5214 = vmatprep.subr.mxu0 0.0
    %5215 = vmatpush1.msra.mxu0 0.0
    %5216 = vmatprep.subr.mxu0 0.0
    %5217 = vmatpush1.msra.mxu0 0.0
    %5218 = vmatprep.subr.mxu0 0.0
    %5219 = vmatpush1.msra.mxu0 0.0
    %5220 = vmatprep.subr.mxu0 0.0
    %5221 = vmatpush1.msra.mxu0 0.0
    %5222 = vmatprep.subr.mxu0 0.0
    %5223 = vmatpush1.msra.mxu0 0.0
    %5224 = vmatprep.subr.mxu0 0.0
    %5225 = vmatpush1.msra.mxu0 0.0
    %5226 = vmatprep.subr.mxu0 0.0
    %5227 = vmatpush1.msra.mxu0 0.0
    %5228 = vmatprep.subr.mxu0 0.0
    %5229 = vmatpush1.msra.mxu0 0.0
    %5230 = vmatprep.subr.mxu0 0.0
    %5231 = vmatpush1.msra.mxu0 0.0
    %5232 = vmatprep.mubr.f32.mxu0 0.0
    %v5233 = vand.u32 %v4552, 4294901760
    %v5234 = vsub.f32 %v4552, %v5233
    %5235 = vmatmul.mubr.f32.gmra.mrb[0].mxu0 %v5234
    %v5236 = vpop.f32.mrb[0].mxu0
    %v5237 = vadd.f32 %v5163, %v5236
    %v5238 = vpop.f32.mrb[0].mxu0
    %5239 = vdwg.mxu0
    %5240 = vmatprep.subr.mxu0 0.0
    %v5241 = vand.u32 %v5012, 4294901760
    %5242 = vmatpush1.msra.mxu0 %v5241
    %5243 = vmatprep.subr.mxu0 0.0
    %5244 = vmatpush1.msra.mxu0 0.0
    %5245 = vmatprep.subr.mxu0 0.0
    %5246 = vmatpush1.msra.mxu0 0.0
    %5247 = vmatprep.subr.mxu0 0.0
    %5248 = vmatpush1.msra.mxu0 0.0
    %5249 = vmatprep.subr.mxu0 0.0
    %5250 = vmatpush1.msra.mxu0 0.0
    %5251 = vmatprep.subr.mxu0 0.0
    %5252 = vmatpush1.msra.mxu0 0.0
    %5253 = vmatprep.subr.mxu0 0.0
    %5254 = vmatpush1.msra.mxu0 0.0
    %5255 = vmatprep.subr.mxu0 0.0
    %5256 = vmatpush1.msra.mxu0 0.0
    %5257 = vmatprep.subr.mxu0 0.0
    %5258 = vmatpush1.msra.mxu0 0.0
    %5259 = vmatprep.subr.mxu0 0.0
    %5260 = vmatpush1.msra.mxu0 0.0
    %5261 = vmatprep.subr.mxu0 0.0
    %5262 = vmatpush1.msra.mxu0 0.0
    %5263 = vmatprep.subr.mxu0 0.0
    %5264 = vmatpush1.msra.mxu0 0.0
    %5265 = vmatprep.subr.mxu0 0.0
    %5266 = vmatpush1.msra.mxu0 0.0
    %5267 = vmatprep.subr.mxu0 0.0
    %5268 = vmatpush1.msra.mxu0 0.0
    %5269 = vmatprep.subr.mxu0 0.0
    %5270 = vmatpush1.msra.mxu0 0.0
    %5271 = vmatprep.subr.mxu0 0.0
    %5272 = vmatpush1.msra.mxu0 0.0
    %5273 = vmatprep.subr.mxu0 0.0
    %5274 = vmatpush1.msra.mxu0 0.0
    %5275 = vmatprep.subr.mxu0 0.0
    %5276 = vmatpush1.msra.mxu0 0.0
    %5277 = vmatprep.subr.mxu0 0.0
    %5278 = vmatpush1.msra.mxu0 0.0
    %5279 = vmatprep.subr.mxu0 0.0
    %5280 = vmatpush1.msra.mxu0 0.0
    %5281 = vmatprep.subr.mxu0 0.0
    %5282 = vmatpush1.msra.mxu0 0.0
    %5283 = vmatprep.subr.mxu0 0.0
    %5284 = vmatpush1.msra.mxu0 0.0
    %5285 = vmatprep.subr.mxu0 0.0
    %5286 = vmatpush1.msra.mxu0 0.0
    %5287 = vmatprep.subr.mxu0 0.0
    %5288 = vmatpush1.msra.mxu0 0.0
    %5289 = vmatprep.subr.mxu0 0.0
    %5290 = vmatpush1.msra.mxu0 0.0
    %5291 = vmatprep.subr.mxu0 0.0
    %5292 = vmatpush1.msra.mxu0 0.0
    %5293 = vmatprep.subr.mxu0 0.0
    %5294 = vmatpush1.msra.mxu0 0.0
    %5295 = vmatprep.subr.mxu0 0.0
    %5296 = vmatpush1.msra.mxu0 0.0
    %5297 = vmatprep.subr.mxu0 0.0
    %5298 = vmatpush1.msra.mxu0 0.0
    %5299 = vmatprep.subr.mxu0 0.0
    %5300 = vmatpush1.msra.mxu0 0.0
    %5301 = vmatprep.subr.mxu0 0.0
    %5302 = vmatpush1.msra.mxu0 0.0
    %5303 = vmatprep.subr.mxu0 0.0
    %5304 = vmatpush1.msra.mxu0 0.0
    %5305 = vmatprep.mubr.f32.mxu0 0.0
    %v5306 = vand.u32 %v4552, 4294901760
    %v5307 = vsub.f32 %v4552, %v5306
    %v5308 = vand.u32 %v5307, 4294901760
    %5309 = vmatmul.mubr.f32.gmra.mrb[0].mxu0 %v5308
    %v5310 = vpop.f32.mrb[0].mxu0
    %v5311 = vadd.f32 %v5237, %v5310
    %v5312 = vpop.f32.mrb[0].mxu0
    %5313 = vdwg.mxu0
    %5314 = vmatprep.subr.mxu0 0.0
    %v5315 = vand.u32 %v5012, 4294901760
    %v5316 = vsub.f32 %v5012, %v5315
    %v5317 = vand.u32 %v5316, 4294901760
    %5318 = vmatpush1.msra.mxu0 %v5317
    %5319 = vmatprep.subr.mxu0 0.0
    %5320 = vmatpush1.msra.mxu0 0.0
    %5321 = vmatprep.subr.mxu0 0.0
    %5322 = vmatpush1.msra.mxu0 0.0
    %5323 = vmatprep.subr.mxu0 0.0
    %5324 = vmatpush1.msra.mxu0 0.0
    %5325 = vmatprep.subr.mxu0 0.0
    %5326 = vmatpush1.msra.mxu0 0.0
    %5327 = vmatprep.subr.mxu0 0.0
    %5328 = vmatpush1.msra.mxu0 0.0
    %5329 = vmatprep.subr.mxu0 0.0
    %5330 = vmatpush1.msra.mxu0 0.0
    %5331 = vmatprep.subr.mxu0 0.0
    %5332 = vmatpush1.msra.mxu0 0.0
    %5333 = vmatprep.subr.mxu0 0.0
    %5334 = vmatpush1.msra.mxu0 0.0
    %5335 = vmatprep.subr.mxu0 0.0
    %5336 = vmatpush1.msra.mxu0 0.0
    %5337 = vmatprep.subr.mxu0 0.0
    %5338 = vmatpush1.msra.mxu0 0.0
    %5339 = vmatprep.subr.mxu0 0.0
    %5340 = vmatpush1.msra.mxu0 0.0
    %5341 = vmatprep.subr.mxu0 0.0
    %5342 = vmatpush1.msra.mxu0 0.0
    %5343 = vmatprep.subr.mxu0 0.0
    %5344 = vmatpush1.msra.mxu0 0.0
    %5345 = vmatprep.subr.mxu0 0.0
    %5346 = vmatpush1.msra.mxu0 0.0
    %5347 = vmatprep.subr.mxu0 0.0
    %5348 = vmatpush1.msra.mxu0 0.0
    %5349 = vmatprep.subr.mxu0 0.0
    %5350 = vmatpush1.msra.mxu0 0.0
    %5351 = vmatprep.subr.mxu0 0.0
    %5352 = vmatpush1.msra.mxu0 0.0
    %5353 = vmatprep.subr.mxu0 0.0
    %5354 = vmatpush1.msra.mxu0 0.0
    %5355 = vmatprep.subr.mxu0 0.0
    %5356 = vmatpush1.msra.mxu0 0.0
    %5357 = vmatprep.subr.mxu0 0.0
    %5358 = vmatpush1.msra.mxu0 0.0
    %5359 = vmatprep.subr.mxu0 0.0
    %5360 = vmatpush1.msra.mxu0 0.0
    %5361 = vmatprep.subr.mxu0 0.0
    %5362 = vmatpush1.msra.mxu0 0.0
    %5363 = vmatprep.subr.mxu0 0.0
    %5364 = vmatpush1.msra.mxu0 0.0
    %5365 = vmatprep.subr.mxu0 0.0
    %5366 = vmatpush1.msra.mxu0 0.0
    %5367 = vmatprep.subr.mxu0 0.0
    %5368 = vmatpush1.msra.mxu0 0.0
    %5369 = vmatprep.subr.mxu0 0.0
    %5370 = vmatpush1.msra.mxu0 0.0
    %5371 = vmatprep.subr.mxu0 0.0
    %5372 = vmatpush1.msra.mxu0 0.0
    %5373 = vmatprep.subr.mxu0 0.0
    %5374 = vmatpush1.msra.mxu0 0.0
    %5375 = vmatprep.subr.mxu0 0.0
    %5376 = vmatpush1.msra.mxu0 0.0
    %5377 = vmatprep.subr.mxu0 0.0
    %5378 = vmatpush1.msra.mxu0 0.0
    %5379 = vmatprep.subr.mxu0 0.0
    %5380 = vmatpush1.msra.mxu0 0.0
    %5381 = vmatprep.mubr.f32.mxu0 0.0
    %v5382 = vand.u32 %v4552, 4294901760
    %5383 = vmatmul.mubr.f32.gmra.mrb[0].mxu0 %v5382
    %v5384 = vpop.f32.mrb[0].mxu0
    %v5385 = vadd.f32 %v5311, %v5384
    %v5386 = vpop.f32.mrb[0].mxu0
    %5387 = vdwg.mxu0
    %5388 = vmatprep.subr.mxu0 0.0
    %v5389 = vand.u32 %v5012, 4294901760
    %5390 = vmatpush1.msra.mxu0 %v5389
    %5391 = vmatprep.subr.mxu0 0.0
    %5392 = vmatpush1.msra.mxu0 0.0
    %5393 = vmatprep.subr.mxu0 0.0
    %5394 = vmatpush1.msra.mxu0 0.0
    %5395 = vmatprep.subr.mxu0 0.0
    %5396 = vmatpush1.msra.mxu0 0.0
    %5397 = vmatprep.subr.mxu0 0.0
    %5398 = vmatpush1.msra.mxu0 0.0
    %5399 = vmatprep.subr.mxu0 0.0
    %5400 = vmatpush1.msra.mxu0 0.0
    %5401 = vmatprep.subr.mxu0 0.0
    %5402 = vmatpush1.msra.mxu0 0.0
    %5403 = vmatprep.subr.mxu0 0.0
    %5404 = vmatpush1.msra.mxu0 0.0
    %5405 = vmatprep.subr.mxu0 0.0
    %5406 = vmatpush1.msra.mxu0 0.0
    %5407 = vmatprep.subr.mxu0 0.0
    %5408 = vmatpush1.msra.mxu0 0.0
    %5409 = vmatprep.subr.mxu0 0.0
    %5410 = vmatpush1.msra.mxu0 0.0
    %5411 = vmatprep.subr.mxu0 0.0
    %5412 = vmatpush1.msra.mxu0 0.0
    %5413 = vmatprep.subr.mxu0 0.0
    %5414 = vmatpush1.msra.mxu0 0.0
    %5415 = vmatprep.subr.mxu0 0.0
    %5416 = vmatpush1.msra.mxu0 0.0
    %5417 = vmatprep.subr.mxu0 0.0
    %5418 = vmatpush1.msra.mxu0 0.0
    %5419 = vmatprep.subr.mxu0 0.0
    %5420 = vmatpush1.msra.mxu0 0.0
    %5421 = vmatprep.subr.mxu0 0.0
    %5422 = vmatpush1.msra.mxu0 0.0
    %5423 = vmatprep.subr.mxu0 0.0
    %5424 = vmatpush1.msra.mxu0 0.0
    %5425 = vmatprep.subr.mxu0 0.0
    %5426 = vmatpush1.msra.mxu0 0.0
    %5427 = vmatprep.subr.mxu0 0.0
    %5428 = vmatpush1.msra.mxu0 0.0
    %5429 = vmatprep.subr.mxu0 0.0
    %5430 = vmatpush1.msra.mxu0 0.0
    %5431 = vmatprep.subr.mxu0 0.0
    %5432 = vmatpush1.msra.mxu0 0.0
    %5433 = vmatprep.subr.mxu0 0.0
    %5434 = vmatpush1.msra.mxu0 0.0
    %5435 = vmatprep.subr.mxu0 0.0
    %5436 = vmatpush1.msra.mxu0 0.0
    %5437 = vmatprep.subr.mxu0 0.0
    %5438 = vmatpush1.msra.mxu0 0.0
    %5439 = vmatprep.subr.mxu0 0.0
    %5440 = vmatpush1.msra.mxu0 0.0
    %5441 = vmatprep.subr.mxu0 0.0
    %5442 = vmatpush1.msra.mxu0 0.0
    %5443 = vmatprep.subr.mxu0 0.0
    %5444 = vmatpush1.msra.mxu0 0.0
    %5445 = vmatprep.subr.mxu0 0.0
    %5446 = vmatpush1.msra.mxu0 0.0
    %5447 = vmatprep.subr.mxu0 0.0
    %5448 = vmatpush1.msra.mxu0 0.0
    %5449 = vmatprep.subr.mxu0 0.0
    %5450 = vmatpush1.msra.mxu0 0.0
    %5451 = vmatprep.subr.mxu0 0.0
    %5452 = vmatpush1.msra.mxu0 0.0
    %5453 = vmatprep.mubr.f32.mxu0 0.0
    %v5454 = vand.u32 %v4552, 4294901760
    %5455 = vmatmul.mubr.f32.gmra.mrb[0].mxu0 %v5454
    %v5456 = vpop.f32.mrb[0].mxu0
    %v5457 = vadd.f32 %v5385, %v5456
    %v5458 = vpop.f32.mrb[0].mxu0
    %5459 = vdwg.mxu0
    %v5460 = vmul.f32 %v5457, 0.25
    %v5461 = vadd.f32 %v5460, 1e-05
    %v5462 = vrsqrt.pop %v5461
    %v5463 = vmul.f32 %v16, %v5462
    %v5464 = vlaneseq
    %v5465 = vshrl.u32 %v5464, 7
    %v5466 = vsub.s32 0, %v5465
    %v5467 = vrot.slane %v5463, %v5466
    %v5468 = vmul.f32 %v5009, %v5467
    %v5469 = vlaneseq
    %v5470 = vshrl.u32 %v5469, 7
    %v5471 = vsub.s32 0, %v5470
    %v5472 = vrot.slane %v17, %v5471
    %v5473 = vadd.f32 %v5468, %v5472
    %v5474 = vmul.f32 %v5473, 0.01
    %v5475 = vmax.f32 %v5473, %v5474
    %5476 = vst [vmem:[#allocation4] sm:$0xf] %v5475
    // Predicated region
    $region10: #{adverserail_cnn_forward.1} parent=1 // pred_check
      _
    $region11: #{adverserail_cnn_forward.1} parent=1 // pred_check_branch
      %5478 = sbr.rel (0) target = $region13
    $region12: #{adverserail_cnn_forward.1} parent=1 // pred_region
      %s5480 = ssub.s32 64, 64
      %5481 = vsyncadd [#allocation5], %s5480
      %s5483 = sshll.u32 [#allocation4], 4
      %s5484 = int_to_ptr.vmem [resolvable:$true] %s5483
      %5486 = dma.vmem_to_hbm [thread:$0]  %s5484, 64, %s2, [#allocation5]
    $region13: #{adverserail_cnn_forward.1} parent=1 // pred_fallthru
      _
    // Predicated region
    $region14: #{adverserail_cnn_forward.1} parent=1 // pred_check
      _
    $region15: #{adverserail_cnn_forward.1} parent=1 // pred_check_branch
      %5488 = sbr.rel (0) target = $region17
    $region16: #{adverserail_cnn_forward.1} parent=1 // pred_region
      %5489 = dma.done [#allocation5], 64
    $region17: #{adverserail_cnn_forward.1} parent=1 // pred_fallthru
      _
    %5490 = vsyncpa [#allocation5], 1

</llo_original>
